<compile_context>
chip_gen: v6e
topology: v6e:2x2x1
jax: 0.10.0
libtpu: 0.0.40
codegen_flags: <defaults>
</compile_context>

<pallas_src>
import functools

import jax
import jax.numpy as jnp
from jax.experimental import pallas as pl
from jax.experimental.pallas import tpu as pltpu

IN_FEATURES = 28 * 28      # 784
K_PAD = 896                # 7 * 128  (padded K for the first matmul)
HIDDEN = 512
OUT_FEATURES = 10
OUT_PAD = 128              # lane-dense padded output width


def mlp_kernel(x_ref, w1_ref, b1_ref, w2_ref, b2_ref, w3_ref, b3_ref, o_ref):
    # 3 MXU matmuls (bf16 inputs, f32 accumulation) + f32 bias/ReLU, fused in VMEM.
    x = x_ref[...]                                                  # (bb, 896) bf16
    h1 = jnp.dot(x, w1_ref[...], preferred_element_type=jnp.float32) + b1_ref[...]
    h1 = jnp.maximum(h1, 0.0).astype(jnp.bfloat16)
    h2 = jnp.dot(h1, w2_ref[...], preferred_element_type=jnp.float32) + b2_ref[...]
    h2 = jnp.maximum(h2, 0.0).astype(jnp.bfloat16)
    h3 = jnp.dot(h2, w3_ref[...], preferred_element_type=jnp.float32) + b3_ref[...]
    o_ref[...] = jnp.maximum(h3, 0.0)                               # (bb, 128) f32


@functools.partial(jax.jit, static_argnames=("block_b",))
def neural_network_forward(x, params, *, block_b=128):
    """x: (B, 1, 28, 28) or (B, 28, 28) float32 -> logits (B, 10) float32."""
    w1, b1, w2, b2, w3, b3 = params
    B = x.shape[0]
    x_flat = x.reshape(B, -1)                                       # nn.Flatten()
    assert x_flat.shape[1] == IN_FEATURES

    # Pad batch up to a multiple of block_b and features 784 -> 896 (zeros are exact).
    B_pad = block_b * pl.cdiv(B, block_b)
    x_p = jnp.pad(
        x_flat, ((0, B_pad - B), (0, K_PAD - IN_FEATURES))
    ).astype(jnp.bfloat16)

    # bf16 weights (halves HBM traffic, 2x MXU throughput); biases stay f32.
    w1_p = jnp.pad(w1, ((0, K_PAD - IN_FEATURES), (0, 0))).astype(jnp.bfloat16)
    w2_p = w2.astype(jnp.bfloat16)
    w3_p = jnp.pad(w3, ((0, 0), (0, OUT_PAD - OUT_FEATURES))).astype(jnp.bfloat16)
    b3_p = jnp.pad(b3, ((0, 0), (0, OUT_PAD - OUT_FEATURES)))

    grid = (B_pad // block_b,)
    in_specs = [
        pl.BlockSpec((block_b, K_PAD), lambda i: (i, 0)),
        # Weights/biases: constant block index -> resident across the grid.
        pl.BlockSpec((K_PAD, HIDDEN), lambda i: (0, 0)),
        pl.BlockSpec((1, HIDDEN), lambda i: (0, 0)),
        pl.BlockSpec((HIDDEN, HIDDEN), lambda i: (0, 0)),
        pl.BlockSpec((1, HIDDEN), lambda i: (0, 0)),
        pl.BlockSpec((HIDDEN, OUT_PAD), lambda i: (0, 0)),
        pl.BlockSpec((1, OUT_PAD), lambda i: (0, 0)),
    ]
    out_spec = pl.BlockSpec((block_b, OUT_PAD), lambda i: (i, 0))

    out_padded = pl.pallas_call(
        mlp_kernel,
        out_shape=jax.ShapeDtypeStruct((B_pad, OUT_PAD), jnp.float32),
        grid_spec=pltpu.PrefetchScalarGridSpec(
            num_scalar_prefetch=0,
            grid=grid,
            in_specs=in_specs,
            out_specs=out_spec,
        ),
        compiler_params=pltpu.CompilerParams(
            dimension_semantics=("parallel",),   # batch axis shards across TCs (v7x)
        ),
    )(x_p, w1_p, b1, w2_p, b2, w3_p, b3_p)

    return out_padded[:B, :OUT_FEATURES]


def init_params(key):
    """Deterministic init matching PyTorch nn.Linear default (U[-1/sqrt(fan_in), +])."""
    def linear(key, fan_in, fan_out):
        kw, kb = jax.random.split(key)
        bound = 1.0 / jnp.sqrt(fan_in)
        w = jax.random.uniform(kw, (fan_in, fan_out), jnp.float32, -bound, bound)
        b = jax.random.uniform(kb, (1, fan_out), jnp.float32, -bound, bound)
        return w, b

    k1, k2, k3 = jax.random.split(key, 3)
    w1, b1 = linear(k1, IN_FEATURES, HIDDEN)
    w2, b2 = linear(k2, HIDDEN, HIDDEN)
    w3, b3 = linear(k3, HIDDEN, OUT_FEATURES)
    return (w1, b1, w2, b2, w3, b3)


def reference_forward(x, params):
    """Pure-JAX reference using the same bf16-weight / f32-accumulate recipe."""
    w1, b1, w2, b2, w3, b3 = params
    h = x.reshape(x.shape[0], -1).astype(jnp.bfloat16)
    h = jnp.maximum(
        jnp.dot(h, w1.astype(jnp.bfloat16), preferred_element_type=jnp.float32) + b1, 0.0
    ).astype(jnp.bfloat16)
    h = jnp.maximum(
        jnp.dot(h, w2.astype(jnp.bfloat16), preferred_element_type=jnp.float32) + b2, 0.0
    ).astype(jnp.bfloat16)
    return jnp.maximum(
        jnp.dot(h, w3.astype(jnp.bfloat16), preferred_element_type=jnp.float32) + b3, 0.0
    )


if __name__ == "__main__":
    key = jax.random.PRNGKey(0)
    kx, kp = jax.random.split(key)

    B = 8                                                     # not a multiple of 128 on purpose
    x = jax.random.normal(kx, (B, 1, 28, 28), jnp.float32)    # NCHW, MNIST-like
    params = init_params(kp)

    out = neural_network_forward(x, params)
    out = jax.block_until_ready(out)

    ref = reference_forward(x, params)
    assert out.shape == (B, OUT_FEATURES)
    assert jnp.allclose(out, ref, atol=1e-2, rtol=1e-2), float(jnp.max(jnp.abs(out - ref)))

    print("KERNEL_OK")
</pallas_src>

<mosaic_0001>
module attributes {stable_mosaic.version = 11 : i64} {
  func.func @mlp_kernel(%arg0: i32, %arg1: memref<128x896xbf16, #tpu.memory_space<vmem>>, %arg2: memref<896x512xbf16, #tpu.memory_space<vmem>>, %arg3: memref<1x512xf32, #tpu.memory_space<vmem>>, %arg4: memref<512x512xbf16, #tpu.memory_space<vmem>>, %arg5: memref<1x512xf32, #tpu.memory_space<vmem>>, %arg6: memref<512x128xbf16, #tpu.memory_space<vmem>>, %arg7: memref<1x128xf32, #tpu.memory_space<vmem>>, %arg8: memref<128x128xf32, #tpu.memory_space<vmem>>) attributes {dimension_semantics = [#tpu.dimension_semantics<parallel>], iteration_bounds = array<i64: 1>, scalar_prefetch = 0 : i64, scratch_operands = 0 : i64, tpu.core_type = #tpu.core_type<tc>, window_params = [{transform_indices = @transform_0, window_bounds = array<i64: 128, 896>}, {pipeline_mode = #tpu.pipeline_mode<synchronous>, transform_indices = @transform_1, window_bounds = array<i64: 896, 512>}, {pipeline_mode = #tpu.pipeline_mode<synchronous>, transform_indices = @transform_2, window_bounds = array<i64: 1, 512>}, {pipeline_mode = #tpu.pipeline_mode<synchronous>, transform_indices = @transform_3, window_bounds = array<i64: 512, 512>}, {pipeline_mode = #tpu.pipeline_mode<synchronous>, transform_indices = @transform_4, window_bounds = array<i64: 1, 512>}, {pipeline_mode = #tpu.pipeline_mode<synchronous>, transform_indices = @transform_5, window_bounds = array<i64: 512, 128>}, {pipeline_mode = #tpu.pipeline_mode<synchronous>, transform_indices = @transform_6, window_bounds = array<i64: 1, 128>}, {transform_indices = @transform_7, window_bounds = array<i64: 128, 128>}]} {
    %c0 = arith.constant 0 : index
    %c0_0 = arith.constant 0 : index
    %0 = vector.load %arg1[%c0, %c0_0] : memref<128x896xbf16, #tpu.memory_space<vmem>>, vector<128x896xbf16>
    %c0_1 = arith.constant 0 : index
    %c0_2 = arith.constant 0 : index
    %1 = vector.load %arg2[%c0_1, %c0_2] : memref<896x512xbf16, #tpu.memory_space<vmem>>, vector<896x512xbf16>
    %cst = arith.constant dense<0.000000e+00> : vector<128x512xf32>
    %2 = tpu.matmul %0, %1, %cst {dimension_numbers = #tpu.dot_dimension_numbers<[1], [0], [0], [1], [0, 0, 1, 1], [], []>} : vector<128x896xbf16>, vector<896x512xbf16>, vector<128x512xf32> -> vector<128x512xf32>
    %c0_3 = arith.constant 0 : index
    %c0_4 = arith.constant 0 : index
    %3 = vector.load %arg3[%c0_3, %c0_4] : memref<1x512xf32, #tpu.memory_space<vmem>>, vector<1x512xf32>
    %4 = vector.broadcast %3 : vector<1x512xf32> to vector<128x512xf32>
    %5 = arith.addf %2, %4 : vector<128x512xf32>
    %cst_5 = arith.constant 0.000000e+00 : f32
    %6 = vector.broadcast %cst_5 : f32 to vector<128x512xf32>
    %7 = arith.maximumf %5, %6 : vector<128x512xf32>
    %8 = arith.truncf %7 : vector<128x512xf32> to vector<128x512xbf16>
    %c0_6 = arith.constant 0 : index
    %c0_7 = arith.constant 0 : index
    %9 = vector.load %arg4[%c0_6, %c0_7] : memref<512x512xbf16, #tpu.memory_space<vmem>>, vector<512x512xbf16>
    %cst_8 = arith.constant dense<0.000000e+00> : vector<128x512xf32>
    %10 = tpu.matmul %8, %9, %cst_8 {dimension_numbers = #tpu.dot_dimension_numbers<[1], [0], [0], [1], [0, 0, 1, 1], [], []>} : vector<128x512xbf16>, vector<512x512xbf16>, vector<128x512xf32> -> vector<128x512xf32>
    %c0_9 = arith.constant 0 : index
    %c0_10 = arith.constant 0 : index
    %11 = vector.load %arg5[%c0_9, %c0_10] : memref<1x512xf32, #tpu.memory_space<vmem>>, vector<1x512xf32>
    %12 = vector.broadcast %11 : vector<1x512xf32> to vector<128x512xf32>
    %13 = arith.addf %10, %12 : vector<128x512xf32>
    %cst_11 = arith.constant 0.000000e+00 : f32
    %14 = vector.broadcast %cst_11 : f32 to vector<128x512xf32>
    %15 = arith.maximumf %13, %14 : vector<128x512xf32>
    %16 = arith.truncf %15 : vector<128x512xf32> to vector<128x512xbf16>
    %c0_12 = arith.constant 0 : index
    %c0_13 = arith.constant 0 : index
    %17 = vector.load %arg6[%c0_12, %c0_13] : memref<512x128xbf16, #tpu.memory_space<vmem>>, vector<512x128xbf16>
    %cst_14 = arith.constant dense<0.000000e+00> : vector<128x128xf32>
    %18 = tpu.matmul %16, %17, %cst_14 {dimension_numbers = #tpu.dot_dimension_numbers<[1], [0], [0], [1], [0, 0, 1, 1], [], []>} : vector<128x512xbf16>, vector<512x128xbf16>, vector<128x128xf32> -> vector<128x128xf32>
    %c0_15 = arith.constant 0 : index
    %c0_16 = arith.constant 0 : index
    %19 = vector.load %arg7[%c0_15, %c0_16] : memref<1x128xf32, #tpu.memory_space<vmem>>, vector<1x128xf32>
    %20 = vector.broadcast %19 : vector<1x128xf32> to vector<128x128xf32>
    %21 = arith.addf %18, %20 : vector<128x128xf32>
    %cst_17 = arith.constant 0.000000e+00 : f32
    %22 = vector.broadcast %cst_17 : f32 to vector<128x128xf32>
    %23 = arith.maximumf %21, %22 : vector<128x128xf32>
    %c0_18 = arith.constant 0 : index
    %c0_19 = arith.constant 0 : index
    %24 = vector.load %arg8[%c0_18, %c0_19] : memref<128x128xf32, #tpu.memory_space<vmem>>, vector<128x128xf32>
    tpu.vector_store %arg8[%c0_18, %c0_19], %23 {strides = array<i32>} : memref<128x128xf32, #tpu.memory_space<vmem>>, vector<128x128xf32>,
    return
  }
  func.func @transform_0(%arg0: i32) -> (i32, i32) {
    %c0_i32 = arith.constant 0 : i32
    %c0_i32_0 = arith.constant 0 : i32
    return %arg0, %c0_i32 : i32, i32
  }
  func.func @transform_1(%arg0: i32) -> (i32, i32) {
    %c0_i32 = arith.constant 0 : i32
    %c0_i32_0 = arith.constant 0 : i32
    %c0_i32_1 = arith.constant 0 : i32
    return %c0_i32, %c0_i32_0 : i32, i32
  }
  func.func @transform_2(%arg0: i32) -> (i32, i32) {
    %c0_i32 = arith.constant 0 : i32
    %c0_i32_0 = arith.constant 0 : i32
    %c0_i32_1 = arith.constant 0 : i32
    return %c0_i32, %c0_i32_0 : i32, i32
  }
  func.func @transform_3(%arg0: i32) -> (i32, i32) {
    %c0_i32 = arith.constant 0 : i32
    %c0_i32_0 = arith.constant 0 : i32
    %c0_i32_1 = arith.constant 0 : i32
    return %c0_i32, %c0_i32_0 : i32, i32
  }
  func.func @transform_4(%arg0: i32) -> (i32, i32) {
    %c0_i32 = arith.constant 0 : i32
    %c0_i32_0 = arith.constant 0 : i32
    %c0_i32_1 = arith.constant 0 : i32
    return %c0_i32, %c0_i32_0 : i32, i32
  }
  func.func @transform_5(%arg0: i32) -> (i32, i32) {
    %c0_i32 = arith.constant 0 : i32
    %c0_i32_0 = arith.constant 0 : i32
    %c0_i32_1 = arith.constant 0 : i32
    return %c0_i32, %c0_i32_0 : i32, i32
  }
  func.func @transform_6(%arg0: i32) -> (i32, i32) {
    %c0_i32 = arith.constant 0 : i32
    %c0_i32_0 = arith.constant 0 : i32
    %c0_i32_1 = arith.constant 0 : i32
    return %c0_i32, %c0_i32_0 : i32, i32
  }
  func.func @transform_7(%arg0: i32) -> (i32, i32) {
    %c0_i32 = arith.constant 0 : i32
    %c0_i32_0 = arith.constant 0 : i32
    return %arg0, %c0_i32 : i32, i32
  }
}

</mosaic_0001>

<llo_original>
// kernel: neural_network_forward.1
$region0: #{neural_network_forward.1}
  #allocation0 [shape = 'u32[]', space=smem, size = 0x4, offset = 0x4, fixed_abs, tag = 'smem constant byte address 0x4 - core index']
  #allocation1 [shape = 'u32[144,128]{1,0:T(1,128)}', space=vmem, size = 0x12000, scoped, tag = 'internal scratch']
  %s0 = inlined_call_operand.vmem [shape: bf16[128,896], index: 0, kind: input, shape index: {}]
  %s1 = inlined_call_operand.vmem [shape: bf16[896,512], index: 1, kind: input, shape index: {}]
  %s2 = inlined_call_operand.vmem [shape: f32[1,512], index: 2, kind: input, shape index: {}]
  %s3 = inlined_call_operand.vmem [shape: bf16[512,512], index: 3, kind: input, shape index: {}]
  %s4 = inlined_call_operand.vmem [shape: f32[1,512], index: 4, kind: input, shape index: {}]
  %s5 = inlined_call_operand.vmem [shape: bf16[512,128], index: 5, kind: input, shape index: {}]
  %s6 = inlined_call_operand.vmem [shape: f32[1,128], index: 6, kind: input, shape index: {}]
  %s7 = inlined_call_operand.vmem [shape: f32[128,128], index: 7, kind: output, shape index: {}]
  %s8 = sld [smem:[#allocation0]]
  $region38: #{neural_network_forward.1} parent=0
    _
  %s10 = ssub.s32 1, %s8
  %s11 = scalar_select 0, %s10, %s8
  // Predicated region
  $region2: #{neural_network_forward.1} parent=0 // pred_check
    _
  $region3: #{neural_network_forward.1} parent=0 // pred_check_branch
    %13 = sbr.rel (0) target = $region5
  $region4: #{neural_network_forward.1} parent=0 // pred_region
    _
  $region5: #{neural_network_forward.1} parent=0 // pred_fallthru
    _
  // Predicated region
  $region6: #{neural_network_forward.1} parent=0 // pred_check
    _
  $region7: #{neural_network_forward.1} parent=0 // pred_check_branch
    %15 = sbr.rel (0) target = $region9
  $region8: #{neural_network_forward.1} parent=0 // pred_region
    _
  $region9: #{neural_network_forward.1} parent=0 // pred_fallthru
    _
  // Predicated region
  $region10: #{neural_network_forward.1} parent=0 // pred_check
    _
  $region11: #{neural_network_forward.1} parent=0 // pred_check_branch
    %17 = sbr.rel (0) target = $region13
  $region12: #{neural_network_forward.1} parent=0 // pred_region
    _
  $region13: #{neural_network_forward.1} parent=0 // pred_fallthru
    _
  // Predicated region
  $region14: #{neural_network_forward.1} parent=0 // pred_check
    _
  $region15: #{neural_network_forward.1} parent=0 // pred_check_branch
    %19 = sbr.rel (0) target = $region17
  $region16: #{neural_network_forward.1} parent=0 // pred_region
    _
  $region17: #{neural_network_forward.1} parent=0 // pred_fallthru
    _
  // Predicated region
  $region18: #{neural_network_forward.1} parent=0 // pred_check
    _
  $region19: #{neural_network_forward.1} parent=0 // pred_check_branch
    %21 = sbr.rel (0) target = $region21
  $region20: #{neural_network_forward.1} parent=0 // pred_region
    _
  $region21: #{neural_network_forward.1} parent=0 // pred_fallthru
    _
  // Predicated region
  $region22: #{neural_network_forward.1} parent=0 // pred_check
    _
  $region23: #{neural_network_forward.1} parent=0 // pred_check_branch
    %23 = sbr.rel (0) target = $region25
  $region24: #{neural_network_forward.1} parent=0 // pred_region
    _
  $region25: #{neural_network_forward.1} parent=0 // pred_fallthru
    _
  // Predicated region
  $region26: #{neural_network_forward.1} parent=0 // pred_check
    _
  $region27: #{neural_network_forward.1} parent=0 // pred_check_branch
    %25 = sbr.rel (0) target = $region29
  $region28: #{neural_network_forward.1} parent=0 // pred_region
    _
  $region29: #{neural_network_forward.1} parent=0 // pred_fallthru
    _
  %v27 = vld [vmem:[%s0] sm:$0xff]
  %v28 = vld [vmem:[%s0 + $0x8] sm:$0xff]
  %v29 = vld [vmem:[%s0 + $0x10] sm:$0xff]
  %v30 = vld [vmem:[%s0 + $0x18] sm:$0xf]
  %v31 = vld [vmem:[%s0 + $0x1c] sm:$0xff]
  %v32 = vld [vmem:[%s0 + $0x24] sm:$0xff]
  %v33 = vld [vmem:[%s0 + $0x2c] sm:$0xff]
  %v34 = vld [vmem:[%s0 + $0x34] sm:$0xf]
  %v35 = vld [vmem:[%s0 + $0x38] sm:$0xff]
  %v36 = vld [vmem:[%s0 + $0x40] sm:$0xff]
  %v37 = vld [vmem:[%s0 + $0x48] sm:$0xff]
  %v38 = vld [vmem:[%s0 + $0x50] sm:$0xf]
  %v39 = vld [vmem:[%s0 + $0x54] sm:$0xff]
  %v40 = vld [vmem:[%s0 + $0x5c] sm:$0xff]
  %v41 = vld [vmem:[%s0 + $0x64] sm:$0xff]
  %v42 = vld [vmem:[%s0 + $0x6c] sm:$0xf]
  %v43 = vld [vmem:[%s0 + $0x70] sm:$0xff]
  %v44 = vld [vmem:[%s0 + $0x78] sm:$0xff]
  %v45 = vld [vmem:[%s0 + $0x80] sm:$0xff]
  %v46 = vld [vmem:[%s0 + $0x88] sm:$0xf]
  %v47 = vld [vmem:[%s0 + $0x8c] sm:$0xff]
  %v48 = vld [vmem:[%s0 + $0x94] sm:$0xff]
  %v49 = vld [vmem:[%s0 + $0x9c] sm:$0xff]
  %v50 = vld [vmem:[%s0 + $0xa4] sm:$0xf]
  %v51 = vld [vmem:[%s0 + $0xa8] sm:$0xff]
  %v52 = vld [vmem:[%s0 + $0xb0] sm:$0xff]
  %v53 = vld [vmem:[%s0 + $0xb8] sm:$0xff]
  %v54 = vld [vmem:[%s0 + $0xc0] sm:$0xf]
  %v55 = vld [vmem:[%s0 + $0xc4] sm:$0xff]
  %v56 = vld [vmem:[%s0 + $0xcc] sm:$0xff]
  %v57 = vld [vmem:[%s0 + $0xd4] sm:$0xff]
  %v58 = vld [vmem:[%s0 + $0xdc] sm:$0xf]
  %v59 = vld [vmem:[%s0 + $0xe0] sm:$0xff]
  %v60 = vld [vmem:[%s0 + $0xe8] sm:$0xff]
  %v61 = vld [vmem:[%s0 + $0xf0] sm:$0xff]
  %v62 = vld [vmem:[%s0 + $0xf8] sm:$0xf]
  %v63 = vld [vmem:[%s0 + $0xfc] sm:$0xff]
  %v64 = vld [vmem:[%s0 + $0x104] sm:$0xff]
  %v65 = vld [vmem:[%s0 + $0x10c] sm:$0xff]
  %v66 = vld [vmem:[%s0 + $0x114] sm:$0xf]
  %v67 = vld [vmem:[%s0 + $0x118] sm:$0xff]
  %v68 = vld [vmem:[%s0 + $0x120] sm:$0xff]
  %v69 = vld [vmem:[%s0 + $0x128] sm:$0xff]
  %v70 = vld [vmem:[%s0 + $0x130] sm:$0xf]
  %v71 = vld [vmem:[%s0 + $0x134] sm:$0xff]
  %v72 = vld [vmem:[%s0 + $0x13c] sm:$0xff]
  %v73 = vld [vmem:[%s0 + $0x144] sm:$0xff]
  %v74 = vld [vmem:[%s0 + $0x14c] sm:$0xf]
  %v75 = vld [vmem:[%s0 + $0x150] sm:$0xff]
  %v76 = vld [vmem:[%s0 + $0x158] sm:$0xff]
  %v77 = vld [vmem:[%s0 + $0x160] sm:$0xff]
  %v78 = vld [vmem:[%s0 + $0x168] sm:$0xf]
  %v79 = vld [vmem:[%s0 + $0x16c] sm:$0xff]
  %v80 = vld [vmem:[%s0 + $0x174] sm:$0xff]
  %v81 = vld [vmem:[%s0 + $0x17c] sm:$0xff]
  %v82 = vld [vmem:[%s0 + $0x184] sm:$0xf]
  %v83 = vld [vmem:[%s0 + $0x188] sm:$0xff]
  %v84 = vld [vmem:[%s0 + $0x190] sm:$0xff]
  %v85 = vld [vmem:[%s0 + $0x198] sm:$0xff]
  %v86 = vld [vmem:[%s0 + $0x1a0] sm:$0xf]
  %v87 = vld [vmem:[%s0 + $0x1a4] sm:$0xff]
  %v88 = vld [vmem:[%s0 + $0x1ac] sm:$0xff]
  %v89 = vld [vmem:[%s0 + $0x1b4] sm:$0xff]
  %v90 = vld [vmem:[%s0 + $0x1bc] sm:$0xf]
  %v91 = vld [vmem:[%s1] sm:$0xff]
  %v92 = vld [vmem:[%s1 + $0x8] sm:$0xff]
  %v93 = vld [vmem:[%s1 + $0x10] sm:$0xff]
  %v94 = vld [vmem:[%s1 + $0x18] sm:$0xff]
  %v95 = vld [vmem:[%s1 + $0x20] sm:$0xff]
  %v96 = vld [vmem:[%s1 + $0x28] sm:$0xff]
  %v97 = vld [vmem:[%s1 + $0x30] sm:$0xff]
  %v98 = vld [vmem:[%s1 + $0x38] sm:$0xff]
  %v99 = vld [vmem:[%s1 + $0x40] sm:$0xff]
  %v100 = vld [vmem:[%s1 + $0x48] sm:$0xff]
  %v101 = vld [vmem:[%s1 + $0x50] sm:$0xff]
  %v102 = vld [vmem:[%s1 + $0x58] sm:$0xff]
  %v103 = vld [vmem:[%s1 + $0x60] sm:$0xff]
  %v104 = vld [vmem:[%s1 + $0x68] sm:$0xff]
  %v105 = vld [vmem:[%s1 + $0x70] sm:$0xff]
  %v106 = vld [vmem:[%s1 + $0x78] sm:$0xff]
  %v107 = vld [vmem:[%s1 + $0x80] sm:$0xff]
  %v108 = vld [vmem:[%s1 + $0x88] sm:$0xff]
  %v109 = vld [vmem:[%s1 + $0x90] sm:$0xff]
  %v110 = vld [vmem:[%s1 + $0x98] sm:$0xff]
  %v111 = vld [vmem:[%s1 + $0xa0] sm:$0xff]
  %v112 = vld [vmem:[%s1 + $0xa8] sm:$0xff]
  %v113 = vld [vmem:[%s1 + $0xb0] sm:$0xff]
  %v114 = vld [vmem:[%s1 + $0xb8] sm:$0xff]
  %v115 = vld [vmem:[%s1 + $0xc0] sm:$0xff]
  %v116 = vld [vmem:[%s1 + $0xc8] sm:$0xff]
  %v117 = vld [vmem:[%s1 + $0xd0] sm:$0xff]
  %v118 = vld [vmem:[%s1 + $0xd8] sm:$0xff]
  %v119 = vld [vmem:[%s1 + $0xe0] sm:$0xff]
  %v120 = vld [vmem:[%s1 + $0xe8] sm:$0xff]
  %v121 = vld [vmem:[%s1 + $0xf0] sm:$0xff]
  %v122 = vld [vmem:[%s1 + $0xf8] sm:$0xff]
  %v123 = vld [vmem:[%s1 + $0x100] sm:$0xff]
  %v124 = vld [vmem:[%s1 + $0x108] sm:$0xff]
  %v125 = vld [vmem:[%s1 + $0x110] sm:$0xff]
  %v126 = vld [vmem:[%s1 + $0x118] sm:$0xff]
  %v127 = vld [vmem:[%s1 + $0x120] sm:$0xff]
  %v128 = vld [vmem:[%s1 + $0x128] sm:$0xff]
  %v129 = vld [vmem:[%s1 + $0x130] sm:$0xff]
  %v130 = vld [vmem:[%s1 + $0x138] sm:$0xff]
  %v131 = vld [vmem:[%s1 + $0x140] sm:$0xff]
  %v132 = vld [vmem:[%s1 + $0x148] sm:$0xff]
  %v133 = vld [vmem:[%s1 + $0x150] sm:$0xff]
  %v134 = vld [vmem:[%s1 + $0x158] sm:$0xff]
  %v135 = vld [vmem:[%s1 + $0x160] sm:$0xff]
  %v136 = vld [vmem:[%s1 + $0x168] sm:$0xff]
  %v137 = vld [vmem:[%s1 + $0x170] sm:$0xff]
  %v138 = vld [vmem:[%s1 + $0x178] sm:$0xff]
  %v139 = vld [vmem:[%s1 + $0x180] sm:$0xff]
  %v140 = vld [vmem:[%s1 + $0x188] sm:$0xff]
  %v141 = vld [vmem:[%s1 + $0x190] sm:$0xff]
  %v142 = vld [vmem:[%s1 + $0x198] sm:$0xff]
  %v143 = vld [vmem:[%s1 + $0x1a0] sm:$0xff]
  %v144 = vld [vmem:[%s1 + $0x1a8] sm:$0xff]
  %v145 = vld [vmem:[%s1 + $0x1b0] sm:$0xff]
  %v146 = vld [vmem:[%s1 + $0x1b8] sm:$0xff]
  %v147 = vld [vmem:[%s1 + $0x1c0] sm:$0xff]
  %v148 = vld [vmem:[%s1 + $0x1c8] sm:$0xff]
  %v149 = vld [vmem:[%s1 + $0x1d0] sm:$0xff]
  %v150 = vld [vmem:[%s1 + $0x1d8] sm:$0xff]
  %v151 = vld [vmem:[%s1 + $0x1e0] sm:$0xff]
  %v152 = vld [vmem:[%s1 + $0x1e8] sm:$0xff]
  %v153 = vld [vmem:[%s1 + $0x1f0] sm:$0xff]
  %v154 = vld [vmem:[%s1 + $0x1f8] sm:$0xff]
  %v155 = vld [vmem:[%s1 + $0x200] sm:$0xff]
  %v156 = vld [vmem:[%s1 + $0x208] sm:$0xff]
  %v157 = vld [vmem:[%s1 + $0x210] sm:$0xff]
  %v158 = vld [vmem:[%s1 + $0x218] sm:$0xff]
  %v159 = vld [vmem:[%s1 + $0x220] sm:$0xff]
  %v160 = vld [vmem:[%s1 + $0x228] sm:$0xff]
  %v161 = vld [vmem:[%s1 + $0x230] sm:$0xff]
  %v162 = vld [vmem:[%s1 + $0x238] sm:$0xff]
  %v163 = vld [vmem:[%s1 + $0x240] sm:$0xff]
  %v164 = vld [vmem:[%s1 + $0x248] sm:$0xff]
  %v165 = vld [vmem:[%s1 + $0x250] sm:$0xff]
  %v166 = vld [vmem:[%s1 + $0x258] sm:$0xff]
  %v167 = vld [vmem:[%s1 + $0x260] sm:$0xff]
  %v168 = vld [vmem:[%s1 + $0x268] sm:$0xff]
  %v169 = vld [vmem:[%s1 + $0x270] sm:$0xff]
  %v170 = vld [vmem:[%s1 + $0x278] sm:$0xff]
  %v171 = vld [vmem:[%s1 + $0x280] sm:$0xff]
  %v172 = vld [vmem:[%s1 + $0x288] sm:$0xff]
  %v173 = vld [vmem:[%s1 + $0x290] sm:$0xff]
  %v174 = vld [vmem:[%s1 + $0x298] sm:$0xff]
  %v175 = vld [vmem:[%s1 + $0x2a0] sm:$0xff]
  %v176 = vld [vmem:[%s1 + $0x2a8] sm:$0xff]
  %v177 = vld [vmem:[%s1 + $0x2b0] sm:$0xff]
  %v178 = vld [vmem:[%s1 + $0x2b8] sm:$0xff]
  %v179 = vld [vmem:[%s1 + $0x2c0] sm:$0xff]
  %v180 = vld [vmem:[%s1 + $0x2c8] sm:$0xff]
  %v181 = vld [vmem:[%s1 + $0x2d0] sm:$0xff]
  %v182 = vld [vmem:[%s1 + $0x2d8] sm:$0xff]
  %v183 = vld [vmem:[%s1 + $0x2e0] sm:$0xff]
  %v184 = vld [vmem:[%s1 + $0x2e8] sm:$0xff]
  %v185 = vld [vmem:[%s1 + $0x2f0] sm:$0xff]
  %v186 = vld [vmem:[%s1 + $0x2f8] sm:$0xff]
  %v187 = vld [vmem:[%s1 + $0x300] sm:$0xff]
  %v188 = vld [vmem:[%s1 + $0x308] sm:$0xff]
  %v189 = vld [vmem:[%s1 + $0x310] sm:$0xff]
  %v190 = vld [vmem:[%s1 + $0x318] sm:$0xff]
  %v191 = vld [vmem:[%s1 + $0x320] sm:$0xff]
  %v192 = vld [vmem:[%s1 + $0x328] sm:$0xff]
  %v193 = vld [vmem:[%s1 + $0x330] sm:$0xff]
  %v194 = vld [vmem:[%s1 + $0x338] sm:$0xff]
  %v195 = vld [vmem:[%s1 + $0x340] sm:$0xff]
  %v196 = vld [vmem:[%s1 + $0x348] sm:$0xff]
  %v197 = vld [vmem:[%s1 + $0x350] sm:$0xff]
  %v198 = vld [vmem:[%s1 + $0x358] sm:$0xff]
  %v199 = vld [vmem:[%s1 + $0x360] sm:$0xff]
  %v200 = vld [vmem:[%s1 + $0x368] sm:$0xff]
  %v201 = vld [vmem:[%s1 + $0x370] sm:$0xff]
  %v202 = vld [vmem:[%s1 + $0x378] sm:$0xff]
  %v203 = vld [vmem:[%s1 + $0x380] sm:$0xff]
  %v204 = vld [vmem:[%s1 + $0x388] sm:$0xff]
  %v205 = vld [vmem:[%s1 + $0x390] sm:$0xff]
  %v206 = vld [vmem:[%s1 + $0x398] sm:$0xff]
  %v207 = vld [vmem:[%s1 + $0x3a0] sm:$0xff]
  %v208 = vld [vmem:[%s1 + $0x3a8] sm:$0xff]
  %v209 = vld [vmem:[%s1 + $0x3b0] sm:$0xff]
  %v210 = vld [vmem:[%s1 + $0x3b8] sm:$0xff]
  %v211 = vld [vmem:[%s1 + $0x3c0] sm:$0xff]
  %v212 = vld [vmem:[%s1 + $0x3c8] sm:$0xff]
  %v213 = vld [vmem:[%s1 + $0x3d0] sm:$0xff]
  %v214 = vld [vmem:[%s1 + $0x3d8] sm:$0xff]
  %v215 = vld [vmem:[%s1 + $0x3e0] sm:$0xff]
  %v216 = vld [vmem:[%s1 + $0x3e8] sm:$0xff]
  %v217 = vld [vmem:[%s1 + $0x3f0] sm:$0xff]
  %v218 = vld [vmem:[%s1 + $0x3f8] sm:$0xff]
  %v219 = vld [vmem:[%s1 + $0x400] sm:$0xff]
  %v220 = vld [vmem:[%s1 + $0x408] sm:$0xff]
  %v221 = vld [vmem:[%s1 + $0x410] sm:$0xff]
  %v222 = vld [vmem:[%s1 + $0x418] sm:$0xff]
  %v223 = vld [vmem:[%s1 + $0x420] sm:$0xff]
  %v224 = vld [vmem:[%s1 + $0x428] sm:$0xff]
  %v225 = vld [vmem:[%s1 + $0x430] sm:$0xff]
  %v226 = vld [vmem:[%s1 + $0x438] sm:$0xff]
  %v227 = vld [vmem:[%s1 + $0x440] sm:$0xff]
  %v228 = vld [vmem:[%s1 + $0x448] sm:$0xff]
  %v229 = vld [vmem:[%s1 + $0x450] sm:$0xff]
  %v230 = vld [vmem:[%s1 + $0x458] sm:$0xff]
  %v231 = vld [vmem:[%s1 + $0x460] sm:$0xff]
  %v232 = vld [vmem:[%s1 + $0x468] sm:$0xff]
  %v233 = vld [vmem:[%s1 + $0x470] sm:$0xff]
  %v234 = vld [vmem:[%s1 + $0x478] sm:$0xff]
  %v235 = vld [vmem:[%s1 + $0x480] sm:$0xff]
  %v236 = vld [vmem:[%s1 + $0x488] sm:$0xff]
  %v237 = vld [vmem:[%s1 + $0x490] sm:$0xff]
  %v238 = vld [vmem:[%s1 + $0x498] sm:$0xff]
  %v239 = vld [vmem:[%s1 + $0x4a0] sm:$0xff]
  %v240 = vld [vmem:[%s1 + $0x4a8] sm:$0xff]
  %v241 = vld [vmem:[%s1 + $0x4b0] sm:$0xff]
  %v242 = vld [vmem:[%s1 + $0x4b8] sm:$0xff]
  %v243 = vld [vmem:[%s1 + $0x4c0] sm:$0xff]
  %v244 = vld [vmem:[%s1 + $0x4c8] sm:$0xff]
  %v245 = vld [vmem:[%s1 + $0x4d0] sm:$0xff]
  %v246 = vld [vmem:[%s1 + $0x4d8] sm:$0xff]
  %v247 = vld [vmem:[%s1 + $0x4e0] sm:$0xff]
  %v248 = vld [vmem:[%s1 + $0x4e8] sm:$0xff]
  %v249 = vld [vmem:[%s1 + $0x4f0] sm:$0xff]
  %v250 = vld [vmem:[%s1 + $0x4f8] sm:$0xff]
  %v251 = vld [vmem:[%s1 + $0x500] sm:$0xff]
  %v252 = vld [vmem:[%s1 + $0x508] sm:$0xff]
  %v253 = vld [vmem:[%s1 + $0x510] sm:$0xff]
  %v254 = vld [vmem:[%s1 + $0x518] sm:$0xff]
  %v255 = vld [vmem:[%s1 + $0x520] sm:$0xff]
  %v256 = vld [vmem:[%s1 + $0x528] sm:$0xff]
  %v257 = vld [vmem:[%s1 + $0x530] sm:$0xff]
  %v258 = vld [vmem:[%s1 + $0x538] sm:$0xff]
  %v259 = vld [vmem:[%s1 + $0x540] sm:$0xff]
  %v260 = vld [vmem:[%s1 + $0x548] sm:$0xff]
  %v261 = vld [vmem:[%s1 + $0x550] sm:$0xff]
  %v262 = vld [vmem:[%s1 + $0x558] sm:$0xff]
  %v263 = vld [vmem:[%s1 + $0x560] sm:$0xff]
  %v264 = vld [vmem:[%s1 + $0x568] sm:$0xff]
  %v265 = vld [vmem:[%s1 + $0x570] sm:$0xff]
  %v266 = vld [vmem:[%s1 + $0x578] sm:$0xff]
  %v267 = vld [vmem:[%s1 + $0x580] sm:$0xff]
  %v268 = vld [vmem:[%s1 + $0x588] sm:$0xff]
  %v269 = vld [vmem:[%s1 + $0x590] sm:$0xff]
  %v270 = vld [vmem:[%s1 + $0x598] sm:$0xff]
  %v271 = vld [vmem:[%s1 + $0x5a0] sm:$0xff]
  %v272 = vld [vmem:[%s1 + $0x5a8] sm:$0xff]
  %v273 = vld [vmem:[%s1 + $0x5b0] sm:$0xff]
  %v274 = vld [vmem:[%s1 + $0x5b8] sm:$0xff]
  %v275 = vld [vmem:[%s1 + $0x5c0] sm:$0xff]
  %v276 = vld [vmem:[%s1 + $0x5c8] sm:$0xff]
  %v277 = vld [vmem:[%s1 + $0x5d0] sm:$0xff]
  %v278 = vld [vmem:[%s1 + $0x5d8] sm:$0xff]
  %v279 = vld [vmem:[%s1 + $0x5e0] sm:$0xff]
  %v280 = vld [vmem:[%s1 + $0x5e8] sm:$0xff]
  %v281 = vld [vmem:[%s1 + $0x5f0] sm:$0xff]
  %v282 = vld [vmem:[%s1 + $0x5f8] sm:$0xff]
  %v283 = vld [vmem:[%s1 + $0x600] sm:$0xff]
  %v284 = vld [vmem:[%s1 + $0x608] sm:$0xff]
  %v285 = vld [vmem:[%s1 + $0x610] sm:$0xff]
  %v286 = vld [vmem:[%s1 + $0x618] sm:$0xff]
  %v287 = vld [vmem:[%s1 + $0x620] sm:$0xff]
  %v288 = vld [vmem:[%s1 + $0x628] sm:$0xff]
  %v289 = vld [vmem:[%s1 + $0x630] sm:$0xff]
  %v290 = vld [vmem:[%s1 + $0x638] sm:$0xff]
  %v291 = vld [vmem:[%s1 + $0x640] sm:$0xff]
  %v292 = vld [vmem:[%s1 + $0x648] sm:$0xff]
  %v293 = vld [vmem:[%s1 + $0x650] sm:$0xff]
  %v294 = vld [vmem:[%s1 + $0x658] sm:$0xff]
  %v295 = vld [vmem:[%s1 + $0x660] sm:$0xff]
  %v296 = vld [vmem:[%s1 + $0x668] sm:$0xff]
  %v297 = vld [vmem:[%s1 + $0x670] sm:$0xff]
  %v298 = vld [vmem:[%s1 + $0x678] sm:$0xff]
  %v299 = vld [vmem:[%s1 + $0x680] sm:$0xff]
  %v300 = vld [vmem:[%s1 + $0x688] sm:$0xff]
  %v301 = vld [vmem:[%s1 + $0x690] sm:$0xff]
  %v302 = vld [vmem:[%s1 + $0x698] sm:$0xff]
  %v303 = vld [vmem:[%s1 + $0x6a0] sm:$0xff]
  %v304 = vld [vmem:[%s1 + $0x6a8] sm:$0xff]
  %v305 = vld [vmem:[%s1 + $0x6b0] sm:$0xff]
  %v306 = vld [vmem:[%s1 + $0x6b8] sm:$0xff]
  %v307 = vld [vmem:[%s1 + $0x6c0] sm:$0xff]
  %v308 = vld [vmem:[%s1 + $0x6c8] sm:$0xff]
  %v309 = vld [vmem:[%s1 + $0x6d0] sm:$0xff]
  %v310 = vld [vmem:[%s1 + $0x6d8] sm:$0xff]
  %v311 = vld [vmem:[%s1 + $0x6e0] sm:$0xff]
  %v312 = vld [vmem:[%s1 + $0x6e8] sm:$0xff]
  %v313 = vld [vmem:[%s1 + $0x6f0] sm:$0xff]
  %v314 = vld [vmem:[%s1 + $0x6f8] sm:$0xff]
  %v315 = vld [vmem:[%s2] sm:$0xf]
  %v317 = vlaneseq
  %v318 = vshrl.u32 %v317, 7
  %v319 = vsub.s32 0, %v318
  %v320 = vrot.slane %v315, %v319
  %v321 = vlaneseq
  %v322 = vshrl.u32 %v321, 7
  %v323 = vsub.s32 1, %v322
  %v324 = vrot.slane %v315, %v323
  %v325 = vlaneseq
  %v326 = vshrl.u32 %v325, 7
  %v327 = vsub.s32 2, %v326
  %v328 = vrot.slane %v315, %v327
  %v329 = vlaneseq
  %v330 = vshrl.u32 %v329, 7
  %v331 = vsub.s32 3, %v330
  %v332 = vrot.slane %v315, %v331
  %v401 = vunpack.c.l.b16 %v27
  %v402 = vunpack.c.h.b16 %v27
  %v403 = vunpack.c.l.b16 %v28
  %v404 = vunpack.c.h.b16 %v28
  %v405 = vunpack.c.l.b16 %v29
  %v406 = vunpack.c.h.b16 %v29
  %v407 = vunpack.c.l.b16 %v30
  %v408 = vunpack.c.l.b16 %v31
  %v409 = vunpack.c.h.b16 %v31
  %v410 = vunpack.c.l.b16 %v32
  %v411 = vunpack.c.h.b16 %v32
  %v412 = vunpack.c.l.b16 %v33
  %v413 = vunpack.c.h.b16 %v33
  %v414 = vunpack.c.l.b16 %v34
  %v415 = vunpack.c.l.b16 %v35
  %v416 = vunpack.c.h.b16 %v35
  %v417 = vunpack.c.l.b16 %v36
  %v418 = vunpack.c.h.b16 %v36
  %v419 = vunpack.c.l.b16 %v37
  %v420 = vunpack.c.h.b16 %v37
  %v421 = vunpack.c.l.b16 %v38
  %v422 = vunpack.c.l.b16 %v39
  %v423 = vunpack.c.h.b16 %v39
  %v424 = vunpack.c.l.b16 %v40
  %v425 = vunpack.c.h.b16 %v40
  %v426 = vunpack.c.l.b16 %v41
  %v427 = vunpack.c.h.b16 %v41
  %v428 = vunpack.c.l.b16 %v42
  %v429 = vunpack.c.l.b16 %v43
  %v430 = vunpack.c.h.b16 %v43
  %v431 = vunpack.c.l.b16 %v44
  %v432 = vunpack.c.h.b16 %v44
  %v433 = vunpack.c.l.b16 %v45
  %v434 = vunpack.c.h.b16 %v45
  %v435 = vunpack.c.l.b16 %v46
  %v436 = vunpack.c.l.b16 %v47
  %v437 = vunpack.c.h.b16 %v47
  %v438 = vunpack.c.l.b16 %v48
  %v439 = vunpack.c.h.b16 %v48
  %v440 = vunpack.c.l.b16 %v49
  %v441 = vunpack.c.h.b16 %v49
  %v442 = vunpack.c.l.b16 %v50
  %v443 = vunpack.c.l.b16 %v51
  %v444 = vunpack.c.h.b16 %v51
  %v445 = vunpack.c.l.b16 %v52
  %v446 = vunpack.c.h.b16 %v52
  %v447 = vunpack.c.l.b16 %v53
  %v448 = vunpack.c.h.b16 %v53
  %v449 = vunpack.c.l.b16 %v54
  %v450 = vunpack.c.l.b16 %v55
  %v451 = vunpack.c.h.b16 %v55
  %v452 = vunpack.c.l.b16 %v56
  %v453 = vunpack.c.h.b16 %v56
  %v454 = vunpack.c.l.b16 %v57
  %v455 = vunpack.c.h.b16 %v57
  %v456 = vunpack.c.l.b16 %v58
  %v457 = vunpack.c.l.b16 %v59
  %v458 = vunpack.c.h.b16 %v59
  %v459 = vunpack.c.l.b16 %v60
  %v460 = vunpack.c.h.b16 %v60
  %v461 = vunpack.c.l.b16 %v61
  %v462 = vunpack.c.h.b16 %v61
  %v463 = vunpack.c.l.b16 %v62
  %v464 = vunpack.c.l.b16 %v63
  %v465 = vunpack.c.h.b16 %v63
  %v466 = vunpack.c.l.b16 %v64
  %v467 = vunpack.c.h.b16 %v64
  %v468 = vunpack.c.l.b16 %v65
  %v469 = vunpack.c.h.b16 %v65
  %v470 = vunpack.c.l.b16 %v66
  %v471 = vunpack.c.l.b16 %v67
  %v472 = vunpack.c.h.b16 %v67
  %v473 = vunpack.c.l.b16 %v68
  %v474 = vunpack.c.h.b16 %v68
  %v475 = vunpack.c.l.b16 %v69
  %v476 = vunpack.c.h.b16 %v69
  %v477 = vunpack.c.l.b16 %v70
  %v478 = vunpack.c.l.b16 %v71
  %v479 = vunpack.c.h.b16 %v71
  %v480 = vunpack.c.l.b16 %v72
  %v481 = vunpack.c.h.b16 %v72
  %v482 = vunpack.c.l.b16 %v73
  %v483 = vunpack.c.h.b16 %v73
  %v484 = vunpack.c.l.b16 %v74
  %v485 = vunpack.c.l.b16 %v75
  %v486 = vunpack.c.h.b16 %v75
  %v487 = vunpack.c.l.b16 %v76
  %v488 = vunpack.c.h.b16 %v76
  %v489 = vunpack.c.l.b16 %v77
  %v490 = vunpack.c.h.b16 %v77
  %v491 = vunpack.c.l.b16 %v78
  %v492 = vunpack.c.l.b16 %v79
  %v493 = vunpack.c.h.b16 %v79
  %v494 = vunpack.c.l.b16 %v80
  %v495 = vunpack.c.h.b16 %v80
  %v496 = vunpack.c.l.b16 %v81
  %v497 = vunpack.c.h.b16 %v81
  %v498 = vunpack.c.l.b16 %v82
  %v499 = vunpack.c.l.b16 %v83
  %v500 = vunpack.c.h.b16 %v83
  %v501 = vunpack.c.l.b16 %v84
  %v502 = vunpack.c.h.b16 %v84
  %v503 = vunpack.c.l.b16 %v85
  %v504 = vunpack.c.h.b16 %v85
  %v505 = vunpack.c.l.b16 %v86
  %v506 = vunpack.c.l.b16 %v87
  %v507 = vunpack.c.h.b16 %v87
  %v508 = vunpack.c.l.b16 %v88
  %v509 = vunpack.c.h.b16 %v88
  %v510 = vunpack.c.l.b16 %v89
  %v511 = vunpack.c.h.b16 %v89
  %v512 = vunpack.c.l.b16 %v90
  %v513 = vpack.c.b16 %v408, %v401
  %v514 = vpack.c.b16 %v409, %v402
  %v515 = vpack.c.b16 %v410, %v403
  %v516 = vpack.c.b16 %v411, %v404
  %v517 = vpack.c.b16 %v412, %v405
  %v518 = vpack.c.b16 %v413, %v406
  %v519 = vpack.c.b16 %v414, %v407
  %v520 = vpack.c.b16 %v422, %v415
  %v521 = vpack.c.b16 %v423, %v416
  %v522 = vpack.c.b16 %v424, %v417
  %v523 = vpack.c.b16 %v425, %v418
  %v524 = vpack.c.b16 %v426, %v419
  %v525 = vpack.c.b16 %v427, %v420
  %v526 = vpack.c.b16 %v428, %v421
  %v527 = vpack.c.b16 %v436, %v429
  %v528 = vpack.c.b16 %v437, %v430
  %v529 = vpack.c.b16 %v438, %v431
  %v530 = vpack.c.b16 %v439, %v432
  %v531 = vpack.c.b16 %v440, %v433
  %v532 = vpack.c.b16 %v441, %v434
  %v533 = vpack.c.b16 %v442, %v435
  %v534 = vpack.c.b16 %v450, %v443
  %v535 = vpack.c.b16 %v451, %v444
  %v536 = vpack.c.b16 %v452, %v445
  %v537 = vpack.c.b16 %v453, %v446
  %v538 = vpack.c.b16 %v454, %v447
  %v539 = vpack.c.b16 %v455, %v448
  %v540 = vpack.c.b16 %v456, %v449
  %v541 = vpack.c.b16 %v464, %v457
  %v542 = vpack.c.b16 %v465, %v458
  %v543 = vpack.c.b16 %v466, %v459
  %v544 = vpack.c.b16 %v467, %v460
  %v545 = vpack.c.b16 %v468, %v461
  %v546 = vpack.c.b16 %v469, %v462
  %v547 = vpack.c.b16 %v470, %v463
  %v548 = vpack.c.b16 %v478, %v471
  %v549 = vpack.c.b16 %v479, %v472
  %v550 = vpack.c.b16 %v480, %v473
  %v551 = vpack.c.b16 %v481, %v474
  %v552 = vpack.c.b16 %v482, %v475
  %v553 = vpack.c.b16 %v483, %v476
  %v554 = vpack.c.b16 %v484, %v477
  %v555 = vpack.c.b16 %v492, %v485
  %v556 = vpack.c.b16 %v493, %v486
  %v557 = vpack.c.b16 %v494, %v487
  %v558 = vpack.c.b16 %v495, %v488
  %v559 = vpack.c.b16 %v496, %v489
  %v560 = vpack.c.b16 %v497, %v490
  %v561 = vpack.c.b16 %v498, %v491
  %v562 = vpack.c.b16 %v506, %v499
  %v563 = vpack.c.b16 %v507, %v500
  %v564 = vpack.c.b16 %v508, %v501
  %v565 = vpack.c.b16 %v509, %v502
  %v566 = vpack.c.b16 %v510, %v503
  %v567 = vpack.c.b16 %v511, %v504
  %v568 = vpack.c.b16 %v512, %v505
  %v849 = vunpack.c.l.b16 %v91
  %v850 = vunpack.c.h.b16 %v91
  %v851 = vunpack.c.l.b16 %v92
  %v852 = vunpack.c.h.b16 %v92
  %v853 = vunpack.c.l.b16 %v93
  %v854 = vunpack.c.h.b16 %v93
  %v855 = vunpack.c.l.b16 %v94
  %v856 = vunpack.c.h.b16 %v94
  %v857 = vunpack.c.l.b16 %v95
  %v858 = vunpack.c.h.b16 %v95
  %v859 = vunpack.c.l.b16 %v96
  %v860 = vunpack.c.h.b16 %v96
  %v861 = vunpack.c.l.b16 %v97
  %v862 = vunpack.c.h.b16 %v97
  %v863 = vunpack.c.l.b16 %v98
  %v864 = vunpack.c.h.b16 %v98
  %v865 = vunpack.c.l.b16 %v99
  %v866 = vunpack.c.h.b16 %v99
  %v867 = vunpack.c.l.b16 %v100
  %v868 = vunpack.c.h.b16 %v100
  %v869 = vunpack.c.l.b16 %v101
  %v870 = vunpack.c.h.b16 %v101
  %v871 = vunpack.c.l.b16 %v102
  %v872 = vunpack.c.h.b16 %v102
  %v873 = vunpack.c.l.b16 %v103
  %v874 = vunpack.c.h.b16 %v103
  %v875 = vunpack.c.l.b16 %v104
  %v876 = vunpack.c.h.b16 %v104
  %v877 = vunpack.c.l.b16 %v105
  %v878 = vunpack.c.h.b16 %v105
  %v879 = vunpack.c.l.b16 %v106
  %v880 = vunpack.c.h.b16 %v106
  %v881 = vunpack.c.l.b16 %v107
  %v882 = vunpack.c.h.b16 %v107
  %v883 = vunpack.c.l.b16 %v108
  %v884 = vunpack.c.h.b16 %v108
  %v885 = vunpack.c.l.b16 %v109
  %v886 = vunpack.c.h.b16 %v109
  %v887 = vunpack.c.l.b16 %v110
  %v888 = vunpack.c.h.b16 %v110
  %v889 = vunpack.c.l.b16 %v111
  %v890 = vunpack.c.h.b16 %v111
  %v891 = vunpack.c.l.b16 %v112
  %v892 = vunpack.c.h.b16 %v112
  %v893 = vunpack.c.l.b16 %v113
  %v894 = vunpack.c.h.b16 %v113
  %v895 = vunpack.c.l.b16 %v114
  %v896 = vunpack.c.h.b16 %v114
  %v897 = vunpack.c.l.b16 %v115
  %v898 = vunpack.c.h.b16 %v115
  %v899 = vunpack.c.l.b16 %v116
  %v900 = vunpack.c.h.b16 %v116
  %v901 = vunpack.c.l.b16 %v117
  %v902 = vunpack.c.h.b16 %v117
  %v903 = vunpack.c.l.b16 %v118
  %v904 = vunpack.c.h.b16 %v118
  %v905 = vunpack.c.l.b16 %v119
  %v906 = vunpack.c.h.b16 %v119
  %v907 = vunpack.c.l.b16 %v120
  %v908 = vunpack.c.h.b16 %v120
  %v909 = vunpack.c.l.b16 %v121
  %v910 = vunpack.c.h.b16 %v121
  %v911 = vunpack.c.l.b16 %v122
  %v912 = vunpack.c.h.b16 %v122
  %v913 = vunpack.c.l.b16 %v123
  %v914 = vunpack.c.h.b16 %v123
  %v915 = vunpack.c.l.b16 %v124
  %v916 = vunpack.c.h.b16 %v124
  %v917 = vunpack.c.l.b16 %v125
  %v918 = vunpack.c.h.b16 %v125
  %v919 = vunpack.c.l.b16 %v126
  %v920 = vunpack.c.h.b16 %v126
  %v921 = vunpack.c.l.b16 %v127
  %v922 = vunpack.c.h.b16 %v127
  %v923 = vunpack.c.l.b16 %v128
  %v924 = vunpack.c.h.b16 %v128
  %v925 = vunpack.c.l.b16 %v129
  %v926 = vunpack.c.h.b16 %v129
  %v927 = vunpack.c.l.b16 %v130
  %v928 = vunpack.c.h.b16 %v130
  %v929 = vunpack.c.l.b16 %v131
  %v930 = vunpack.c.h.b16 %v131
  %v931 = vunpack.c.l.b16 %v132
  %v932 = vunpack.c.h.b16 %v132
  %v933 = vunpack.c.l.b16 %v133
  %v934 = vunpack.c.h.b16 %v133
  %v935 = vunpack.c.l.b16 %v134
  %v936 = vunpack.c.h.b16 %v134
  %v937 = vunpack.c.l.b16 %v135
  %v938 = vunpack.c.h.b16 %v135
  %v939 = vunpack.c.l.b16 %v136
  %v940 = vunpack.c.h.b16 %v136
  %v941 = vunpack.c.l.b16 %v137
  %v942 = vunpack.c.h.b16 %v137
  %v943 = vunpack.c.l.b16 %v138
  %v944 = vunpack.c.h.b16 %v138
  %v945 = vunpack.c.l.b16 %v139
  %v946 = vunpack.c.h.b16 %v139
  %v947 = vunpack.c.l.b16 %v140
  %v948 = vunpack.c.h.b16 %v140
  %v949 = vunpack.c.l.b16 %v141
  %v950 = vunpack.c.h.b16 %v141
  %v951 = vunpack.c.l.b16 %v142
  %v952 = vunpack.c.h.b16 %v142
  %v953 = vunpack.c.l.b16 %v143
  %v954 = vunpack.c.h.b16 %v143
  %v955 = vunpack.c.l.b16 %v144
  %v956 = vunpack.c.h.b16 %v144
  %v957 = vunpack.c.l.b16 %v145
  %v958 = vunpack.c.h.b16 %v145
  %v959 = vunpack.c.l.b16 %v146
  %v960 = vunpack.c.h.b16 %v146
  %v961 = vunpack.c.l.b16 %v147
  %v962 = vunpack.c.h.b16 %v147
  %v963 = vunpack.c.l.b16 %v148
  %v964 = vunpack.c.h.b16 %v148
  %v965 = vunpack.c.l.b16 %v149
  %v966 = vunpack.c.h.b16 %v149
  %v967 = vunpack.c.l.b16 %v150
  %v968 = vunpack.c.h.b16 %v150
  %v969 = vunpack.c.l.b16 %v151
  %v970 = vunpack.c.h.b16 %v151
  %v971 = vunpack.c.l.b16 %v152
  %v972 = vunpack.c.h.b16 %v152
  %v973 = vunpack.c.l.b16 %v153
  %v974 = vunpack.c.h.b16 %v153
  %v975 = vunpack.c.l.b16 %v154
  %v976 = vunpack.c.h.b16 %v154
  %v977 = vunpack.c.l.b16 %v155
  %v978 = vunpack.c.h.b16 %v155
  %v979 = vunpack.c.l.b16 %v156
  %v980 = vunpack.c.h.b16 %v156
  %v981 = vunpack.c.l.b16 %v157
  %v982 = vunpack.c.h.b16 %v157
  %v983 = vunpack.c.l.b16 %v158
  %v984 = vunpack.c.h.b16 %v158
  %v985 = vunpack.c.l.b16 %v159
  %v986 = vunpack.c.h.b16 %v159
  %v987 = vunpack.c.l.b16 %v160
  %v988 = vunpack.c.h.b16 %v160
  %v989 = vunpack.c.l.b16 %v161
  %v990 = vunpack.c.h.b16 %v161
  %v991 = vunpack.c.l.b16 %v162
  %v992 = vunpack.c.h.b16 %v162
  %v993 = vunpack.c.l.b16 %v163
  %v994 = vunpack.c.h.b16 %v163
  %v995 = vunpack.c.l.b16 %v164
  %v996 = vunpack.c.h.b16 %v164
  %v997 = vunpack.c.l.b16 %v165
  %v998 = vunpack.c.h.b16 %v165
  %v999 = vunpack.c.l.b16 %v166
  %v1000 = vunpack.c.h.b16 %v166
  %v1001 = vunpack.c.l.b16 %v167
  %v1002 = vunpack.c.h.b16 %v167
  %v1003 = vunpack.c.l.b16 %v168
  %v1004 = vunpack.c.h.b16 %v168
  %v1005 = vunpack.c.l.b16 %v169
  %v1006 = vunpack.c.h.b16 %v169
  %v1007 = vunpack.c.l.b16 %v170
  %v1008 = vunpack.c.h.b16 %v170
  %v1009 = vunpack.c.l.b16 %v171
  %v1010 = vunpack.c.h.b16 %v171
  %v1011 = vunpack.c.l.b16 %v172
  %v1012 = vunpack.c.h.b16 %v172
  %v1013 = vunpack.c.l.b16 %v173
  %v1014 = vunpack.c.h.b16 %v173
  %v1015 = vunpack.c.l.b16 %v174
  %v1016 = vunpack.c.h.b16 %v174
  %v1017 = vunpack.c.l.b16 %v175
  %v1018 = vunpack.c.h.b16 %v175
  %v1019 = vunpack.c.l.b16 %v176
  %v1020 = vunpack.c.h.b16 %v176
  %v1021 = vunpack.c.l.b16 %v177
  %v1022 = vunpack.c.h.b16 %v177
  %v1023 = vunpack.c.l.b16 %v178
  %v1024 = vunpack.c.h.b16 %v178
  %v1025 = vunpack.c.l.b16 %v179
  %v1026 = vunpack.c.h.b16 %v179
  %v1027 = vunpack.c.l.b16 %v180
  %v1028 = vunpack.c.h.b16 %v180
  %v1029 = vunpack.c.l.b16 %v181
  %v1030 = vunpack.c.h.b16 %v181
  %v1031 = vunpack.c.l.b16 %v182
  %v1032 = vunpack.c.h.b16 %v182
  %v1033 = vunpack.c.l.b16 %v183
  %v1034 = vunpack.c.h.b16 %v183
  %v1035 = vunpack.c.l.b16 %v184
  %v1036 = vunpack.c.h.b16 %v184
  %v1037 = vunpack.c.l.b16 %v185
  %v1038 = vunpack.c.h.b16 %v185
  %v1039 = vunpack.c.l.b16 %v186
  %v1040 = vunpack.c.h.b16 %v186
  %v1041 = vunpack.c.l.b16 %v187
  %v1042 = vunpack.c.h.b16 %v187
  %v1043 = vunpack.c.l.b16 %v188
  %v1044 = vunpack.c.h.b16 %v188
  %v1045 = vunpack.c.l.b16 %v189
  %v1046 = vunpack.c.h.b16 %v189
  %v1047 = vunpack.c.l.b16 %v190
  %v1048 = vunpack.c.h.b16 %v190
  %v1049 = vunpack.c.l.b16 %v191
  %v1050 = vunpack.c.h.b16 %v191
  %v1051 = vunpack.c.l.b16 %v192
  %v1052 = vunpack.c.h.b16 %v192
  %v1053 = vunpack.c.l.b16 %v193
  %v1054 = vunpack.c.h.b16 %v193
  %v1055 = vunpack.c.l.b16 %v194
  %v1056 = vunpack.c.h.b16 %v194
  %v1057 = vunpack.c.l.b16 %v195
  %v1058 = vunpack.c.h.b16 %v195
  %v1059 = vunpack.c.l.b16 %v196
  %v1060 = vunpack.c.h.b16 %v196
  %v1061 = vunpack.c.l.b16 %v197
  %v1062 = vunpack.c.h.b16 %v197
  %v1063 = vunpack.c.l.b16 %v198
  %v1064 = vunpack.c.h.b16 %v198
  %v1065 = vunpack.c.l.b16 %v199
  %v1066 = vunpack.c.h.b16 %v199
  %v1067 = vunpack.c.l.b16 %v200
  %v1068 = vunpack.c.h.b16 %v200
  %v1069 = vunpack.c.l.b16 %v201
  %v1070 = vunpack.c.h.b16 %v201
  %v1071 = vunpack.c.l.b16 %v202
  %v1072 = vunpack.c.h.b16 %v202
  %v1073 = vunpack.c.l.b16 %v203
  %v1074 = vunpack.c.h.b16 %v203
  %v1075 = vunpack.c.l.b16 %v204
  %v1076 = vunpack.c.h.b16 %v204
  %v1077 = vunpack.c.l.b16 %v205
  %v1078 = vunpack.c.h.b16 %v205
  %v1079 = vunpack.c.l.b16 %v206
  %v1080 = vunpack.c.h.b16 %v206
  %v1081 = vunpack.c.l.b16 %v207
  %v1082 = vunpack.c.h.b16 %v207
  %v1083 = vunpack.c.l.b16 %v208
  %v1084 = vunpack.c.h.b16 %v208
  %v1085 = vunpack.c.l.b16 %v209
  %v1086 = vunpack.c.h.b16 %v209
  %v1087 = vunpack.c.l.b16 %v210
  %v1088 = vunpack.c.h.b16 %v210
  %v1089 = vunpack.c.l.b16 %v211
  %v1090 = vunpack.c.h.b16 %v211
  %v1091 = vunpack.c.l.b16 %v212
  %v1092 = vunpack.c.h.b16 %v212
  %v1093 = vunpack.c.l.b16 %v213
  %v1094 = vunpack.c.h.b16 %v213
  %v1095 = vunpack.c.l.b16 %v214
  %v1096 = vunpack.c.h.b16 %v214
  %v1097 = vunpack.c.l.b16 %v215
  %v1098 = vunpack.c.h.b16 %v215
  %v1099 = vunpack.c.l.b16 %v216
  %v1100 = vunpack.c.h.b16 %v216
  %v1101 = vunpack.c.l.b16 %v217
  %v1102 = vunpack.c.h.b16 %v217
  %v1103 = vunpack.c.l.b16 %v218
  %v1104 = vunpack.c.h.b16 %v218
  %v1105 = vunpack.c.l.b16 %v219
  %v1106 = vunpack.c.h.b16 %v219
  %v1107 = vunpack.c.l.b16 %v220
  %v1108 = vunpack.c.h.b16 %v220
  %v1109 = vunpack.c.l.b16 %v221
  %v1110 = vunpack.c.h.b16 %v221
  %v1111 = vunpack.c.l.b16 %v222
  %v1112 = vunpack.c.h.b16 %v222
  %v1113 = vunpack.c.l.b16 %v223
  %v1114 = vunpack.c.h.b16 %v223
  %v1115 = vunpack.c.l.b16 %v224
  %v1116 = vunpack.c.h.b16 %v224
  %v1117 = vunpack.c.l.b16 %v225
  %v1118 = vunpack.c.h.b16 %v225
  %v1119 = vunpack.c.l.b16 %v226
  %v1120 = vunpack.c.h.b16 %v226
  %v1121 = vunpack.c.l.b16 %v227
  %v1122 = vunpack.c.h.b16 %v227
  %v1123 = vunpack.c.l.b16 %v228
  %v1124 = vunpack.c.h.b16 %v228
  %v1125 = vunpack.c.l.b16 %v229
  %v1126 = vunpack.c.h.b16 %v229
  %v1127 = vunpack.c.l.b16 %v230
  %v1128 = vunpack.c.h.b16 %v230
  %v1129 = vunpack.c.l.b16 %v231
  %v1130 = vunpack.c.h.b16 %v231
  %v1131 = vunpack.c.l.b16 %v232
  %v1132 = vunpack.c.h.b16 %v232
  %v1133 = vunpack.c.l.b16 %v233
  %v1134 = vunpack.c.h.b16 %v233
  %v1135 = vunpack.c.l.b16 %v234
  %v1136 = vunpack.c.h.b16 %v234
  %v1137 = vunpack.c.l.b16 %v235
  %v1138 = vunpack.c.h.b16 %v235
  %v1139 = vunpack.c.l.b16 %v236
  %v1140 = vunpack.c.h.b16 %v236
  %v1141 = vunpack.c.l.b16 %v237
  %v1142 = vunpack.c.h.b16 %v237
  %v1143 = vunpack.c.l.b16 %v238
  %v1144 = vunpack.c.h.b16 %v238
  %v1145 = vunpack.c.l.b16 %v239
  %v1146 = vunpack.c.h.b16 %v239
  %v1147 = vunpack.c.l.b16 %v240
  %v1148 = vunpack.c.h.b16 %v240
  %v1149 = vunpack.c.l.b16 %v241
  %v1150 = vunpack.c.h.b16 %v241
  %v1151 = vunpack.c.l.b16 %v242
  %v1152 = vunpack.c.h.b16 %v242
  %v1153 = vunpack.c.l.b16 %v243
  %v1154 = vunpack.c.h.b16 %v243
  %v1155 = vunpack.c.l.b16 %v244
  %v1156 = vunpack.c.h.b16 %v244
  %v1157 = vunpack.c.l.b16 %v245
  %v1158 = vunpack.c.h.b16 %v245
  %v1159 = vunpack.c.l.b16 %v246
  %v1160 = vunpack.c.h.b16 %v246
  %v1161 = vunpack.c.l.b16 %v247
  %v1162 = vunpack.c.h.b16 %v247
  %v1163 = vunpack.c.l.b16 %v248
  %v1164 = vunpack.c.h.b16 %v248
  %v1165 = vunpack.c.l.b16 %v249
  %v1166 = vunpack.c.h.b16 %v249
  %v1167 = vunpack.c.l.b16 %v250
  %v1168 = vunpack.c.h.b16 %v250
  %v1169 = vunpack.c.l.b16 %v251
  %v1170 = vunpack.c.h.b16 %v251
  %v1171 = vunpack.c.l.b16 %v252
  %v1172 = vunpack.c.h.b16 %v252
  %v1173 = vunpack.c.l.b16 %v253
  %v1174 = vunpack.c.h.b16 %v253
  %v1175 = vunpack.c.l.b16 %v254
  %v1176 = vunpack.c.h.b16 %v254
  %v1177 = vunpack.c.l.b16 %v255
  %v1178 = vunpack.c.h.b16 %v255
  %v1179 = vunpack.c.l.b16 %v256
  %v1180 = vunpack.c.h.b16 %v256
  %v1181 = vunpack.c.l.b16 %v257
  %v1182 = vunpack.c.h.b16 %v257
  %v1183 = vunpack.c.l.b16 %v258
  %v1184 = vunpack.c.h.b16 %v258
  %v1185 = vunpack.c.l.b16 %v259
  %v1186 = vunpack.c.h.b16 %v259
  %v1187 = vunpack.c.l.b16 %v260
  %v1188 = vunpack.c.h.b16 %v260
  %v1189 = vunpack.c.l.b16 %v261
  %v1190 = vunpack.c.h.b16 %v261
  %v1191 = vunpack.c.l.b16 %v262
  %v1192 = vunpack.c.h.b16 %v262
  %v1193 = vunpack.c.l.b16 %v263
  %v1194 = vunpack.c.h.b16 %v263
  %v1195 = vunpack.c.l.b16 %v264
  %v1196 = vunpack.c.h.b16 %v264
  %v1197 = vunpack.c.l.b16 %v265
  %v1198 = vunpack.c.h.b16 %v265
  %v1199 = vunpack.c.l.b16 %v266
  %v1200 = vunpack.c.h.b16 %v266
  %v1201 = vunpack.c.l.b16 %v267
  %v1202 = vunpack.c.h.b16 %v267
  %v1203 = vunpack.c.l.b16 %v268
  %v1204 = vunpack.c.h.b16 %v268
  %v1205 = vunpack.c.l.b16 %v269
  %v1206 = vunpack.c.h.b16 %v269
  %v1207 = vunpack.c.l.b16 %v270
  %v1208 = vunpack.c.h.b16 %v270
  %v1209 = vunpack.c.l.b16 %v271
  %v1210 = vunpack.c.h.b16 %v271
  %v1211 = vunpack.c.l.b16 %v272
  %v1212 = vunpack.c.h.b16 %v272
  %v1213 = vunpack.c.l.b16 %v273
  %v1214 = vunpack.c.h.b16 %v273
  %v1215 = vunpack.c.l.b16 %v274
  %v1216 = vunpack.c.h.b16 %v274
  %v1217 = vunpack.c.l.b16 %v275
  %v1218 = vunpack.c.h.b16 %v275
  %v1219 = vunpack.c.l.b16 %v276
  %v1220 = vunpack.c.h.b16 %v276
  %v1221 = vunpack.c.l.b16 %v277
  %v1222 = vunpack.c.h.b16 %v277
  %v1223 = vunpack.c.l.b16 %v278
  %v1224 = vunpack.c.h.b16 %v278
  %v1225 = vunpack.c.l.b16 %v279
  %v1226 = vunpack.c.h.b16 %v279
  %v1227 = vunpack.c.l.b16 %v280
  %v1228 = vunpack.c.h.b16 %v280
  %v1229 = vunpack.c.l.b16 %v281
  %v1230 = vunpack.c.h.b16 %v281
  %v1231 = vunpack.c.l.b16 %v282
  %v1232 = vunpack.c.h.b16 %v282
  %v1233 = vunpack.c.l.b16 %v283
  %v1234 = vunpack.c.h.b16 %v283
  %v1235 = vunpack.c.l.b16 %v284
  %v1236 = vunpack.c.h.b16 %v284
  %v1237 = vunpack.c.l.b16 %v285
  %v1238 = vunpack.c.h.b16 %v285
  %v1239 = vunpack.c.l.b16 %v286
  %v1240 = vunpack.c.h.b16 %v286
  %v1241 = vunpack.c.l.b16 %v287
  %v1242 = vunpack.c.h.b16 %v287
  %v1243 = vunpack.c.l.b16 %v288
  %v1244 = vunpack.c.h.b16 %v288
  %v1245 = vunpack.c.l.b16 %v289
  %v1246 = vunpack.c.h.b16 %v289
  %v1247 = vunpack.c.l.b16 %v290
  %v1248 = vunpack.c.h.b16 %v290
  %v1249 = vunpack.c.l.b16 %v291
  %v1250 = vunpack.c.h.b16 %v291
  %v1251 = vunpack.c.l.b16 %v292
  %v1252 = vunpack.c.h.b16 %v292
  %v1253 = vunpack.c.l.b16 %v293
  %v1254 = vunpack.c.h.b16 %v293
  %v1255 = vunpack.c.l.b16 %v294
  %v1256 = vunpack.c.h.b16 %v294
  %v1257 = vunpack.c.l.b16 %v295
  %v1258 = vunpack.c.h.b16 %v295
  %v1259 = vunpack.c.l.b16 %v296
  %v1260 = vunpack.c.h.b16 %v296
  %v1261 = vunpack.c.l.b16 %v297
  %v1262 = vunpack.c.h.b16 %v297
  %v1263 = vunpack.c.l.b16 %v298
  %v1264 = vunpack.c.h.b16 %v298
  %v1265 = vunpack.c.l.b16 %v299
  %v1266 = vunpack.c.h.b16 %v299
  %v1267 = vunpack.c.l.b16 %v300
  %v1268 = vunpack.c.h.b16 %v300
  %v1269 = vunpack.c.l.b16 %v301
  %v1270 = vunpack.c.h.b16 %v301
  %v1271 = vunpack.c.l.b16 %v302
  %v1272 = vunpack.c.h.b16 %v302
  %v1273 = vunpack.c.l.b16 %v303
  %v1274 = vunpack.c.h.b16 %v303
  %v1275 = vunpack.c.l.b16 %v304
  %v1276 = vunpack.c.h.b16 %v304
  %v1277 = vunpack.c.l.b16 %v305
  %v1278 = vunpack.c.h.b16 %v305
  %v1279 = vunpack.c.l.b16 %v306
  %v1280 = vunpack.c.h.b16 %v306
  %v1281 = vunpack.c.l.b16 %v307
  %v1282 = vunpack.c.h.b16 %v307
  %v1283 = vunpack.c.l.b16 %v308
  %v1284 = vunpack.c.h.b16 %v308
  %v1285 = vunpack.c.l.b16 %v309
  %v1286 = vunpack.c.h.b16 %v309
  %v1287 = vunpack.c.l.b16 %v310
  %v1288 = vunpack.c.h.b16 %v310
  %v1289 = vunpack.c.l.b16 %v311
  %v1290 = vunpack.c.h.b16 %v311
  %v1291 = vunpack.c.l.b16 %v312
  %v1292 = vunpack.c.h.b16 %v312
  %v1293 = vunpack.c.l.b16 %v313
  %v1294 = vunpack.c.h.b16 %v313
  %v1295 = vunpack.c.l.b16 %v314
  %v1296 = vunpack.c.h.b16 %v314
  %v1297 = vpack.c.b16 %v853, %v849
  %v1298 = vpack.c.b16 %v854, %v850
  %v1299 = vpack.c.b16 %v855, %v851
  %v1300 = vpack.c.b16 %v856, %v852
  %v1301 = vpack.c.b16 %v861, %v857
  %v1302 = vpack.c.b16 %v862, %v858
  %v1303 = vpack.c.b16 %v863, %v859
  %v1304 = vpack.c.b16 %v864, %v860
  %v1305 = vpack.c.b16 %v869, %v865
  %v1306 = vpack.c.b16 %v870, %v866
  %v1307 = vpack.c.b16 %v871, %v867
  %v1308 = vpack.c.b16 %v872, %v868
  %v1309 = vpack.c.b16 %v877, %v873
  %v1310 = vpack.c.b16 %v878, %v874
  %v1311 = vpack.c.b16 %v879, %v875
  %v1312 = vpack.c.b16 %v880, %v876
  %v1313 = vpack.c.b16 %v885, %v881
  %v1314 = vpack.c.b16 %v886, %v882
  %v1315 = vpack.c.b16 %v887, %v883
  %v1316 = vpack.c.b16 %v888, %v884
  %v1317 = vpack.c.b16 %v893, %v889
  %v1318 = vpack.c.b16 %v894, %v890
  %v1319 = vpack.c.b16 %v895, %v891
  %v1320 = vpack.c.b16 %v896, %v892
  %v1321 = vpack.c.b16 %v901, %v897
  %v1322 = vpack.c.b16 %v902, %v898
  %v1323 = vpack.c.b16 %v903, %v899
  %v1324 = vpack.c.b16 %v904, %v900
  %v1325 = vpack.c.b16 %v909, %v905
  %v1326 = vpack.c.b16 %v910, %v906
  %v1327 = vpack.c.b16 %v911, %v907
  %v1328 = vpack.c.b16 %v912, %v908
  %v1329 = vpack.c.b16 %v917, %v913
  %v1330 = vpack.c.b16 %v918, %v914
  %v1331 = vpack.c.b16 %v919, %v915
  %v1332 = vpack.c.b16 %v920, %v916
  %v1333 = vpack.c.b16 %v925, %v921
  %v1334 = vpack.c.b16 %v926, %v922
  %v1335 = vpack.c.b16 %v927, %v923
  %v1336 = vpack.c.b16 %v928, %v924
  %v1337 = vpack.c.b16 %v933, %v929
  %v1338 = vpack.c.b16 %v934, %v930
  %v1339 = vpack.c.b16 %v935, %v931
  %v1340 = vpack.c.b16 %v936, %v932
  %v1341 = vpack.c.b16 %v941, %v937
  %v1342 = vpack.c.b16 %v942, %v938
  %v1343 = vpack.c.b16 %v943, %v939
  %v1344 = vpack.c.b16 %v944, %v940
  %v1345 = vpack.c.b16 %v949, %v945
  %v1346 = vpack.c.b16 %v950, %v946
  %v1347 = vpack.c.b16 %v951, %v947
  %v1348 = vpack.c.b16 %v952, %v948
  %v1349 = vpack.c.b16 %v957, %v953
  %v1350 = vpack.c.b16 %v958, %v954
  %v1351 = vpack.c.b16 %v959, %v955
  %v1352 = vpack.c.b16 %v960, %v956
  %v1353 = vpack.c.b16 %v965, %v961
  %v1354 = vpack.c.b16 %v966, %v962
  %v1355 = vpack.c.b16 %v967, %v963
  %v1356 = vpack.c.b16 %v968, %v964
  %v1357 = vpack.c.b16 %v973, %v969
  %v1358 = vpack.c.b16 %v974, %v970
  %v1359 = vpack.c.b16 %v975, %v971
  %v1360 = vpack.c.b16 %v976, %v972
  %v1361 = vpack.c.b16 %v981, %v977
  %v1362 = vpack.c.b16 %v982, %v978
  %v1363 = vpack.c.b16 %v983, %v979
  %v1364 = vpack.c.b16 %v984, %v980
  %v1365 = vpack.c.b16 %v989, %v985
  %v1366 = vpack.c.b16 %v990, %v986
  %v1367 = vpack.c.b16 %v991, %v987
  %v1368 = vpack.c.b16 %v992, %v988
  %v1369 = vpack.c.b16 %v997, %v993
  %v1370 = vpack.c.b16 %v998, %v994
  %v1371 = vpack.c.b16 %v999, %v995
  %v1372 = vpack.c.b16 %v1000, %v996
  %v1373 = vpack.c.b16 %v1005, %v1001
  %v1374 = vpack.c.b16 %v1006, %v1002
  %v1375 = vpack.c.b16 %v1007, %v1003
  %v1376 = vpack.c.b16 %v1008, %v1004
  %v1377 = vpack.c.b16 %v1013, %v1009
  %v1378 = vpack.c.b16 %v1014, %v1010
  %v1379 = vpack.c.b16 %v1015, %v1011
  %v1380 = vpack.c.b16 %v1016, %v1012
  %v1381 = vpack.c.b16 %v1021, %v1017
  %v1382 = vpack.c.b16 %v1022, %v1018
  %v1383 = vpack.c.b16 %v1023, %v1019
  %v1384 = vpack.c.b16 %v1024, %v1020
  %v1385 = vpack.c.b16 %v1029, %v1025
  %v1386 = vpack.c.b16 %v1030, %v1026
  %v1387 = vpack.c.b16 %v1031, %v1027
  %v1388 = vpack.c.b16 %v1032, %v1028
  %v1389 = vpack.c.b16 %v1037, %v1033
  %v1390 = vpack.c.b16 %v1038, %v1034
  %v1391 = vpack.c.b16 %v1039, %v1035
  %v1392 = vpack.c.b16 %v1040, %v1036
  %v1393 = vpack.c.b16 %v1045, %v1041
  %v1394 = vpack.c.b16 %v1046, %v1042
  %v1395 = vpack.c.b16 %v1047, %v1043
  %v1396 = vpack.c.b16 %v1048, %v1044
  %v1397 = vpack.c.b16 %v1053, %v1049
  %v1398 = vpack.c.b16 %v1054, %v1050
  %v1399 = vpack.c.b16 %v1055, %v1051
  %v1400 = vpack.c.b16 %v1056, %v1052
  %v1401 = vpack.c.b16 %v1061, %v1057
  %v1402 = vpack.c.b16 %v1062, %v1058
  %v1403 = vpack.c.b16 %v1063, %v1059
  %v1404 = vpack.c.b16 %v1064, %v1060
  %v1405 = vpack.c.b16 %v1069, %v1065
  %v1406 = vpack.c.b16 %v1070, %v1066
  %v1407 = vpack.c.b16 %v1071, %v1067
  %v1408 = vpack.c.b16 %v1072, %v1068
  %v1409 = vpack.c.b16 %v1077, %v1073
  %v1410 = vpack.c.b16 %v1078, %v1074
  %v1411 = vpack.c.b16 %v1079, %v1075
  %v1412 = vpack.c.b16 %v1080, %v1076
  %v1413 = vpack.c.b16 %v1085, %v1081
  %v1414 = vpack.c.b16 %v1086, %v1082
  %v1415 = vpack.c.b16 %v1087, %v1083
  %v1416 = vpack.c.b16 %v1088, %v1084
  %v1417 = vpack.c.b16 %v1093, %v1089
  %v1418 = vpack.c.b16 %v1094, %v1090
  %v1419 = vpack.c.b16 %v1095, %v1091
  %v1420 = vpack.c.b16 %v1096, %v1092
  %v1421 = vpack.c.b16 %v1101, %v1097
  %v1422 = vpack.c.b16 %v1102, %v1098
  %v1423 = vpack.c.b16 %v1103, %v1099
  %v1424 = vpack.c.b16 %v1104, %v1100
  %v1425 = vpack.c.b16 %v1109, %v1105
  %v1426 = vpack.c.b16 %v1110, %v1106
  %v1427 = vpack.c.b16 %v1111, %v1107
  %v1428 = vpack.c.b16 %v1112, %v1108
  %v1429 = vpack.c.b16 %v1117, %v1113
  %v1430 = vpack.c.b16 %v1118, %v1114
  %v1431 = vpack.c.b16 %v1119, %v1115
  %v1432 = vpack.c.b16 %v1120, %v1116
  %v1433 = vpack.c.b16 %v1125, %v1121
  %v1434 = vpack.c.b16 %v1126, %v1122
  %v1435 = vpack.c.b16 %v1127, %v1123
  %v1436 = vpack.c.b16 %v1128, %v1124
  %v1437 = vpack.c.b16 %v1133, %v1129
  %v1438 = vpack.c.b16 %v1134, %v1130
  %v1439 = vpack.c.b16 %v1135, %v1131
  %v1440 = vpack.c.b16 %v1136, %v1132
  %v1441 = vpack.c.b16 %v1141, %v1137
  %v1442 = vpack.c.b16 %v1142, %v1138
  %v1443 = vpack.c.b16 %v1143, %v1139
  %v1444 = vpack.c.b16 %v1144, %v1140
  %v1445 = vpack.c.b16 %v1149, %v1145
  %v1446 = vpack.c.b16 %v1150, %v1146
  %v1447 = vpack.c.b16 %v1151, %v1147
  %v1448 = vpack.c.b16 %v1152, %v1148
  %v1449 = vpack.c.b16 %v1157, %v1153
  %v1450 = vpack.c.b16 %v1158, %v1154
  %v1451 = vpack.c.b16 %v1159, %v1155
  %v1452 = vpack.c.b16 %v1160, %v1156
  %v1453 = vpack.c.b16 %v1165, %v1161
  %v1454 = vpack.c.b16 %v1166, %v1162
  %v1455 = vpack.c.b16 %v1167, %v1163
  %v1456 = vpack.c.b16 %v1168, %v1164
  %v1457 = vpack.c.b16 %v1173, %v1169
  %v1458 = vpack.c.b16 %v1174, %v1170
  %v1459 = vpack.c.b16 %v1175, %v1171
  %v1460 = vpack.c.b16 %v1176, %v1172
  %v1461 = vpack.c.b16 %v1181, %v1177
  %v1462 = vpack.c.b16 %v1182, %v1178
  %v1463 = vpack.c.b16 %v1183, %v1179
  %v1464 = vpack.c.b16 %v1184, %v1180
  %v1465 = vpack.c.b16 %v1189, %v1185
  %v1466 = vpack.c.b16 %v1190, %v1186
  %v1467 = vpack.c.b16 %v1191, %v1187
  %v1468 = vpack.c.b16 %v1192, %v1188
  %v1469 = vpack.c.b16 %v1197, %v1193
  %v1470 = vpack.c.b16 %v1198, %v1194
  %v1471 = vpack.c.b16 %v1199, %v1195
  %v1472 = vpack.c.b16 %v1200, %v1196
  %v1473 = vpack.c.b16 %v1205, %v1201
  %v1474 = vpack.c.b16 %v1206, %v1202
  %v1475 = vpack.c.b16 %v1207, %v1203
  %v1476 = vpack.c.b16 %v1208, %v1204
  %v1477 = vpack.c.b16 %v1213, %v1209
  %v1478 = vpack.c.b16 %v1214, %v1210
  %v1479 = vpack.c.b16 %v1215, %v1211
  %v1480 = vpack.c.b16 %v1216, %v1212
  %v1481 = vpack.c.b16 %v1221, %v1217
  %v1482 = vpack.c.b16 %v1222, %v1218
  %v1483 = vpack.c.b16 %v1223, %v1219
  %v1484 = vpack.c.b16 %v1224, %v1220
  %v1485 = vpack.c.b16 %v1229, %v1225
  %v1486 = vpack.c.b16 %v1230, %v1226
  %v1487 = vpack.c.b16 %v1231, %v1227
  %v1488 = vpack.c.b16 %v1232, %v1228
  %v1489 = vpack.c.b16 %v1237, %v1233
  %v1490 = vpack.c.b16 %v1238, %v1234
  %v1491 = vpack.c.b16 %v1239, %v1235
  %v1492 = vpack.c.b16 %v1240, %v1236
  %v1493 = vpack.c.b16 %v1245, %v1241
  %v1494 = vpack.c.b16 %v1246, %v1242
  %v1495 = vpack.c.b16 %v1247, %v1243
  %v1496 = vpack.c.b16 %v1248, %v1244
  %v1497 = vpack.c.b16 %v1253, %v1249
  %v1498 = vpack.c.b16 %v1254, %v1250
  %v1499 = vpack.c.b16 %v1255, %v1251
  %v1500 = vpack.c.b16 %v1256, %v1252
  %v1501 = vpack.c.b16 %v1261, %v1257
  %v1502 = vpack.c.b16 %v1262, %v1258
  %v1503 = vpack.c.b16 %v1263, %v1259
  %v1504 = vpack.c.b16 %v1264, %v1260
  %v1505 = vpack.c.b16 %v1269, %v1265
  %v1506 = vpack.c.b16 %v1270, %v1266
  %v1507 = vpack.c.b16 %v1271, %v1267
  %v1508 = vpack.c.b16 %v1272, %v1268
  %v1509 = vpack.c.b16 %v1277, %v1273
  %v1510 = vpack.c.b16 %v1278, %v1274
  %v1511 = vpack.c.b16 %v1279, %v1275
  %v1512 = vpack.c.b16 %v1280, %v1276
  %v1513 = vpack.c.b16 %v1285, %v1281
  %v1514 = vpack.c.b16 %v1286, %v1282
  %v1515 = vpack.c.b16 %v1287, %v1283
  %v1516 = vpack.c.b16 %v1288, %v1284
  %v1517 = vpack.c.b16 %v1293, %v1289
  %v1518 = vpack.c.b16 %v1294, %v1290
  %v1519 = vpack.c.b16 %v1295, %v1291
  %v1520 = vpack.c.b16 %v1296, %v1292
  %1745 = vmatprep.subr.bf16.mxu0 %v1326
  %1746 = vmatpush1.bf16.msra.mxu0 %v1325
  %1747 = vmatprep.subr.bf16.mxu0 %v1322
  %1748 = vmatpush1.bf16.msra.mxu0 %v1321
  %1749 = vmatprep.subr.bf16.mxu0 %v1318
  %1750 = vmatpush1.bf16.msra.mxu0 %v1317
  %1751 = vmatprep.subr.bf16.mxu0 %v1314
  %1752 = vmatpush1.bf16.msra.mxu0 %v1313
  %1753 = vmatprep.subr.bf16.mxu0 %v1310
  %1754 = vmatpush1.bf16.msra.mxu0 %v1309
  %1755 = vmatprep.subr.bf16.mxu0 %v1306
  %1756 = vmatpush1.bf16.msra.mxu0 %v1305
  %1757 = vmatprep.subr.bf16.mxu0 %v1302
  %1758 = vmatpush1.bf16.msra.mxu0 %v1301
  %1759 = vmatprep.subr.bf16.mxu0 %v1298
  %1760 = vmatpush1.bf16.msra.mxu0 %v1297
  %1761 = vmatprep.subr.bf16.mxu0 %v1358
  %1762 = vmatpush2.bf16.msra.mxu0 %v1357
  %1763 = vmatprep.subr.bf16.mxu0 %v1354
  %1764 = vmatpush2.bf16.msra.mxu0 %v1353
  %1765 = vmatprep.subr.bf16.mxu0 %v1350
  %1766 = vmatpush2.bf16.msra.mxu0 %v1349
  %1767 = vmatprep.subr.bf16.mxu0 %v1346
  %1768 = vmatpush2.bf16.msra.mxu0 %v1345
  %1769 = vmatprep.subr.bf16.mxu0 %v1342
  %1770 = vmatpush2.bf16.msra.mxu0 %v1341
  %1771 = vmatprep.subr.bf16.mxu0 %v1338
  %1772 = vmatpush2.bf16.msra.mxu0 %v1337
  %1773 = vmatprep.subr.bf16.mxu0 %v1334
  %1774 = vmatpush2.bf16.msra.mxu0 %v1333
  %1775 = vmatprep.subr.bf16.mxu0 %v1330
  %1776 = vmatpush2.bf16.msra.mxu0 %v1329
  %1777 = vmatprep.mubr.bf16.mxu0 %v514
  %1778 = vmatmul.mubr.bf16.gmra.mxu0 %v513
  %v1779 = vpop.f32.mrf.mxu0
  %v1780 = vadd.f32 %v320, %v1779
  %v1781 = vpop.f32.mrf.mxu0
  %v1782 = vadd.f32 %v324, %v1781
  %v1783 = vpop.f32.mrf.mxu0
  %v1784 = vadd.f32 %v320, %v1783
  %v1785 = vpop.f32.mrf.mxu0
  %v1786 = vadd.f32 %v324, %v1785
  %1787 = vmatprep.mubr.bf16.mxu0 %v521
  %1788 = vmatmul.mubr.bf16.gmra.mxu0 %v520
  %v1789 = vpop.f32.mrf.mxu0
  %v1790 = vadd.f32 %v320, %v1789
  %v1791 = vpop.f32.mrf.mxu0
  %v1792 = vadd.f32 %v324, %v1791
  %v1793 = vpop.f32.mrf.mxu0
  %v1794 = vadd.f32 %v320, %v1793
  %v1795 = vpop.f32.mrf.mxu0
  %v1796 = vadd.f32 %v324, %v1795
  %1797 = vmatprep.mubr.bf16.mxu0 %v528
  %1798 = vmatmul.mubr.bf16.gmra.mxu0 %v527
  %v1799 = vpop.f32.mrf.mxu0
  %v1800 = vadd.f32 %v320, %v1799
  %v1801 = vpop.f32.mrf.mxu0
  %v1802 = vadd.f32 %v324, %v1801
  %v1803 = vpop.f32.mrf.mxu0
  %v1804 = vadd.f32 %v320, %v1803
  %v1805 = vpop.f32.mrf.mxu0
  %v1806 = vadd.f32 %v324, %v1805
  %1807 = vmatprep.mubr.bf16.mxu0 %v535
  %1808 = vmatmul.mubr.bf16.gmra.mxu0 %v534
  %v1809 = vpop.f32.mrf.mxu0
  %v1810 = vadd.f32 %v320, %v1809
  %v1811 = vpop.f32.mrf.mxu0
  %v1812 = vadd.f32 %v324, %v1811
  %v1813 = vpop.f32.mrf.mxu0
  %v1814 = vadd.f32 %v320, %v1813
  %v1815 = vpop.f32.mrf.mxu0
  %v1816 = vadd.f32 %v324, %v1815
  %1817 = vmatprep.mubr.bf16.mxu0 %v542
  %1818 = vmatmul.mubr.bf16.gmra.mxu0 %v541
  %v1819 = vpop.f32.mrf.mxu0
  %v1820 = vadd.f32 %v320, %v1819
  %v1821 = vpop.f32.mrf.mxu0
  %v1822 = vadd.f32 %v324, %v1821
  %v1823 = vpop.f32.mrf.mxu0
  %v1824 = vadd.f32 %v320, %v1823
  %v1825 = vpop.f32.mrf.mxu0
  %v1826 = vadd.f32 %v324, %v1825
  %1827 = vmatprep.mubr.bf16.mxu0 %v549
  %1828 = vmatmul.mubr.bf16.gmra.mxu0 %v548
  %v1829 = vpop.f32.mrf.mxu0
  %v1830 = vadd.f32 %v320, %v1829
  %v1831 = vpop.f32.mrf.mxu0
  %v1832 = vadd.f32 %v324, %v1831
  %v1833 = vpop.f32.mrf.mxu0
  %v1834 = vadd.f32 %v320, %v1833
  %v1835 = vpop.f32.mrf.mxu0
  %v1836 = vadd.f32 %v324, %v1835
  %1837 = vmatprep.mubr.bf16.mxu0 %v556
  %1838 = vmatmul.mubr.bf16.gmra.mxu0 %v555
  %v1839 = vpop.f32.mrf.mxu0
  %v1840 = vadd.f32 %v320, %v1839
  %v1841 = vpop.f32.mrf.mxu0
  %v1842 = vadd.f32 %v324, %v1841
  %v1843 = vpop.f32.mrf.mxu0
  %v1844 = vadd.f32 %v320, %v1843
  %v1845 = vpop.f32.mrf.mxu0
  %v1846 = vadd.f32 %v324, %v1845
  %1847 = vmatprep.mubr.bf16.mxu0 %v563
  %1848 = vmatmul.mubr.bf16.gmra.mxu0 %v562
  %v1849 = vpop.f32.mrf.mxu0
  %v1850 = vadd.f32 %v320, %v1849
  %v1851 = vpop.f32.mrf.mxu0
  %v1852 = vadd.f32 %v324, %v1851
  %v1853 = vpop.f32.mrf.mxu0
  %v1854 = vadd.f32 %v320, %v1853
  %v1855 = vpop.f32.mrf.mxu0
  %v1856 = vadd.f32 %v324, %v1855
  %1857 = vdwg.mxu0
  %1858 = vmatprep.subr.bf16.mxu0 %v1390
  %1859 = vmatpush1.bf16.msra.mxu0 %v1389
  %1860 = vmatprep.subr.bf16.mxu0 %v1386
  %1861 = vmatpush1.bf16.msra.mxu0 %v1385
  %1862 = vmatprep.subr.bf16.mxu0 %v1382
  %1863 = vmatpush1.bf16.msra.mxu0 %v1381
  %1864 = vmatprep.subr.bf16.mxu0 %v1378
  %1865 = vmatpush1.bf16.msra.mxu0 %v1377
  %1866 = vmatprep.subr.bf16.mxu0 %v1374
  %1867 = vmatpush1.bf16.msra.mxu0 %v1373
  %1868 = vmatprep.subr.bf16.mxu0 %v1370
  %1869 = vmatpush1.bf16.msra.mxu0 %v1369
  %1870 = vmatprep.subr.bf16.mxu0 %v1366
  %1871 = vmatpush1.bf16.msra.mxu0 %v1365
  %1872 = vmatprep.subr.bf16.mxu0 %v1362
  %1873 = vmatpush1.bf16.msra.mxu0 %v1361
  %1874 = vmatprep.subr.bf16.mxu0 %v1422
  %1875 = vmatpush2.bf16.msra.mxu0 %v1421
  %1876 = vmatprep.subr.bf16.mxu0 %v1418
  %1877 = vmatpush2.bf16.msra.mxu0 %v1417
  %1878 = vmatprep.subr.bf16.mxu0 %v1414
  %1879 = vmatpush2.bf16.msra.mxu0 %v1413
  %1880 = vmatprep.subr.bf16.mxu0 %v1410
  %1881 = vmatpush2.bf16.msra.mxu0 %v1409
  %1882 = vmatprep.subr.bf16.mxu0 %v1406
  %1883 = vmatpush2.bf16.msra.mxu0 %v1405
  %1884 = vmatprep.subr.bf16.mxu0 %v1402
  %1885 = vmatpush2.bf16.msra.mxu0 %v1401
  %1886 = vmatprep.subr.bf16.mxu0 %v1398
  %1887 = vmatpush2.bf16.msra.mxu0 %v1397
  %1888 = vmatprep.subr.bf16.mxu0 %v1394
  %1889 = vmatpush2.bf16.msra.mxu0 %v1393
  %1890 = vmatprep.mubr.bf16.mxu0 %v516
  %1891 = vmatmul.mubr.bf16.gmra.mxu0 %v515
  %v1892 = vpop.f32.mrf.mxu0
  %v1893 = vadd.f32 %v1780, %v1892
  %v1894 = vpop.f32.mrf.mxu0
  %v1895 = vadd.f32 %v1782, %v1894
  %v1896 = vpop.f32.mrf.mxu0
  %v1897 = vadd.f32 %v1784, %v1896
  %v1898 = vpop.f32.mrf.mxu0
  %v1899 = vadd.f32 %v1786, %v1898
  %1900 = vmatprep.mubr.bf16.mxu0 %v523
  %1901 = vmatmul.mubr.bf16.gmra.mxu0 %v522
  %v1902 = vpop.f32.mrf.mxu0
  %v1903 = vadd.f32 %v1790, %v1902
  %v1904 = vpop.f32.mrf.mxu0
  %v1905 = vadd.f32 %v1792, %v1904
  %v1906 = vpop.f32.mrf.mxu0
  %v1907 = vadd.f32 %v1794, %v1906
  %v1908 = vpop.f32.mrf.mxu0
  %v1909 = vadd.f32 %v1796, %v1908
  %1910 = vmatprep.mubr.bf16.mxu0 %v530
  %1911 = vmatmul.mubr.bf16.gmra.mxu0 %v529
  %v1912 = vpop.f32.mrf.mxu0
  %v1913 = vadd.f32 %v1800, %v1912
  %v1914 = vpop.f32.mrf.mxu0
  %v1915 = vadd.f32 %v1802, %v1914
  %v1916 = vpop.f32.mrf.mxu0
  %v1917 = vadd.f32 %v1804, %v1916
  %v1918 = vpop.f32.mrf.mxu0
  %v1919 = vadd.f32 %v1806, %v1918
  %1920 = vmatprep.mubr.bf16.mxu0 %v537
  %1921 = vmatmul.mubr.bf16.gmra.mxu0 %v536
  %v1922 = vpop.f32.mrf.mxu0
  %v1923 = vadd.f32 %v1810, %v1922
  %v1924 = vpop.f32.mrf.mxu0
  %v1925 = vadd.f32 %v1812, %v1924
  %v1926 = vpop.f32.mrf.mxu0
  %v1927 = vadd.f32 %v1814, %v1926
  %v1928 = vpop.f32.mrf.mxu0
  %v1929 = vadd.f32 %v1816, %v1928
  %1930 = vmatprep.mubr.bf16.mxu0 %v544
  %1931 = vmatmul.mubr.bf16.gmra.mxu0 %v543
  %v1932 = vpop.f32.mrf.mxu0
  %v1933 = vadd.f32 %v1820, %v1932
  %v1934 = vpop.f32.mrf.mxu0
  %v1935 = vadd.f32 %v1822, %v1934
  %v1936 = vpop.f32.mrf.mxu0
  %v1937 = vadd.f32 %v1824, %v1936
  %v1938 = vpop.f32.mrf.mxu0
  %v1939 = vadd.f32 %v1826, %v1938
  %1940 = vmatprep.mubr.bf16.mxu0 %v551
  %1941 = vmatmul.mubr.bf16.gmra.mxu0 %v550
  %v1942 = vpop.f32.mrf.mxu0
  %v1943 = vadd.f32 %v1830, %v1942
  %v1944 = vpop.f32.mrf.mxu0
  %v1945 = vadd.f32 %v1832, %v1944
  %v1946 = vpop.f32.mrf.mxu0
  %v1947 = vadd.f32 %v1834, %v1946
  %v1948 = vpop.f32.mrf.mxu0
  %v1949 = vadd.f32 %v1836, %v1948
  %1950 = vmatprep.mubr.bf16.mxu0 %v558
  %1951 = vmatmul.mubr.bf16.gmra.mxu0 %v557
  %v1952 = vpop.f32.mrf.mxu0
  %v1953 = vadd.f32 %v1840, %v1952
  %v1954 = vpop.f32.mrf.mxu0
  %v1955 = vadd.f32 %v1842, %v1954
  %v1956 = vpop.f32.mrf.mxu0
  %v1957 = vadd.f32 %v1844, %v1956
  %v1958 = vpop.f32.mrf.mxu0
  %v1959 = vadd.f32 %v1846, %v1958
  %1960 = vmatprep.mubr.bf16.mxu0 %v565
  %1961 = vmatmul.mubr.bf16.gmra.mxu0 %v564
  %v1962 = vpop.f32.mrf.mxu0
  %v1963 = vadd.f32 %v1850, %v1962
  %v1964 = vpop.f32.mrf.mxu0
  %v1965 = vadd.f32 %v1852, %v1964
  %v1966 = vpop.f32.mrf.mxu0
  %v1967 = vadd.f32 %v1854, %v1966
  %v1968 = vpop.f32.mrf.mxu0
  %v1969 = vadd.f32 %v1856, %v1968
  %1970 = vdwg.mxu0
  %1971 = vmatprep.subr.bf16.mxu0 %v1454
  %1972 = vmatpush1.bf16.msra.mxu0 %v1453
  %1973 = vmatprep.subr.bf16.mxu0 %v1450
  %1974 = vmatpush1.bf16.msra.mxu0 %v1449
  %1975 = vmatprep.subr.bf16.mxu0 %v1446
  %1976 = vmatpush1.bf16.msra.mxu0 %v1445
  %1977 = vmatprep.subr.bf16.mxu0 %v1442
  %1978 = vmatpush1.bf16.msra.mxu0 %v1441
  %1979 = vmatprep.subr.bf16.mxu0 %v1438
  %1980 = vmatpush1.bf16.msra.mxu0 %v1437
  %1981 = vmatprep.subr.bf16.mxu0 %v1434
  %1982 = vmatpush1.bf16.msra.mxu0 %v1433
  %1983 = vmatprep.subr.bf16.mxu0 %v1430
  %1984 = vmatpush1.bf16.msra.mxu0 %v1429
  %1985 = vmatprep.subr.bf16.mxu0 %v1426
  %1986 = vmatpush1.bf16.msra.mxu0 %v1425
  %1987 = vmatprep.subr.bf16.mxu0 %v1486
  %1988 = vmatpush2.bf16.msra.mxu0 %v1485
  %1989 = vmatprep.subr.bf16.mxu0 %v1482
  %1990 = vmatpush2.bf16.msra.mxu0 %v1481
  %1991 = vmatprep.subr.bf16.mxu0 %v1478
  %1992 = vmatpush2.bf16.msra.mxu0 %v1477
  %1993 = vmatprep.subr.bf16.mxu0 %v1474
  %1994 = vmatpush2.bf16.msra.mxu0 %v1473
  %1995 = vmatprep.subr.bf16.mxu0 %v1470
  %1996 = vmatpush2.bf16.msra.mxu0 %v1469
  %1997 = vmatprep.subr.bf16.mxu0 %v1466
  %1998 = vmatpush2.bf16.msra.mxu0 %v1465
  %1999 = vmatprep.subr.bf16.mxu0 %v1462
  %2000 = vmatpush2.bf16.msra.mxu0 %v1461
  %2001 = vmatprep.subr.bf16.mxu0 %v1458
  %2002 = vmatpush2.bf16.msra.mxu0 %v1457
  %2003 = vmatprep.mubr.bf16.mxu0 %v518
  %2004 = vmatmul.mubr.bf16.gmra.mxu0 %v517
  %v2005 = vpop.f32.mrf.mxu0
  %v2006 = vadd.f32 %v1893, %v2005
  %v2007 = vpop.f32.mrf.mxu0
  %v2008 = vadd.f32 %v1895, %v2007
  %v2009 = vpop.f32.mrf.mxu0
  %v2010 = vadd.f32 %v1897, %v2009
  %v2011 = vpop.f32.mrf.mxu0
  %v2012 = vadd.f32 %v1899, %v2011
  %2013 = vmatprep.mubr.bf16.mxu0 %v525
  %2014 = vmatmul.mubr.bf16.gmra.mxu0 %v524
  %v2015 = vpop.f32.mrf.mxu0
  %v2016 = vadd.f32 %v1903, %v2015
  %v2017 = vpop.f32.mrf.mxu0
  %v2018 = vadd.f32 %v1905, %v2017
  %v2019 = vpop.f32.mrf.mxu0
  %v2020 = vadd.f32 %v1907, %v2019
  %v2021 = vpop.f32.mrf.mxu0
  %v2022 = vadd.f32 %v1909, %v2021
  %2023 = vmatprep.mubr.bf16.mxu0 %v532
  %2024 = vmatmul.mubr.bf16.gmra.mxu0 %v531
  %v2025 = vpop.f32.mrf.mxu0
  %v2026 = vadd.f32 %v1913, %v2025
  %v2027 = vpop.f32.mrf.mxu0
  %v2028 = vadd.f32 %v1915, %v2027
  %v2029 = vpop.f32.mrf.mxu0
  %v2030 = vadd.f32 %v1917, %v2029
  %v2031 = vpop.f32.mrf.mxu0
  %v2032 = vadd.f32 %v1919, %v2031
  %2033 = vmatprep.mubr.bf16.mxu0 %v539
  %2034 = vmatmul.mubr.bf16.gmra.mxu0 %v538
  %v2035 = vpop.f32.mrf.mxu0
  %v2036 = vadd.f32 %v1923, %v2035
  %v2037 = vpop.f32.mrf.mxu0
  %v2038 = vadd.f32 %v1925, %v2037
  %v2039 = vpop.f32.mrf.mxu0
  %v2040 = vadd.f32 %v1927, %v2039
  %v2041 = vpop.f32.mrf.mxu0
  %v2042 = vadd.f32 %v1929, %v2041
  %2043 = vmatprep.mubr.bf16.mxu0 %v546
  %2044 = vmatmul.mubr.bf16.gmra.mxu0 %v545
  %v2045 = vpop.f32.mrf.mxu0
  %v2046 = vadd.f32 %v1933, %v2045
  %v2047 = vpop.f32.mrf.mxu0
  %v2048 = vadd.f32 %v1935, %v2047
  %v2049 = vpop.f32.mrf.mxu0
  %v2050 = vadd.f32 %v1937, %v2049
  %v2051 = vpop.f32.mrf.mxu0
  %v2052 = vadd.f32 %v1939, %v2051
  %2053 = vmatprep.mubr.bf16.mxu0 %v553
  %2054 = vmatmul.mubr.bf16.gmra.mxu0 %v552
  %v2055 = vpop.f32.mrf.mxu0
  %v2056 = vadd.f32 %v1943, %v2055
  %v2057 = vpop.f32.mrf.mxu0
  %v2058 = vadd.f32 %v1945, %v2057
  %v2059 = vpop.f32.mrf.mxu0
  %v2060 = vadd.f32 %v1947, %v2059
  %v2061 = vpop.f32.mrf.mxu0
  %v2062 = vadd.f32 %v1949, %v2061
  %2063 = vmatprep.mubr.bf16.mxu0 %v560
  %2064 = vmatmul.mubr.bf16.gmra.mxu0 %v559
  %v2065 = vpop.f32.mrf.mxu0
  %v2066 = vadd.f32 %v1953, %v2065
  %v2067 = vpop.f32.mrf.mxu0
  %v2068 = vadd.f32 %v1955, %v2067
  %v2069 = vpop.f32.mrf.mxu0
  %v2070 = vadd.f32 %v1957, %v2069
  %v2071 = vpop.f32.mrf.mxu0
  %v2072 = vadd.f32 %v1959, %v2071
  %2073 = vmatprep.mubr.bf16.mxu0 %v567
  %2074 = vmatmul.mubr.bf16.gmra.mxu0 %v566
  %v2075 = vpop.f32.mrf.mxu0
  %v2076 = vadd.f32 %v1963, %v2075
  %v2077 = vpop.f32.mrf.mxu0
  %v2078 = vadd.f32 %v1965, %v2077
  %v2079 = vpop.f32.mrf.mxu0
  %v2080 = vadd.f32 %v1967, %v2079
  %v2081 = vpop.f32.mrf.mxu0
  %v2082 = vadd.f32 %v1969, %v2081
  %2083 = vdwg.mxu0
  %2084 = vmatprep.subr.bf16.mxu0 %v1518
  %2085 = vmatpush1.bf16.msra.mxu0 %v1517
  %2086 = vmatprep.subr.bf16.mxu0 %v1514
  %2087 = vmatpush1.bf16.msra.mxu0 %v1513
  %2088 = vmatprep.subr.bf16.mxu0 %v1510
  %2089 = vmatpush1.bf16.msra.mxu0 %v1509
  %2090 = vmatprep.subr.bf16.mxu0 %v1506
  %2091 = vmatpush1.bf16.msra.mxu0 %v1505
  %2092 = vmatprep.subr.bf16.mxu0 %v1502
  %2093 = vmatpush1.bf16.msra.mxu0 %v1501
  %2094 = vmatprep.subr.bf16.mxu0 %v1498
  %2095 = vmatpush1.bf16.msra.mxu0 %v1497
  %2096 = vmatprep.subr.bf16.mxu0 %v1494
  %2097 = vmatpush1.bf16.msra.mxu0 %v1493
  %2098 = vmatprep.subr.bf16.mxu0 %v1490
  %2099 = vmatpush1.bf16.msra.mxu0 %v1489
  %2100 = vmatprep.subr.bf16.mxu0 0
  %2101 = vmatpush2.bf16.msra.mxu0 0
  %2102 = vmatprep.subr.bf16.mxu0 0
  %2103 = vmatpush2.bf16.msra.mxu0 0
  %2104 = vmatprep.subr.bf16.mxu0 0
  %2105 = vmatpush2.bf16.msra.mxu0 0
  %2106 = vmatprep.subr.bf16.mxu0 0
  %2107 = vmatpush2.bf16.msra.mxu0 0
  %2108 = vmatprep.subr.bf16.mxu0 0
  %2109 = vmatpush2.bf16.msra.mxu0 0
  %2110 = vmatprep.subr.bf16.mxu0 0
  %2111 = vmatpush2.bf16.msra.mxu0 0
  %2112 = vmatprep.subr.bf16.mxu0 0
  %2113 = vmatpush2.bf16.msra.mxu0 0
  %2114 = vmatprep.subr.bf16.mxu0 0
  %2115 = vmatpush2.bf16.msra.mxu0 0
  %2116 = vmatprep.mubr.bf16.mxu0 0
  %2117 = vmatmul.mubr.bf16.gmra.mxu0 %v519
  %v2118 = vpop.f32.mrf.mxu0
  %v2119 = vadd.f32 %v2006, %v2118
  %v2120 = vpop.f32.mrf.mxu0
  %v2121 = vadd.f32 %v2008, %v2120
  %v2122 = vpop.f32.mrf.mxu0
  %v2123 = vadd.f32 %v2010, %v2122
  %v2124 = vpop.f32.mrf.mxu0
  %v2125 = vadd.f32 %v2012, %v2124
  %2126 = vmatprep.mubr.bf16.mxu0 0
  %2127 = vmatmul.mubr.bf16.gmra.mxu0 %v526
  %v2128 = vpop.f32.mrf.mxu0
  %v2129 = vadd.f32 %v2016, %v2128
  %v2130 = vpop.f32.mrf.mxu0
  %v2131 = vadd.f32 %v2018, %v2130
  %v2132 = vpop.f32.mrf.mxu0
  %v2133 = vadd.f32 %v2020, %v2132
  %v2134 = vpop.f32.mrf.mxu0
  %v2135 = vadd.f32 %v2022, %v2134
  %2136 = vmatprep.mubr.bf16.mxu0 0
  %2137 = vmatmul.mubr.bf16.gmra.mxu0 %v533
  %v2138 = vpop.f32.mrf.mxu0
  %v2139 = vadd.f32 %v2026, %v2138
  %v2140 = vpop.f32.mrf.mxu0
  %v2141 = vadd.f32 %v2028, %v2140
  %v2142 = vpop.f32.mrf.mxu0
  %v2143 = vadd.f32 %v2030, %v2142
  %v2144 = vpop.f32.mrf.mxu0
  %v2145 = vadd.f32 %v2032, %v2144
  %2146 = vmatprep.mubr.bf16.mxu0 0
  %2147 = vmatmul.mubr.bf16.gmra.mxu0 %v540
  %v2148 = vpop.f32.mrf.mxu0
  %v2149 = vadd.f32 %v2036, %v2148
  %v2150 = vpop.f32.mrf.mxu0
  %v2151 = vadd.f32 %v2038, %v2150
  %v2152 = vpop.f32.mrf.mxu0
  %v2153 = vadd.f32 %v2040, %v2152
  %v2154 = vpop.f32.mrf.mxu0
  %v2155 = vadd.f32 %v2042, %v2154
  %2156 = vmatprep.mubr.bf16.mxu0 0
  %2157 = vmatmul.mubr.bf16.gmra.mxu0 %v547
  %v2158 = vpop.f32.mrf.mxu0
  %v2159 = vadd.f32 %v2046, %v2158
  %v2160 = vpop.f32.mrf.mxu0
  %v2161 = vadd.f32 %v2048, %v2160
  %v2162 = vpop.f32.mrf.mxu0
  %v2163 = vadd.f32 %v2050, %v2162
  %v2164 = vpop.f32.mrf.mxu0
  %v2165 = vadd.f32 %v2052, %v2164
  %2166 = vmatprep.mubr.bf16.mxu0 0
  %2167 = vmatmul.mubr.bf16.gmra.mxu0 %v554
  %v2168 = vpop.f32.mrf.mxu0
  %v2169 = vadd.f32 %v2056, %v2168
  %v2170 = vpop.f32.mrf.mxu0
  %v2171 = vadd.f32 %v2058, %v2170
  %v2172 = vpop.f32.mrf.mxu0
  %v2173 = vadd.f32 %v2060, %v2172
  %v2174 = vpop.f32.mrf.mxu0
  %v2175 = vadd.f32 %v2062, %v2174
  %2176 = vmatprep.mubr.bf16.mxu0 0
  %2177 = vmatmul.mubr.bf16.gmra.mxu0 %v561
  %v2178 = vpop.f32.mrf.mxu0
  %v2179 = vadd.f32 %v2066, %v2178
  %v2180 = vpop.f32.mrf.mxu0
  %v2181 = vadd.f32 %v2068, %v2180
  %v2182 = vpop.f32.mrf.mxu0
  %v2183 = vadd.f32 %v2070, %v2182
  %v2184 = vpop.f32.mrf.mxu0
  %v2185 = vadd.f32 %v2072, %v2184
  %2186 = vmatprep.mubr.bf16.mxu0 0
  %2187 = vmatmul.mubr.bf16.gmra.mxu0 %v568
  %v2188 = vpop.f32.mrf.mxu0
  %v2189 = vadd.f32 %v2076, %v2188
  %v2190 = vpop.f32.mrf.mxu0
  %v2191 = vadd.f32 %v2078, %v2190
  %v2192 = vpop.f32.mrf.mxu0
  %v2193 = vadd.f32 %v2080, %v2192
  %v2194 = vpop.f32.mrf.mxu0
  %v2195 = vadd.f32 %v2082, %v2194
  %2196 = vdwg.mxu0
  %2197 = vmatprep.subr.bf16.mxu0 %v1328
  %2198 = vmatpush1.bf16.msra.mxu0 %v1327
  %2199 = vmatprep.subr.bf16.mxu0 %v1324
  %2200 = vmatpush1.bf16.msra.mxu0 %v1323
  %2201 = vmatprep.subr.bf16.mxu0 %v1320
  %2202 = vmatpush1.bf16.msra.mxu0 %v1319
  %2203 = vmatprep.subr.bf16.mxu0 %v1316
  %2204 = vmatpush1.bf16.msra.mxu0 %v1315
  %2205 = vmatprep.subr.bf16.mxu0 %v1312
  %2206 = vmatpush1.bf16.msra.mxu0 %v1311
  %2207 = vmatprep.subr.bf16.mxu0 %v1308
  %2208 = vmatpush1.bf16.msra.mxu0 %v1307
  %2209 = vmatprep.subr.bf16.mxu0 %v1304
  %2210 = vmatpush1.bf16.msra.mxu0 %v1303
  %2211 = vmatprep.subr.bf16.mxu0 %v1300
  %2212 = vmatpush1.bf16.msra.mxu0 %v1299
  %2213 = vmatprep.subr.bf16.mxu0 %v1360
  %2214 = vmatpush2.bf16.msra.mxu0 %v1359
  %2215 = vmatprep.subr.bf16.mxu0 %v1356
  %2216 = vmatpush2.bf16.msra.mxu0 %v1355
  %2217 = vmatprep.subr.bf16.mxu0 %v1352
  %2218 = vmatpush2.bf16.msra.mxu0 %v1351
  %2219 = vmatprep.subr.bf16.mxu0 %v1348
  %2220 = vmatpush2.bf16.msra.mxu0 %v1347
  %2221 = vmatprep.subr.bf16.mxu0 %v1344
  %2222 = vmatpush2.bf16.msra.mxu0 %v1343
  %2223 = vmatprep.subr.bf16.mxu0 %v1340
  %2224 = vmatpush2.bf16.msra.mxu0 %v1339
  %2225 = vmatprep.subr.bf16.mxu0 %v1336
  %2226 = vmatpush2.bf16.msra.mxu0 %v1335
  %2227 = vmatprep.subr.bf16.mxu0 %v1332
  %2228 = vmatpush2.bf16.msra.mxu0 %v1331
  %2229 = vmatprep.mubr.bf16.mxu0 %v514
  %2230 = vmatmul.mubr.bf16.gmra.mxu0 %v513
  %v2231 = vpop.f32.mrf.mxu0
  %v2232 = vadd.f32 %v328, %v2231
  %v2233 = vpop.f32.mrf.mxu0
  %v2234 = vadd.f32 %v332, %v2233
  %v2235 = vpop.f32.mrf.mxu0
  %v2236 = vadd.f32 %v328, %v2235
  %v2237 = vpop.f32.mrf.mxu0
  %v2238 = vadd.f32 %v332, %v2237
  %2239 = vmatprep.mubr.bf16.mxu0 %v521
  %2240 = vmatmul.mubr.bf16.gmra.mxu0 %v520
  %v2241 = vpop.f32.mrf.mxu0
  %v2242 = vadd.f32 %v328, %v2241
  %v2243 = vpop.f32.mrf.mxu0
  %v2244 = vadd.f32 %v332, %v2243
  %v2245 = vpop.f32.mrf.mxu0
  %v2246 = vadd.f32 %v328, %v2245
  %v2247 = vpop.f32.mrf.mxu0
  %v2248 = vadd.f32 %v332, %v2247
  %2249 = vmatprep.mubr.bf16.mxu0 %v528
  %2250 = vmatmul.mubr.bf16.gmra.mxu0 %v527
  %v2251 = vpop.f32.mrf.mxu0
  %v2252 = vadd.f32 %v328, %v2251
  %v2253 = vpop.f32.mrf.mxu0
  %v2254 = vadd.f32 %v332, %v2253
  %v2255 = vpop.f32.mrf.mxu0
  %v2256 = vadd.f32 %v328, %v2255
  %v2257 = vpop.f32.mrf.mxu0
  %v2258 = vadd.f32 %v332, %v2257
  %2259 = vmatprep.mubr.bf16.mxu0 %v535
  %2260 = vmatmul.mubr.bf16.gmra.mxu0 %v534
  %v2261 = vpop.f32.mrf.mxu0
  %v2262 = vadd.f32 %v328, %v2261
  %v2263 = vpop.f32.mrf.mxu0
  %v2264 = vadd.f32 %v332, %v2263
  %v2265 = vpop.f32.mrf.mxu0
  %v2266 = vadd.f32 %v328, %v2265
  %v2267 = vpop.f32.mrf.mxu0
  %v2268 = vadd.f32 %v332, %v2267
  %2269 = vmatprep.mubr.bf16.mxu0 %v542
  %2270 = vmatmul.mubr.bf16.gmra.mxu0 %v541
  %v2271 = vpop.f32.mrf.mxu0
  %v2272 = vadd.f32 %v328, %v2271
  %v2273 = vpop.f32.mrf.mxu0
  %v2274 = vadd.f32 %v332, %v2273
  %v2275 = vpop.f32.mrf.mxu0
  %v2276 = vadd.f32 %v328, %v2275
  %v2277 = vpop.f32.mrf.mxu0
  %v2278 = vadd.f32 %v332, %v2277
  %2279 = vmatprep.mubr.bf16.mxu0 %v549
  %2280 = vmatmul.mubr.bf16.gmra.mxu0 %v548
  %v2281 = vpop.f32.mrf.mxu0
  %v2282 = vadd.f32 %v328, %v2281
  %v2283 = vpop.f32.mrf.mxu0
  %v2284 = vadd.f32 %v332, %v2283
  %v2285 = vpop.f32.mrf.mxu0
  %v2286 = vadd.f32 %v328, %v2285
  %v2287 = vpop.f32.mrf.mxu0
  %v2288 = vadd.f32 %v332, %v2287
  %2289 = vmatprep.mubr.bf16.mxu0 %v556
  %2290 = vmatmul.mubr.bf16.gmra.mxu0 %v555
  %v2291 = vpop.f32.mrf.mxu0
  %v2292 = vadd.f32 %v328, %v2291
  %v2293 = vpop.f32.mrf.mxu0
  %v2294 = vadd.f32 %v332, %v2293
  %v2295 = vpop.f32.mrf.mxu0
  %v2296 = vadd.f32 %v328, %v2295
  %v2297 = vpop.f32.mrf.mxu0
  %v2298 = vadd.f32 %v332, %v2297
  %2299 = vmatprep.mubr.bf16.mxu0 %v563
  %2300 = vmatmul.mubr.bf16.gmra.mxu0 %v562
  %v2301 = vpop.f32.mrf.mxu0
  %v2302 = vadd.f32 %v328, %v2301
  %v2303 = vpop.f32.mrf.mxu0
  %v2304 = vadd.f32 %v332, %v2303
  %v2305 = vpop.f32.mrf.mxu0
  %v2306 = vadd.f32 %v328, %v2305
  %v2307 = vpop.f32.mrf.mxu0
  %v2308 = vadd.f32 %v332, %v2307
  %2309 = vdwg.mxu0
  %2310 = vmatprep.subr.bf16.mxu0 %v1392
  %2311 = vmatpush1.bf16.msra.mxu0 %v1391
  %2312 = vmatprep.subr.bf16.mxu0 %v1388
  %2313 = vmatpush1.bf16.msra.mxu0 %v1387
  %2314 = vmatprep.subr.bf16.mxu0 %v1384
  %2315 = vmatpush1.bf16.msra.mxu0 %v1383
  %2316 = vmatprep.subr.bf16.mxu0 %v1380
  %2317 = vmatpush1.bf16.msra.mxu0 %v1379
  %2318 = vmatprep.subr.bf16.mxu0 %v1376
  %2319 = vmatpush1.bf16.msra.mxu0 %v1375
  %2320 = vmatprep.subr.bf16.mxu0 %v1372
  %2321 = vmatpush1.bf16.msra.mxu0 %v1371
  %2322 = vmatprep.subr.bf16.mxu0 %v1368
  %2323 = vmatpush1.bf16.msra.mxu0 %v1367
  %2324 = vmatprep.subr.bf16.mxu0 %v1364
  %2325 = vmatpush1.bf16.msra.mxu0 %v1363
  %2326 = vmatprep.subr.bf16.mxu0 %v1424
  %2327 = vmatpush2.bf16.msra.mxu0 %v1423
  %2328 = vmatprep.subr.bf16.mxu0 %v1420
  %2329 = vmatpush2.bf16.msra.mxu0 %v1419
  %2330 = vmatprep.subr.bf16.mxu0 %v1416
  %2331 = vmatpush2.bf16.msra.mxu0 %v1415
  %2332 = vmatprep.subr.bf16.mxu0 %v1412
  %2333 = vmatpush2.bf16.msra.mxu0 %v1411
  %2334 = vmatprep.subr.bf16.mxu0 %v1408
  %2335 = vmatpush2.bf16.msra.mxu0 %v1407
  %2336 = vmatprep.subr.bf16.mxu0 %v1404
  %2337 = vmatpush2.bf16.msra.mxu0 %v1403
  %2338 = vmatprep.subr.bf16.mxu0 %v1400
  %2339 = vmatpush2.bf16.msra.mxu0 %v1399
  %2340 = vmatprep.subr.bf16.mxu0 %v1396
  %2341 = vmatpush2.bf16.msra.mxu0 %v1395
  %2342 = vmatprep.mubr.bf16.mxu0 %v516
  %2343 = vmatmul.mubr.bf16.gmra.mxu0 %v515
  %v2344 = vpop.f32.mrf.mxu0
  %v2345 = vadd.f32 %v2232, %v2344
  %v2346 = vpop.f32.mrf.mxu0
  %v2347 = vadd.f32 %v2234, %v2346
  %v2348 = vpop.f32.mrf.mxu0
  %v2349 = vadd.f32 %v2236, %v2348
  %v2350 = vpop.f32.mrf.mxu0
  %v2351 = vadd.f32 %v2238, %v2350
  %2352 = vmatprep.mubr.bf16.mxu0 %v523
  %2353 = vmatmul.mubr.bf16.gmra.mxu0 %v522
  %v2354 = vpop.f32.mrf.mxu0
  %v2355 = vadd.f32 %v2242, %v2354
  %v2356 = vpop.f32.mrf.mxu0
  %v2357 = vadd.f32 %v2244, %v2356
  %v2358 = vpop.f32.mrf.mxu0
  %v2359 = vadd.f32 %v2246, %v2358
  %v2360 = vpop.f32.mrf.mxu0
  %v2361 = vadd.f32 %v2248, %v2360
  %2362 = vmatprep.mubr.bf16.mxu0 %v530
  %2363 = vmatmul.mubr.bf16.gmra.mxu0 %v529
  %v2364 = vpop.f32.mrf.mxu0
  %v2365 = vadd.f32 %v2252, %v2364
  %v2366 = vpop.f32.mrf.mxu0
  %v2367 = vadd.f32 %v2254, %v2366
  %v2368 = vpop.f32.mrf.mxu0
  %v2369 = vadd.f32 %v2256, %v2368
  %v2370 = vpop.f32.mrf.mxu0
  %v2371 = vadd.f32 %v2258, %v2370
  %2372 = vmatprep.mubr.bf16.mxu0 %v537
  %2373 = vmatmul.mubr.bf16.gmra.mxu0 %v536
  %v2374 = vpop.f32.mrf.mxu0
  %v2375 = vadd.f32 %v2262, %v2374
  %v2376 = vpop.f32.mrf.mxu0
  %v2377 = vadd.f32 %v2264, %v2376
  %v2378 = vpop.f32.mrf.mxu0
  %v2379 = vadd.f32 %v2266, %v2378
  %v2380 = vpop.f32.mrf.mxu0
  %v2381 = vadd.f32 %v2268, %v2380
  %2382 = vmatprep.mubr.bf16.mxu0 %v544
  %2383 = vmatmul.mubr.bf16.gmra.mxu0 %v543
  %v2384 = vpop.f32.mrf.mxu0
  %v2385 = vadd.f32 %v2272, %v2384
  %v2386 = vpop.f32.mrf.mxu0
  %v2387 = vadd.f32 %v2274, %v2386
  %v2388 = vpop.f32.mrf.mxu0
  %v2389 = vadd.f32 %v2276, %v2388
  %v2390 = vpop.f32.mrf.mxu0
  %v2391 = vadd.f32 %v2278, %v2390
  %2392 = vmatprep.mubr.bf16.mxu0 %v551
  %2393 = vmatmul.mubr.bf16.gmra.mxu0 %v550
  %v2394 = vpop.f32.mrf.mxu0
  %v2395 = vadd.f32 %v2282, %v2394
  %v2396 = vpop.f32.mrf.mxu0
  %v2397 = vadd.f32 %v2284, %v2396
  %v2398 = vpop.f32.mrf.mxu0
  %v2399 = vadd.f32 %v2286, %v2398
  %v2400 = vpop.f32.mrf.mxu0
  %v2401 = vadd.f32 %v2288, %v2400
  %2402 = vmatprep.mubr.bf16.mxu0 %v558
  %2403 = vmatmul.mubr.bf16.gmra.mxu0 %v557
  %v2404 = vpop.f32.mrf.mxu0
  %v2405 = vadd.f32 %v2292, %v2404
  %v2406 = vpop.f32.mrf.mxu0
  %v2407 = vadd.f32 %v2294, %v2406
  %v2408 = vpop.f32.mrf.mxu0
  %v2409 = vadd.f32 %v2296, %v2408
  %v2410 = vpop.f32.mrf.mxu0
  %v2411 = vadd.f32 %v2298, %v2410
  %2412 = vmatprep.mubr.bf16.mxu0 %v565
  %2413 = vmatmul.mubr.bf16.gmra.mxu0 %v564
  %v2414 = vpop.f32.mrf.mxu0
  %v2415 = vadd.f32 %v2302, %v2414
  %v2416 = vpop.f32.mrf.mxu0
  %v2417 = vadd.f32 %v2304, %v2416
  %v2418 = vpop.f32.mrf.mxu0
  %v2419 = vadd.f32 %v2306, %v2418
  %v2420 = vpop.f32.mrf.mxu0
  %v2421 = vadd.f32 %v2308, %v2420
  %2422 = vdwg.mxu0
  %2423 = vmatprep.subr.bf16.mxu0 %v1456
  %2424 = vmatpush1.bf16.msra.mxu0 %v1455
  %2425 = vmatprep.subr.bf16.mxu0 %v1452
  %2426 = vmatpush1.bf16.msra.mxu0 %v1451
  %2427 = vmatprep.subr.bf16.mxu0 %v1448
  %2428 = vmatpush1.bf16.msra.mxu0 %v1447
  %2429 = vmatprep.subr.bf16.mxu0 %v1444
  %2430 = vmatpush1.bf16.msra.mxu0 %v1443
  %2431 = vmatprep.subr.bf16.mxu0 %v1440
  %2432 = vmatpush1.bf16.msra.mxu0 %v1439
  %2433 = vmatprep.subr.bf16.mxu0 %v1436
  %2434 = vmatpush1.bf16.msra.mxu0 %v1435
  %2435 = vmatprep.subr.bf16.mxu0 %v1432
  %2436 = vmatpush1.bf16.msra.mxu0 %v1431
  %2437 = vmatprep.subr.bf16.mxu0 %v1428
  %2438 = vmatpush1.bf16.msra.mxu0 %v1427
  %2439 = vmatprep.subr.bf16.mxu0 %v1488
  %2440 = vmatpush2.bf16.msra.mxu0 %v1487
  %2441 = vmatprep.subr.bf16.mxu0 %v1484
  %2442 = vmatpush2.bf16.msra.mxu0 %v1483
  %2443 = vmatprep.subr.bf16.mxu0 %v1480
  %2444 = vmatpush2.bf16.msra.mxu0 %v1479
  %2445 = vmatprep.subr.bf16.mxu0 %v1476
  %2446 = vmatpush2.bf16.msra.mxu0 %v1475
  %2447 = vmatprep.subr.bf16.mxu0 %v1472
  %2448 = vmatpush2.bf16.msra.mxu0 %v1471
  %2449 = vmatprep.subr.bf16.mxu0 %v1468
  %2450 = vmatpush2.bf16.msra.mxu0 %v1467
  %2451 = vmatprep.subr.bf16.mxu0 %v1464
  %2452 = vmatpush2.bf16.msra.mxu0 %v1463
  %2453 = vmatprep.subr.bf16.mxu0 %v1460
  %2454 = vmatpush2.bf16.msra.mxu0 %v1459
  %2455 = vmatprep.mubr.bf16.mxu0 %v518
  %2456 = vmatmul.mubr.bf16.gmra.mxu0 %v517
  %v2457 = vpop.f32.mrf.mxu0
  %v2458 = vadd.f32 %v2345, %v2457
  %v2459 = vpop.f32.mrf.mxu0
  %v2460 = vadd.f32 %v2347, %v2459
  %v2461 = vpop.f32.mrf.mxu0
  %v2462 = vadd.f32 %v2349, %v2461
  %v2463 = vpop.f32.mrf.mxu0
  %v2464 = vadd.f32 %v2351, %v2463
  %2465 = vmatprep.mubr.bf16.mxu0 %v525
  %2466 = vmatmul.mubr.bf16.gmra.mxu0 %v524
  %v2467 = vpop.f32.mrf.mxu0
  %v2468 = vadd.f32 %v2355, %v2467
  %v2469 = vpop.f32.mrf.mxu0
  %v2470 = vadd.f32 %v2357, %v2469
  %v2471 = vpop.f32.mrf.mxu0
  %v2472 = vadd.f32 %v2359, %v2471
  %v2473 = vpop.f32.mrf.mxu0
  %v2474 = vadd.f32 %v2361, %v2473
  %2475 = vmatprep.mubr.bf16.mxu0 %v532
  %2476 = vmatmul.mubr.bf16.gmra.mxu0 %v531
  %v2477 = vpop.f32.mrf.mxu0
  %v2478 = vadd.f32 %v2365, %v2477
  %v2479 = vpop.f32.mrf.mxu0
  %v2480 = vadd.f32 %v2367, %v2479
  %v2481 = vpop.f32.mrf.mxu0
  %v2482 = vadd.f32 %v2369, %v2481
  %v2483 = vpop.f32.mrf.mxu0
  %v2484 = vadd.f32 %v2371, %v2483
  %2485 = vmatprep.mubr.bf16.mxu0 %v539
  %2486 = vmatmul.mubr.bf16.gmra.mxu0 %v538
  %v2487 = vpop.f32.mrf.mxu0
  %v2488 = vadd.f32 %v2375, %v2487
  %v2489 = vpop.f32.mrf.mxu0
  %v2490 = vadd.f32 %v2377, %v2489
  %v2491 = vpop.f32.mrf.mxu0
  %v2492 = vadd.f32 %v2379, %v2491
  %v2493 = vpop.f32.mrf.mxu0
  %v2494 = vadd.f32 %v2381, %v2493
  %2495 = vmatprep.mubr.bf16.mxu0 %v546
  %2496 = vmatmul.mubr.bf16.gmra.mxu0 %v545
  %v2497 = vpop.f32.mrf.mxu0
  %v2498 = vadd.f32 %v2385, %v2497
  %v2499 = vpop.f32.mrf.mxu0
  %v2500 = vadd.f32 %v2387, %v2499
  %v2501 = vpop.f32.mrf.mxu0
  %v2502 = vadd.f32 %v2389, %v2501
  %v2503 = vpop.f32.mrf.mxu0
  %v2504 = vadd.f32 %v2391, %v2503
  %2505 = vmatprep.mubr.bf16.mxu0 %v553
  %2506 = vmatmul.mubr.bf16.gmra.mxu0 %v552
  %v2507 = vpop.f32.mrf.mxu0
  %v2508 = vadd.f32 %v2395, %v2507
  %v2509 = vpop.f32.mrf.mxu0
  %v2510 = vadd.f32 %v2397, %v2509
  %v2511 = vpop.f32.mrf.mxu0
  %v2512 = vadd.f32 %v2399, %v2511
  %v2513 = vpop.f32.mrf.mxu0
  %v2514 = vadd.f32 %v2401, %v2513
  %2515 = vmatprep.mubr.bf16.mxu0 %v560
  %2516 = vmatmul.mubr.bf16.gmra.mxu0 %v559
  %v2517 = vpop.f32.mrf.mxu0
  %v2518 = vadd.f32 %v2405, %v2517
  %v2519 = vpop.f32.mrf.mxu0
  %v2520 = vadd.f32 %v2407, %v2519
  %v2521 = vpop.f32.mrf.mxu0
  %v2522 = vadd.f32 %v2409, %v2521
  %v2523 = vpop.f32.mrf.mxu0
  %v2524 = vadd.f32 %v2411, %v2523
  %2525 = vmatprep.mubr.bf16.mxu0 %v567
  %2526 = vmatmul.mubr.bf16.gmra.mxu0 %v566
  %v2527 = vpop.f32.mrf.mxu0
  %v2528 = vadd.f32 %v2415, %v2527
  %v2529 = vpop.f32.mrf.mxu0
  %v2530 = vadd.f32 %v2417, %v2529
  %v2531 = vpop.f32.mrf.mxu0
  %v2532 = vadd.f32 %v2419, %v2531
  %v2533 = vpop.f32.mrf.mxu0
  %v2534 = vadd.f32 %v2421, %v2533
  %2535 = vdwg.mxu0
  %2536 = vmatprep.subr.bf16.mxu0 %v1520
  %2537 = vmatpush1.bf16.msra.mxu0 %v1519
  %2538 = vmatprep.subr.bf16.mxu0 %v1516
  %2539 = vmatpush1.bf16.msra.mxu0 %v1515
  %2540 = vmatprep.subr.bf16.mxu0 %v1512
  %2541 = vmatpush1.bf16.msra.mxu0 %v1511
  %2542 = vmatprep.subr.bf16.mxu0 %v1508
  %2543 = vmatpush1.bf16.msra.mxu0 %v1507
  %2544 = vmatprep.subr.bf16.mxu0 %v1504
  %2545 = vmatpush1.bf16.msra.mxu0 %v1503
  %2546 = vmatprep.subr.bf16.mxu0 %v1500
  %2547 = vmatpush1.bf16.msra.mxu0 %v1499
  %2548 = vmatprep.subr.bf16.mxu0 %v1496
  %2549 = vmatpush1.bf16.msra.mxu0 %v1495
  %2550 = vmatprep.subr.bf16.mxu0 %v1492
  %2551 = vmatpush1.bf16.msra.mxu0 %v1491
  %2552 = vmatprep.subr.bf16.mxu0 0
  %2553 = vmatpush2.bf16.msra.mxu0 0
  %2554 = vmatprep.subr.bf16.mxu0 0
  %2555 = vmatpush2.bf16.msra.mxu0 0
  %2556 = vmatprep.subr.bf16.mxu0 0
  %2557 = vmatpush2.bf16.msra.mxu0 0
  %2558 = vmatprep.subr.bf16.mxu0 0
  %2559 = vmatpush2.bf16.msra.mxu0 0
  %2560 = vmatprep.subr.bf16.mxu0 0
  %2561 = vmatpush2.bf16.msra.mxu0 0
  %2562 = vmatprep.subr.bf16.mxu0 0
  %2563 = vmatpush2.bf16.msra.mxu0 0
  %2564 = vmatprep.subr.bf16.mxu0 0
  %2565 = vmatpush2.bf16.msra.mxu0 0
  %2566 = vmatprep.subr.bf16.mxu0 0
  %2567 = vmatpush2.bf16.msra.mxu0 0
  %2568 = vmatprep.mubr.bf16.mxu0 0
  %2569 = vmatmul.mubr.bf16.gmra.mxu0 %v519
  %v2570 = vpop.f32.mrf.mxu0
  %v2571 = vadd.f32 %v2458, %v2570
  %v2572 = vpop.f32.mrf.mxu0
  %v2573 = vadd.f32 %v2460, %v2572
  %v2574 = vpop.f32.mrf.mxu0
  %v2575 = vadd.f32 %v2462, %v2574
  %v2576 = vpop.f32.mrf.mxu0
  %v2577 = vadd.f32 %v2464, %v2576
  %2578 = vmatprep.mubr.bf16.mxu0 0
  %2579 = vmatmul.mubr.bf16.gmra.mxu0 %v526
  %v2580 = vpop.f32.mrf.mxu0
  %v2581 = vadd.f32 %v2468, %v2580
  %v2582 = vpop.f32.mrf.mxu0
  %v2583 = vadd.f32 %v2470, %v2582
  %v2584 = vpop.f32.mrf.mxu0
  %v2585 = vadd.f32 %v2472, %v2584
  %v2586 = vpop.f32.mrf.mxu0
  %v2587 = vadd.f32 %v2474, %v2586
  %2588 = vmatprep.mubr.bf16.mxu0 0
  %2589 = vmatmul.mubr.bf16.gmra.mxu0 %v533
  %v2590 = vpop.f32.mrf.mxu0
  %v2591 = vadd.f32 %v2478, %v2590
  %v2592 = vpop.f32.mrf.mxu0
  %v2593 = vadd.f32 %v2480, %v2592
  %v2594 = vpop.f32.mrf.mxu0
  %v2595 = vadd.f32 %v2482, %v2594
  %v2596 = vpop.f32.mrf.mxu0
  %v2597 = vadd.f32 %v2484, %v2596
  %2598 = vmatprep.mubr.bf16.mxu0 0
  %2599 = vmatmul.mubr.bf16.gmra.mxu0 %v540
  %v2600 = vpop.f32.mrf.mxu0
  %v2601 = vadd.f32 %v2488, %v2600
  %v2602 = vpop.f32.mrf.mxu0
  %v2603 = vadd.f32 %v2490, %v2602
  %v2604 = vpop.f32.mrf.mxu0
  %v2605 = vadd.f32 %v2492, %v2604
  %v2606 = vpop.f32.mrf.mxu0
  %v2607 = vadd.f32 %v2494, %v2606
  %2608 = vmatprep.mubr.bf16.mxu0 0
  %2609 = vmatmul.mubr.bf16.gmra.mxu0 %v547
  %v2610 = vpop.f32.mrf.mxu0
  %v2611 = vadd.f32 %v2498, %v2610
  %v2612 = vpop.f32.mrf.mxu0
  %v2613 = vadd.f32 %v2500, %v2612
  %v2614 = vpop.f32.mrf.mxu0
  %v2615 = vadd.f32 %v2502, %v2614
  %v2616 = vpop.f32.mrf.mxu0
  %v2617 = vadd.f32 %v2504, %v2616
  %2618 = vmatprep.mubr.bf16.mxu0 0
  %2619 = vmatmul.mubr.bf16.gmra.mxu0 %v554
  %v2620 = vpop.f32.mrf.mxu0
  %v2621 = vadd.f32 %v2508, %v2620
  %v2622 = vpop.f32.mrf.mxu0
  %v2623 = vadd.f32 %v2510, %v2622
  %v2624 = vpop.f32.mrf.mxu0
  %v2625 = vadd.f32 %v2512, %v2624
  %v2626 = vpop.f32.mrf.mxu0
  %v2627 = vadd.f32 %v2514, %v2626
  %2628 = vmatprep.mubr.bf16.mxu0 0
  %2629 = vmatmul.mubr.bf16.gmra.mxu0 %v561
  %v2630 = vpop.f32.mrf.mxu0
  %v2631 = vadd.f32 %v2518, %v2630
  %v2632 = vpop.f32.mrf.mxu0
  %v2633 = vadd.f32 %v2520, %v2632
  %v2634 = vpop.f32.mrf.mxu0
  %v2635 = vadd.f32 %v2522, %v2634
  %v2636 = vpop.f32.mrf.mxu0
  %v2637 = vadd.f32 %v2524, %v2636
  %2638 = vmatprep.mubr.bf16.mxu0 0
  %2639 = vmatmul.mubr.bf16.gmra.mxu0 %v568
  %v2640 = vpop.f32.mrf.mxu0
  %v2641 = vadd.f32 %v2528, %v2640
  %v2642 = vpop.f32.mrf.mxu0
  %v2643 = vadd.f32 %v2530, %v2642
  %v2644 = vpop.f32.mrf.mxu0
  %v2645 = vadd.f32 %v2532, %v2644
  %v2646 = vpop.f32.mrf.mxu0
  %v2647 = vadd.f32 %v2534, %v2646
  %2648 = vdwg.mxu0
  %v2649 = vmax.f32 %v2119, 0.0
  %v2650 = vmax.f32 %v2121, 0.0
  %v2651 = vmax.f32 %v2571, 0.0
  %v2652 = vmax.f32 %v2573, 0.0
  %v2653 = vmax.f32 %v2123, 0.0
  %v2654 = vmax.f32 %v2125, 0.0
  %v2655 = vmax.f32 %v2575, 0.0
  %v2656 = vmax.f32 %v2577, 0.0
  %v2657 = vmax.f32 %v2129, 0.0
  %v2658 = vmax.f32 %v2131, 0.0
  %v2659 = vmax.f32 %v2581, 0.0
  %v2660 = vmax.f32 %v2583, 0.0
  %v2661 = vmax.f32 %v2133, 0.0
  %v2662 = vmax.f32 %v2135, 0.0
  %v2663 = vmax.f32 %v2585, 0.0
  %v2664 = vmax.f32 %v2587, 0.0
  %v2665 = vmax.f32 %v2139, 0.0
  %v2666 = vmax.f32 %v2141, 0.0
  %v2667 = vmax.f32 %v2591, 0.0
  %v2668 = vmax.f32 %v2593, 0.0
  %v2669 = vmax.f32 %v2143, 0.0
  %v2670 = vmax.f32 %v2145, 0.0
  %v2671 = vmax.f32 %v2595, 0.0
  %v2672 = vmax.f32 %v2597, 0.0
  %v2673 = vmax.f32 %v2149, 0.0
  %v2674 = vmax.f32 %v2151, 0.0
  %v2675 = vmax.f32 %v2601, 0.0
  %v2676 = vmax.f32 %v2603, 0.0
  %v2677 = vmax.f32 %v2153, 0.0
  %v2678 = vmax.f32 %v2155, 0.0
  %v2679 = vmax.f32 %v2605, 0.0
  %v2680 = vmax.f32 %v2607, 0.0
  %v2681 = vmax.f32 %v2159, 0.0
  %v2682 = vmax.f32 %v2161, 0.0
  %v2683 = vmax.f32 %v2611, 0.0
  %v2684 = vmax.f32 %v2613, 0.0
  %v2685 = vmax.f32 %v2163, 0.0
  %v2686 = vmax.f32 %v2165, 0.0
  %v2687 = vmax.f32 %v2615, 0.0
  %v2688 = vmax.f32 %v2617, 0.0
  %v2689 = vmax.f32 %v2169, 0.0
  %v2690 = vmax.f32 %v2171, 0.0
  %v2691 = vmax.f32 %v2621, 0.0
  %v2692 = vmax.f32 %v2623, 0.0
  %v2693 = vmax.f32 %v2173, 0.0
  %v2694 = vmax.f32 %v2175, 0.0
  %v2695 = vmax.f32 %v2625, 0.0
  %v2696 = vmax.f32 %v2627, 0.0
  %v2697 = vmax.f32 %v2179, 0.0
  %v2698 = vmax.f32 %v2181, 0.0
  %v2699 = vmax.f32 %v2631, 0.0
  %v2700 = vmax.f32 %v2633, 0.0
  %v2701 = vmax.f32 %v2183, 0.0
  %v2702 = vmax.f32 %v2185, 0.0
  %v2703 = vmax.f32 %v2635, 0.0
  %v2704 = vmax.f32 %v2637, 0.0
  %v2705 = vmax.f32 %v2189, 0.0
  %v2706 = vmax.f32 %v2191, 0.0
  %v2707 = vmax.f32 %v2641, 0.0
  %v2708 = vmax.f32 %v2643, 0.0
  %v2709 = vmax.f32 %v2193, 0.0
  %v2710 = vmax.f32 %v2195, 0.0
  %v2711 = vmax.f32 %v2645, 0.0
  %v2712 = vmax.f32 %v2647, 0.0
  %v2713 = vpack.c.bf16 %v2653, %v2649
  %v2714 = vpack.c.bf16 %v2654, %v2650
  %v2715 = vpack.c.bf16 %v2655, %v2651
  %v2716 = vpack.c.bf16 %v2656, %v2652
  %v2717 = vpack.c.bf16 %v2661, %v2657
  %v2718 = vpack.c.bf16 %v2662, %v2658
  %v2719 = vpack.c.bf16 %v2663, %v2659
  %v2720 = vpack.c.bf16 %v2664, %v2660
  %v2721 = vpack.c.bf16 %v2669, %v2665
  %v2722 = vpack.c.bf16 %v2670, %v2666
  %v2723 = vpack.c.bf16 %v2671, %v2667
  %v2724 = vpack.c.bf16 %v2672, %v2668
  %v2725 = vpack.c.bf16 %v2677, %v2673
  %v2726 = vpack.c.bf16 %v2678, %v2674
  %v2727 = vpack.c.bf16 %v2679, %v2675
  %v2728 = vpack.c.bf16 %v2680, %v2676
  %v2729 = vpack.c.bf16 %v2685, %v2681
  %v2730 = vpack.c.bf16 %v2686, %v2682
  %v2731 = vpack.c.bf16 %v2687, %v2683
  %v2732 = vpack.c.bf16 %v2688, %v2684
  %v2733 = vpack.c.bf16 %v2693, %v2689
  %v2734 = vpack.c.bf16 %v2694, %v2690
  %v2735 = vpack.c.bf16 %v2695, %v2691
  %v2736 = vpack.c.bf16 %v2696, %v2692
  %v2737 = vpack.c.bf16 %v2701, %v2697
  %v2738 = vpack.c.bf16 %v2702, %v2698
  %v2739 = vpack.c.bf16 %v2703, %v2699
  %v2740 = vpack.c.bf16 %v2704, %v2700
  %v2741 = vpack.c.bf16 %v2709, %v2705
  %v2742 = vpack.c.bf16 %v2710, %v2706
  %v2743 = vpack.c.bf16 %v2711, %v2707
  %v2744 = vpack.c.bf16 %v2712, %v2708
  %v2745 = vld [vmem:[%s3] sm:$0xff]
  %v2746 = vld [vmem:[%s3 + $0x8] sm:$0xff]
  %v2747 = vld [vmem:[%s3 + $0x10] sm:$0xff]
  %v2748 = vld [vmem:[%s3 + $0x18] sm:$0xff]
  %v2749 = vld [vmem:[%s3 + $0x20] sm:$0xff]
  %v2750 = vld [vmem:[%s3 + $0x28] sm:$0xff]
  %v2751 = vld [vmem:[%s3 + $0x30] sm:$0xff]
  %v2752 = vld [vmem:[%s3 + $0x38] sm:$0xff]
  %v2753 = vld [vmem:[%s3 + $0x40] sm:$0xff]
  %v2754 = vld [vmem:[%s3 + $0x48] sm:$0xff]
  %v2755 = vld [vmem:[%s3 + $0x50] sm:$0xff]
  %v2756 = vld [vmem:[%s3 + $0x58] sm:$0xff]
  %v2757 = vld [vmem:[%s3 + $0x60] sm:$0xff]
  %v2758 = vld [vmem:[%s3 + $0x68] sm:$0xff]
  %v2759 = vld [vmem:[%s3 + $0x70] sm:$0xff]
  %v2760 = vld [vmem:[%s3 + $0x78] sm:$0xff]
  %v2761 = vld [vmem:[%s3 + $0x80] sm:$0xff]
  %v2762 = vld [vmem:[%s3 + $0x88] sm:$0xff]
  %v2763 = vld [vmem:[%s3 + $0x90] sm:$0xff]
  %v2764 = vld [vmem:[%s3 + $0x98] sm:$0xff]
  %v2765 = vld [vmem:[%s3 + $0xa0] sm:$0xff]
  %v2766 = vld [vmem:[%s3 + $0xa8] sm:$0xff]
  %v2767 = vld [vmem:[%s3 + $0xb0] sm:$0xff]
  %v2768 = vld [vmem:[%s3 + $0xb8] sm:$0xff]
  %v2769 = vld [vmem:[%s3 + $0xc0] sm:$0xff]
  %v2770 = vld [vmem:[%s3 + $0xc8] sm:$0xff]
  %v2771 = vld [vmem:[%s3 + $0xd0] sm:$0xff]
  %v2772 = vld [vmem:[%s3 + $0xd8] sm:$0xff]
  %v2773 = vld [vmem:[%s3 + $0xe0] sm:$0xff]
  %v2774 = vld [vmem:[%s3 + $0xe8] sm:$0xff]
  %v2775 = vld [vmem:[%s3 + $0xf0] sm:$0xff]
  %v2776 = vld [vmem:[%s3 + $0xf8] sm:$0xff]
  %v2777 = vld [vmem:[%s3 + $0x100] sm:$0xff]
  %v2778 = vld [vmem:[%s3 + $0x108] sm:$0xff]
  %v2779 = vld [vmem:[%s3 + $0x110] sm:$0xff]
  %v2780 = vld [vmem:[%s3 + $0x118] sm:$0xff]
  %v2781 = vld [vmem:[%s3 + $0x120] sm:$0xff]
  %v2782 = vld [vmem:[%s3 + $0x128] sm:$0xff]
  %v2783 = vld [vmem:[%s3 + $0x130] sm:$0xff]
  %v2784 = vld [vmem:[%s3 + $0x138] sm:$0xff]
  %v2785 = vld [vmem:[%s3 + $0x140] sm:$0xff]
  %v2786 = vld [vmem:[%s3 + $0x148] sm:$0xff]
  %v2787 = vld [vmem:[%s3 + $0x150] sm:$0xff]
  %v2788 = vld [vmem:[%s3 + $0x158] sm:$0xff]
  %v2789 = vld [vmem:[%s3 + $0x160] sm:$0xff]
  %v2790 = vld [vmem:[%s3 + $0x168] sm:$0xff]
  %v2791 = vld [vmem:[%s3 + $0x170] sm:$0xff]
  %v2792 = vld [vmem:[%s3 + $0x178] sm:$0xff]
  %v2793 = vld [vmem:[%s3 + $0x180] sm:$0xff]
  %v2794 = vld [vmem:[%s3 + $0x188] sm:$0xff]
  %v2795 = vld [vmem:[%s3 + $0x190] sm:$0xff]
  %v2796 = vld [vmem:[%s3 + $0x198] sm:$0xff]
  %v2797 = vld [vmem:[%s3 + $0x1a0] sm:$0xff]
  %v2798 = vld [vmem:[%s3 + $0x1a8] sm:$0xff]
  %v2799 = vld [vmem:[%s3 + $0x1b0] sm:$0xff]
  %v2800 = vld [vmem:[%s3 + $0x1b8] sm:$0xff]
  %v2801 = vld [vmem:[%s3 + $0x1c0] sm:$0xff]
  %v2802 = vld [vmem:[%s3 + $0x1c8] sm:$0xff]
  %v2803 = vld [vmem:[%s3 + $0x1d0] sm:$0xff]
  %v2804 = vld [vmem:[%s3 + $0x1d8] sm:$0xff]
  %v2805 = vld [vmem:[%s3 + $0x1e0] sm:$0xff]
  %v2806 = vld [vmem:[%s3 + $0x1e8] sm:$0xff]
  %v2807 = vld [vmem:[%s3 + $0x1f0] sm:$0xff]
  %v2808 = vld [vmem:[%s3 + $0x1f8] sm:$0xff]
  %v2809 = vld [vmem:[%s3 + $0x200] sm:$0xff]
  %v2810 = vld [vmem:[%s3 + $0x208] sm:$0xff]
  %v2811 = vld [vmem:[%s3 + $0x210] sm:$0xff]
  %v2812 = vld [vmem:[%s3 + $0x218] sm:$0xff]
  %v2813 = vld [vmem:[%s3 + $0x220] sm:$0xff]
  %v2814 = vld [vmem:[%s3 + $0x228] sm:$0xff]
  %v2815 = vld [vmem:[%s3 + $0x230] sm:$0xff]
  %v2816 = vld [vmem:[%s3 + $0x238] sm:$0xff]
  %v2817 = vld [vmem:[%s3 + $0x240] sm:$0xff]
  %v2818 = vld [vmem:[%s3 + $0x248] sm:$0xff]
  %v2819 = vld [vmem:[%s3 + $0x250] sm:$0xff]
  %v2820 = vld [vmem:[%s3 + $0x258] sm:$0xff]
  %v2821 = vld [vmem:[%s3 + $0x260] sm:$0xff]
  %v2822 = vld [vmem:[%s3 + $0x268] sm:$0xff]
  %v2823 = vld [vmem:[%s3 + $0x270] sm:$0xff]
  %v2824 = vld [vmem:[%s3 + $0x278] sm:$0xff]
  %v2825 = vld [vmem:[%s3 + $0x280] sm:$0xff]
  %v2826 = vld [vmem:[%s3 + $0x288] sm:$0xff]
  %v2827 = vld [vmem:[%s3 + $0x290] sm:$0xff]
  %v2828 = vld [vmem:[%s3 + $0x298] sm:$0xff]
  %v2829 = vld [vmem:[%s3 + $0x2a0] sm:$0xff]
  %v2830 = vld [vmem:[%s3 + $0x2a8] sm:$0xff]
  %v2831 = vld [vmem:[%s3 + $0x2b0] sm:$0xff]
  %v2832 = vld [vmem:[%s3 + $0x2b8] sm:$0xff]
  %v2833 = vld [vmem:[%s3 + $0x2c0] sm:$0xff]
  %v2834 = vld [vmem:[%s3 + $0x2c8] sm:$0xff]
  %v2835 = vld [vmem:[%s3 + $0x2d0] sm:$0xff]
  %v2836 = vld [vmem:[%s3 + $0x2d8] sm:$0xff]
  %v2837 = vld [vmem:[%s3 + $0x2e0] sm:$0xff]
  %v2838 = vld [vmem:[%s3 + $0x2e8] sm:$0xff]
  %v2839 = vld [vmem:[%s3 + $0x2f0] sm:$0xff]
  %v2840 = vld [vmem:[%s3 + $0x2f8] sm:$0xff]
  %v2841 = vld [vmem:[%s3 + $0x300] sm:$0xff]
  %v2842 = vld [vmem:[%s3 + $0x308] sm:$0xff]
  %v2843 = vld [vmem:[%s3 + $0x310] sm:$0xff]
  %v2844 = vld [vmem:[%s3 + $0x318] sm:$0xff]
  %v2845 = vld [vmem:[%s3 + $0x320] sm:$0xff]
  %v2846 = vld [vmem:[%s3 + $0x328] sm:$0xff]
  %v2847 = vld [vmem:[%s3 + $0x330] sm:$0xff]
  %v2848 = vld [vmem:[%s3 + $0x338] sm:$0xff]
  %v2849 = vld [vmem:[%s3 + $0x340] sm:$0xff]
  %v2850 = vld [vmem:[%s3 + $0x348] sm:$0xff]
  %v2851 = vld [vmem:[%s3 + $0x350] sm:$0xff]
  %v2852 = vld [vmem:[%s3 + $0x358] sm:$0xff]
  %v2853 = vld [vmem:[%s3 + $0x360] sm:$0xff]
  %v2854 = vld [vmem:[%s3 + $0x368] sm:$0xff]
  %v2855 = vld [vmem:[%s3 + $0x370] sm:$0xff]
  %v2856 = vld [vmem:[%s3 + $0x378] sm:$0xff]
  %v2857 = vld [vmem:[%s3 + $0x380] sm:$0xff]
  %v2858 = vld [vmem:[%s3 + $0x388] sm:$0xff]
  %v2859 = vld [vmem:[%s3 + $0x390] sm:$0xff]
  %v2860 = vld [vmem:[%s3 + $0x398] sm:$0xff]
  %v2861 = vld [vmem:[%s3 + $0x3a0] sm:$0xff]
  %v2862 = vld [vmem:[%s3 + $0x3a8] sm:$0xff]
  %v2863 = vld [vmem:[%s3 + $0x3b0] sm:$0xff]
  %v2864 = vld [vmem:[%s3 + $0x3b8] sm:$0xff]
  %v2865 = vld [vmem:[%s3 + $0x3c0] sm:$0xff]
  %v2866 = vld [vmem:[%s3 + $0x3c8] sm:$0xff]
  %v2867 = vld [vmem:[%s3 + $0x3d0] sm:$0xff]
  %v2868 = vld [vmem:[%s3 + $0x3d8] sm:$0xff]
  %v2869 = vld [vmem:[%s3 + $0x3e0] sm:$0xff]
  %v2870 = vld [vmem:[%s3 + $0x3e8] sm:$0xff]
  %v2871 = vld [vmem:[%s3 + $0x3f0] sm:$0xff]
  %v2872 = vld [vmem:[%s3 + $0x3f8] sm:$0xff]
  %v2873 = vld [vmem:[%s4] sm:$0xf]
  %v2875 = vlaneseq
  %v2876 = vshrl.u32 %v2875, 7
  %v2877 = vsub.s32 0, %v2876
  %v2878 = vrot.slane %v2873, %v2877
  %v2879 = vlaneseq
  %v2880 = vshrl.u32 %v2879, 7
  %v2881 = vsub.s32 1, %v2880
  %v2882 = vrot.slane %v2873, %v2881
  %v2883 = vlaneseq
  %v2884 = vshrl.u32 %v2883, 7
  %v2885 = vsub.s32 2, %v2884
  %v2886 = vrot.slane %v2873, %v2885
  %v2887 = vlaneseq
  %v2888 = vshrl.u32 %v2887, 7
  %v2889 = vsub.s32 3, %v2888
  %v2890 = vrot.slane %v2873, %v2889
  %v3023 = vunpack.c.l.b16 %v2745
  %v3024 = vunpack.c.h.b16 %v2745
  %v3025 = vunpack.c.l.b16 %v2746
  %v3026 = vunpack.c.h.b16 %v2746
  %v3027 = vunpack.c.l.b16 %v2747
  %v3028 = vunpack.c.h.b16 %v2747
  %v3029 = vunpack.c.l.b16 %v2748
  %v3030 = vunpack.c.h.b16 %v2748
  %v3031 = vunpack.c.l.b16 %v2749
  %v3032 = vunpack.c.h.b16 %v2749
  %v3033 = vunpack.c.l.b16 %v2750
  %v3034 = vunpack.c.h.b16 %v2750
  %v3035 = vunpack.c.l.b16 %v2751
  %v3036 = vunpack.c.h.b16 %v2751
  %v3037 = vunpack.c.l.b16 %v2752
  %v3038 = vunpack.c.h.b16 %v2752
  %v3039 = vunpack.c.l.b16 %v2753
  %v3040 = vunpack.c.h.b16 %v2753
  %v3041 = vunpack.c.l.b16 %v2754
  %v3042 = vunpack.c.h.b16 %v2754
  %v3043 = vunpack.c.l.b16 %v2755
  %v3044 = vunpack.c.h.b16 %v2755
  %v3045 = vunpack.c.l.b16 %v2756
  %v3046 = vunpack.c.h.b16 %v2756
  %v3047 = vunpack.c.l.b16 %v2757
  %v3048 = vunpack.c.h.b16 %v2757
  %v3049 = vunpack.c.l.b16 %v2758
  %v3050 = vunpack.c.h.b16 %v2758
  %v3051 = vunpack.c.l.b16 %v2759
  %v3052 = vunpack.c.h.b16 %v2759
  %v3053 = vunpack.c.l.b16 %v2760
  %v3054 = vunpack.c.h.b16 %v2760
  %v3055 = vunpack.c.l.b16 %v2761
  %v3056 = vunpack.c.h.b16 %v2761
  %v3057 = vunpack.c.l.b16 %v2762
  %v3058 = vunpack.c.h.b16 %v2762
  %v3059 = vunpack.c.l.b16 %v2763
  %v3060 = vunpack.c.h.b16 %v2763
  %v3061 = vunpack.c.l.b16 %v2764
  %v3062 = vunpack.c.h.b16 %v2764
  %v3063 = vunpack.c.l.b16 %v2765
  %v3064 = vunpack.c.h.b16 %v2765
  %v3065 = vunpack.c.l.b16 %v2766
  %v3066 = vunpack.c.h.b16 %v2766
  %v3067 = vunpack.c.l.b16 %v2767
  %v3068 = vunpack.c.h.b16 %v2767
  %v3069 = vunpack.c.l.b16 %v2768
  %v3070 = vunpack.c.h.b16 %v2768
  %v3071 = vunpack.c.l.b16 %v2769
  %v3072 = vunpack.c.h.b16 %v2769
  %v3073 = vunpack.c.l.b16 %v2770
  %v3074 = vunpack.c.h.b16 %v2770
  %v3075 = vunpack.c.l.b16 %v2771
  %v3076 = vunpack.c.h.b16 %v2771
  %v3077 = vunpack.c.l.b16 %v2772
  %v3078 = vunpack.c.h.b16 %v2772
  %v3079 = vunpack.c.l.b16 %v2773
  %v3080 = vunpack.c.h.b16 %v2773
  %v3081 = vunpack.c.l.b16 %v2774
  %v3082 = vunpack.c.h.b16 %v2774
  %v3083 = vunpack.c.l.b16 %v2775
  %v3084 = vunpack.c.h.b16 %v2775
  %v3085 = vunpack.c.l.b16 %v2776
  %v3086 = vunpack.c.h.b16 %v2776
  %v3087 = vunpack.c.l.b16 %v2777
  %v3088 = vunpack.c.h.b16 %v2777
  %v3089 = vunpack.c.l.b16 %v2778
  %v3090 = vunpack.c.h.b16 %v2778
  %v3091 = vunpack.c.l.b16 %v2779
  %v3092 = vunpack.c.h.b16 %v2779
  %v3093 = vunpack.c.l.b16 %v2780
  %v3094 = vunpack.c.h.b16 %v2780
  %v3095 = vunpack.c.l.b16 %v2781
  %v3096 = vunpack.c.h.b16 %v2781
  %v3097 = vunpack.c.l.b16 %v2782
  %v3098 = vunpack.c.h.b16 %v2782
  %v3099 = vunpack.c.l.b16 %v2783
  %v3100 = vunpack.c.h.b16 %v2783
  %v3101 = vunpack.c.l.b16 %v2784
  %v3102 = vunpack.c.h.b16 %v2784
  %v3103 = vunpack.c.l.b16 %v2785
  %v3104 = vunpack.c.h.b16 %v2785
  %v3105 = vunpack.c.l.b16 %v2786
  %v3106 = vunpack.c.h.b16 %v2786
  %v3107 = vunpack.c.l.b16 %v2787
  %v3108 = vunpack.c.h.b16 %v2787
  %v3109 = vunpack.c.l.b16 %v2788
  %v3110 = vunpack.c.h.b16 %v2788
  %v3111 = vunpack.c.l.b16 %v2789
  %v3112 = vunpack.c.h.b16 %v2789
  %v3113 = vunpack.c.l.b16 %v2790
  %v3114 = vunpack.c.h.b16 %v2790
  %v3115 = vunpack.c.l.b16 %v2791
  %v3116 = vunpack.c.h.b16 %v2791
  %v3117 = vunpack.c.l.b16 %v2792
  %v3118 = vunpack.c.h.b16 %v2792
  %v3119 = vunpack.c.l.b16 %v2793
  %v3120 = vunpack.c.h.b16 %v2793
  %v3121 = vunpack.c.l.b16 %v2794
  %v3122 = vunpack.c.h.b16 %v2794
  %v3123 = vunpack.c.l.b16 %v2795
  %v3124 = vunpack.c.h.b16 %v2795
  %v3125 = vunpack.c.l.b16 %v2796
  %v3126 = vunpack.c.h.b16 %v2796
  %v3127 = vunpack.c.l.b16 %v2797
  %v3128 = vunpack.c.h.b16 %v2797
  %v3129 = vunpack.c.l.b16 %v2798
  %v3130 = vunpack.c.h.b16 %v2798
  %v3131 = vunpack.c.l.b16 %v2799
  %v3132 = vunpack.c.h.b16 %v2799
  %v3133 = vunpack.c.l.b16 %v2800
  %v3134 = vunpack.c.h.b16 %v2800
  %v3135 = vunpack.c.l.b16 %v2801
  %v3136 = vunpack.c.h.b16 %v2801
  %v3137 = vunpack.c.l.b16 %v2802
  %v3138 = vunpack.c.h.b16 %v2802
  %v3139 = vunpack.c.l.b16 %v2803
  %v3140 = vunpack.c.h.b16 %v2803
  %v3141 = vunpack.c.l.b16 %v2804
  %v3142 = vunpack.c.h.b16 %v2804
  %v3143 = vunpack.c.l.b16 %v2805
  %v3144 = vunpack.c.h.b16 %v2805
  %v3145 = vunpack.c.l.b16 %v2806
  %v3146 = vunpack.c.h.b16 %v2806
  %v3147 = vunpack.c.l.b16 %v2807
  %v3148 = vunpack.c.h.b16 %v2807
  %v3149 = vunpack.c.l.b16 %v2808
  %v3150 = vunpack.c.h.b16 %v2808
  %v3151 = vunpack.c.l.b16 %v2809
  %v3152 = vunpack.c.h.b16 %v2809
  %v3153 = vunpack.c.l.b16 %v2810
  %v3154 = vunpack.c.h.b16 %v2810
  %v3155 = vunpack.c.l.b16 %v2811
  %v3156 = vunpack.c.h.b16 %v2811
  %v3157 = vunpack.c.l.b16 %v2812
  %v3158 = vunpack.c.h.b16 %v2812
  %v3159 = vunpack.c.l.b16 %v2813
  %v3160 = vunpack.c.h.b16 %v2813
  %v3161 = vunpack.c.l.b16 %v2814
  %v3162 = vunpack.c.h.b16 %v2814
  %v3163 = vunpack.c.l.b16 %v2815
  %v3164 = vunpack.c.h.b16 %v2815
  %v3165 = vunpack.c.l.b16 %v2816
  %v3166 = vunpack.c.h.b16 %v2816
  %v3167 = vunpack.c.l.b16 %v2817
  %v3168 = vunpack.c.h.b16 %v2817
  %v3169 = vunpack.c.l.b16 %v2818
  %v3170 = vunpack.c.h.b16 %v2818
  %v3171 = vunpack.c.l.b16 %v2819
  %v3172 = vunpack.c.h.b16 %v2819
  %v3173 = vunpack.c.l.b16 %v2820
  %v3174 = vunpack.c.h.b16 %v2820
  %v3175 = vunpack.c.l.b16 %v2821
  %v3176 = vunpack.c.h.b16 %v2821
  %v3177 = vunpack.c.l.b16 %v2822
  %v3178 = vunpack.c.h.b16 %v2822
  %v3179 = vunpack.c.l.b16 %v2823
  %v3180 = vunpack.c.h.b16 %v2823
  %v3181 = vunpack.c.l.b16 %v2824
  %v3182 = vunpack.c.h.b16 %v2824
  %v3183 = vunpack.c.l.b16 %v2825
  %v3184 = vunpack.c.h.b16 %v2825
  %v3185 = vunpack.c.l.b16 %v2826
  %v3186 = vunpack.c.h.b16 %v2826
  %v3187 = vunpack.c.l.b16 %v2827
  %v3188 = vunpack.c.h.b16 %v2827
  %v3189 = vunpack.c.l.b16 %v2828
  %v3190 = vunpack.c.h.b16 %v2828
  %v3191 = vunpack.c.l.b16 %v2829
  %v3192 = vunpack.c.h.b16 %v2829
  %v3193 = vunpack.c.l.b16 %v2830
  %v3194 = vunpack.c.h.b16 %v2830
  %v3195 = vunpack.c.l.b16 %v2831
  %v3196 = vunpack.c.h.b16 %v2831
  %v3197 = vunpack.c.l.b16 %v2832
  %v3198 = vunpack.c.h.b16 %v2832
  %v3199 = vunpack.c.l.b16 %v2833
  %v3200 = vunpack.c.h.b16 %v2833
  %v3201 = vunpack.c.l.b16 %v2834
  %v3202 = vunpack.c.h.b16 %v2834
  %v3203 = vunpack.c.l.b16 %v2835
  %v3204 = vunpack.c.h.b16 %v2835
  %v3205 = vunpack.c.l.b16 %v2836
  %v3206 = vunpack.c.h.b16 %v2836
  %v3207 = vunpack.c.l.b16 %v2837
  %v3208 = vunpack.c.h.b16 %v2837
  %v3209 = vunpack.c.l.b16 %v2838
  %v3210 = vunpack.c.h.b16 %v2838
  %v3211 = vunpack.c.l.b16 %v2839
  %v3212 = vunpack.c.h.b16 %v2839
  %v3213 = vunpack.c.l.b16 %v2840
  %v3214 = vunpack.c.h.b16 %v2840
  %v3215 = vunpack.c.l.b16 %v2841
  %v3216 = vunpack.c.h.b16 %v2841
  %v3217 = vunpack.c.l.b16 %v2842
  %v3218 = vunpack.c.h.b16 %v2842
  %v3219 = vunpack.c.l.b16 %v2843
  %v3220 = vunpack.c.h.b16 %v2843
  %v3221 = vunpack.c.l.b16 %v2844
  %v3222 = vunpack.c.h.b16 %v2844
  %v3223 = vunpack.c.l.b16 %v2845
  %v3224 = vunpack.c.h.b16 %v2845
  %v3225 = vunpack.c.l.b16 %v2846
  %v3226 = vunpack.c.h.b16 %v2846
  %v3227 = vunpack.c.l.b16 %v2847
  %v3228 = vunpack.c.h.b16 %v2847
  %v3229 = vunpack.c.l.b16 %v2848
  %v3230 = vunpack.c.h.b16 %v2848
  %v3231 = vunpack.c.l.b16 %v2849
  %v3232 = vunpack.c.h.b16 %v2849
  %v3233 = vunpack.c.l.b16 %v2850
  %v3234 = vunpack.c.h.b16 %v2850
  %v3235 = vunpack.c.l.b16 %v2851
  %v3236 = vunpack.c.h.b16 %v2851
  %v3237 = vunpack.c.l.b16 %v2852
  %v3238 = vunpack.c.h.b16 %v2852
  %v3239 = vunpack.c.l.b16 %v2853
  %v3240 = vunpack.c.h.b16 %v2853
  %v3241 = vunpack.c.l.b16 %v2854
  %v3242 = vunpack.c.h.b16 %v2854
  %v3243 = vunpack.c.l.b16 %v2855
  %v3244 = vunpack.c.h.b16 %v2855
  %v3245 = vunpack.c.l.b16 %v2856
  %v3246 = vunpack.c.h.b16 %v2856
  %v3247 = vunpack.c.l.b16 %v2857
  %v3248 = vunpack.c.h.b16 %v2857
  %v3249 = vunpack.c.l.b16 %v2858
  %v3250 = vunpack.c.h.b16 %v2858
  %v3251 = vunpack.c.l.b16 %v2859
  %v3252 = vunpack.c.h.b16 %v2859
  %v3253 = vunpack.c.l.b16 %v2860
  %v3254 = vunpack.c.h.b16 %v2860
  %v3255 = vunpack.c.l.b16 %v2861
  %v3256 = vunpack.c.h.b16 %v2861
  %v3257 = vunpack.c.l.b16 %v2862
  %v3258 = vunpack.c.h.b16 %v2862
  %v3259 = vunpack.c.l.b16 %v2863
  %v3260 = vunpack.c.h.b16 %v2863
  %v3261 = vunpack.c.l.b16 %v2864
  %v3262 = vunpack.c.h.b16 %v2864
  %v3263 = vunpack.c.l.b16 %v2865
  %v3264 = vunpack.c.h.b16 %v2865
  %v3265 = vunpack.c.l.b16 %v2866
  %v3266 = vunpack.c.h.b16 %v2866
  %v3267 = vunpack.c.l.b16 %v2867
  %v3268 = vunpack.c.h.b16 %v2867
  %v3269 = vunpack.c.l.b16 %v2868
  %v3270 = vunpack.c.h.b16 %v2868
  %v3271 = vunpack.c.l.b16 %v2869
  %v3272 = vunpack.c.h.b16 %v2869
  %v3273 = vunpack.c.l.b16 %v2870
  %v3274 = vunpack.c.h.b16 %v2870
  %v3275 = vunpack.c.l.b16 %v2871
  %v3276 = vunpack.c.h.b16 %v2871
  %v3277 = vunpack.c.l.b16 %v2872
  %v3278 = vunpack.c.h.b16 %v2872
  %v3279 = vpack.c.b16 %v3027, %v3023
  %v3280 = vpack.c.b16 %v3028, %v3024
  %v3281 = vpack.c.b16 %v3029, %v3025
  %v3282 = vpack.c.b16 %v3030, %v3026
  %v3283 = vpack.c.b16 %v3035, %v3031
  %v3284 = vpack.c.b16 %v3036, %v3032
  %v3285 = vpack.c.b16 %v3037, %v3033
  %v3286 = vpack.c.b16 %v3038, %v3034
  %v3287 = vpack.c.b16 %v3043, %v3039
  %v3288 = vpack.c.b16 %v3044, %v3040
  %v3289 = vpack.c.b16 %v3045, %v3041
  %v3290 = vpack.c.b16 %v3046, %v3042
  %v3291 = vpack.c.b16 %v3051, %v3047
  %v3292 = vpack.c.b16 %v3052, %v3048
  %v3293 = vpack.c.b16 %v3053, %v3049
  %v3294 = vpack.c.b16 %v3054, %v3050
  %v3295 = vpack.c.b16 %v3059, %v3055
  %v3296 = vpack.c.b16 %v3060, %v3056
  %v3297 = vpack.c.b16 %v3061, %v3057
  %v3298 = vpack.c.b16 %v3062, %v3058
  %v3299 = vpack.c.b16 %v3067, %v3063
  %v3300 = vpack.c.b16 %v3068, %v3064
  %v3301 = vpack.c.b16 %v3069, %v3065
  %v3302 = vpack.c.b16 %v3070, %v3066
  %v3303 = vpack.c.b16 %v3075, %v3071
  %v3304 = vpack.c.b16 %v3076, %v3072
  %v3305 = vpack.c.b16 %v3077, %v3073
  %v3306 = vpack.c.b16 %v3078, %v3074
  %v3307 = vpack.c.b16 %v3083, %v3079
  %v3308 = vpack.c.b16 %v3084, %v3080
  %v3309 = vpack.c.b16 %v3085, %v3081
  %v3310 = vpack.c.b16 %v3086, %v3082
  %v3311 = vpack.c.b16 %v3091, %v3087
  %v3312 = vpack.c.b16 %v3092, %v3088
  %v3313 = vpack.c.b16 %v3093, %v3089
  %v3314 = vpack.c.b16 %v3094, %v3090
  %v3315 = vpack.c.b16 %v3099, %v3095
  %v3316 = vpack.c.b16 %v3100, %v3096
  %v3317 = vpack.c.b16 %v3101, %v3097
  %v3318 = vpack.c.b16 %v3102, %v3098
  %v3319 = vpack.c.b16 %v3107, %v3103
  %v3320 = vpack.c.b16 %v3108, %v3104
  %v3321 = vpack.c.b16 %v3109, %v3105
  %v3322 = vpack.c.b16 %v3110, %v3106
  %v3323 = vpack.c.b16 %v3115, %v3111
  %v3324 = vpack.c.b16 %v3116, %v3112
  %v3325 = vpack.c.b16 %v3117, %v3113
  %v3326 = vpack.c.b16 %v3118, %v3114
  %v3327 = vpack.c.b16 %v3123, %v3119
  %v3328 = vpack.c.b16 %v3124, %v3120
  %v3329 = vpack.c.b16 %v3125, %v3121
  %v3330 = vpack.c.b16 %v3126, %v3122
  %v3331 = vpack.c.b16 %v3131, %v3127
  %v3332 = vpack.c.b16 %v3132, %v3128
  %v3333 = vpack.c.b16 %v3133, %v3129
  %v3334 = vpack.c.b16 %v3134, %v3130
  %v3335 = vpack.c.b16 %v3139, %v3135
  %v3336 = vpack.c.b16 %v3140, %v3136
  %v3337 = vpack.c.b16 %v3141, %v3137
  %v3338 = vpack.c.b16 %v3142, %v3138
  %v3339 = vpack.c.b16 %v3147, %v3143
  %v3340 = vpack.c.b16 %v3148, %v3144
  %v3341 = vpack.c.b16 %v3149, %v3145
  %v3342 = vpack.c.b16 %v3150, %v3146
  %v3343 = vpack.c.b16 %v3155, %v3151
  %v3344 = vpack.c.b16 %v3156, %v3152
  %v3345 = vpack.c.b16 %v3157, %v3153
  %v3346 = vpack.c.b16 %v3158, %v3154
  %v3347 = vpack.c.b16 %v3163, %v3159
  %v3348 = vpack.c.b16 %v3164, %v3160
  %v3349 = vpack.c.b16 %v3165, %v3161
  %v3350 = vpack.c.b16 %v3166, %v3162
  %v3351 = vpack.c.b16 %v3171, %v3167
  %v3352 = vpack.c.b16 %v3172, %v3168
  %v3353 = vpack.c.b16 %v3173, %v3169
  %v3354 = vpack.c.b16 %v3174, %v3170
  %v3355 = vpack.c.b16 %v3179, %v3175
  %v3356 = vpack.c.b16 %v3180, %v3176
  %v3357 = vpack.c.b16 %v3181, %v3177
  %v3358 = vpack.c.b16 %v3182, %v3178
  %v3359 = vpack.c.b16 %v3187, %v3183
  %v3360 = vpack.c.b16 %v3188, %v3184
  %v3361 = vpack.c.b16 %v3189, %v3185
  %v3362 = vpack.c.b16 %v3190, %v3186
  %v3363 = vpack.c.b16 %v3195, %v3191
  %v3364 = vpack.c.b16 %v3196, %v3192
  %v3365 = vpack.c.b16 %v3197, %v3193
  %v3366 = vpack.c.b16 %v3198, %v3194
  %v3367 = vpack.c.b16 %v3203, %v3199
  %v3368 = vpack.c.b16 %v3204, %v3200
  %v3369 = vpack.c.b16 %v3205, %v3201
  %v3370 = vpack.c.b16 %v3206, %v3202
  %v3371 = vpack.c.b16 %v3211, %v3207
  %v3372 = vpack.c.b16 %v3212, %v3208
  %v3373 = vpack.c.b16 %v3213, %v3209
  %v3374 = vpack.c.b16 %v3214, %v3210
  %v3375 = vpack.c.b16 %v3219, %v3215
  %v3376 = vpack.c.b16 %v3220, %v3216
  %v3377 = vpack.c.b16 %v3221, %v3217
  %v3378 = vpack.c.b16 %v3222, %v3218
  %v3379 = vpack.c.b16 %v3227, %v3223
  %v3380 = vpack.c.b16 %v3228, %v3224
  %v3381 = vpack.c.b16 %v3229, %v3225
  %v3382 = vpack.c.b16 %v3230, %v3226
  %v3383 = vpack.c.b16 %v3235, %v3231
  %v3384 = vpack.c.b16 %v3236, %v3232
  %v3385 = vpack.c.b16 %v3237, %v3233
  %v3386 = vpack.c.b16 %v3238, %v3234
  %v3387 = vpack.c.b16 %v3243, %v3239
  %v3388 = vpack.c.b16 %v3244, %v3240
  %v3389 = vpack.c.b16 %v3245, %v3241
  %v3390 = vpack.c.b16 %v3246, %v3242
  %v3391 = vpack.c.b16 %v3251, %v3247
  %v3392 = vpack.c.b16 %v3252, %v3248
  %v3393 = vpack.c.b16 %v3253, %v3249
  %v3394 = vpack.c.b16 %v3254, %v3250
  %v3395 = vpack.c.b16 %v3259, %v3255
  %v3396 = vpack.c.b16 %v3260, %v3256
  %v3397 = vpack.c.b16 %v3261, %v3257
  %v3398 = vpack.c.b16 %v3262, %v3258
  %v3399 = vpack.c.b16 %v3267, %v3263
  %v3400 = vpack.c.b16 %v3268, %v3264
  %v3401 = vpack.c.b16 %v3269, %v3265
  %v3402 = vpack.c.b16 %v3270, %v3266
  %v3403 = vpack.c.b16 %v3275, %v3271
  %v3404 = vpack.c.b16 %v3276, %v3272
  %v3405 = vpack.c.b16 %v3277, %v3273
  %v3406 = vpack.c.b16 %v3278, %v3274
  %3535 = vmatprep.subr.bf16.mxu0 %v3308
  %3536 = vmatpush1.bf16.msra.mxu0 %v3307
  %3537 = vmatprep.subr.bf16.mxu0 %v3304
  %3538 = vmatpush1.bf16.msra.mxu0 %v3303
  %3539 = vmatprep.subr.bf16.mxu0 %v3300
  %3540 = vmatpush1.bf16.msra.mxu0 %v3299
  %3541 = vmatprep.subr.bf16.mxu0 %v3296
  %3542 = vmatpush1.bf16.msra.mxu0 %v3295
  %3543 = vmatprep.subr.bf16.mxu0 %v3292
  %3544 = vmatpush1.bf16.msra.mxu0 %v3291
  %3545 = vmatprep.subr.bf16.mxu0 %v3288
  %3546 = vmatpush1.bf16.msra.mxu0 %v3287
  %3547 = vmatprep.subr.bf16.mxu0 %v3284
  %3548 = vmatpush1.bf16.msra.mxu0 %v3283
  %3549 = vmatprep.subr.bf16.mxu0 %v3280
  %3550 = vmatpush1.bf16.msra.mxu0 %v3279
  %3551 = vmatprep.subr.bf16.mxu0 %v3340
  %3552 = vmatpush2.bf16.msra.mxu0 %v3339
  %3553 = vmatprep.subr.bf16.mxu0 %v3336
  %3554 = vmatpush2.bf16.msra.mxu0 %v3335
  %3555 = vmatprep.subr.bf16.mxu0 %v3332
  %3556 = vmatpush2.bf16.msra.mxu0 %v3331
  %3557 = vmatprep.subr.bf16.mxu0 %v3328
  %3558 = vmatpush2.bf16.msra.mxu0 %v3327
  %3559 = vmatprep.subr.bf16.mxu0 %v3324
  %3560 = vmatpush2.bf16.msra.mxu0 %v3323
  %3561 = vmatprep.subr.bf16.mxu0 %v3320
  %3562 = vmatpush2.bf16.msra.mxu0 %v3319
  %3563 = vmatprep.subr.bf16.mxu0 %v3316
  %3564 = vmatpush2.bf16.msra.mxu0 %v3315
  %3565 = vmatprep.subr.bf16.mxu0 %v3312
  %3566 = vmatpush2.bf16.msra.mxu0 %v3311
  %3567 = vmatprep.mubr.bf16.mxu0 %v2714
  %3568 = vmatmul.mubr.bf16.gmra.mxu0 %v2713
  %v3569 = vpop.f32.mrf.mxu0
  %v3570 = vadd.f32 %v2878, %v3569
  %v3571 = vpop.f32.mrf.mxu0
  %v3572 = vadd.f32 %v2882, %v3571
  %v3573 = vpop.f32.mrf.mxu0
  %v3574 = vadd.f32 %v2878, %v3573
  %v3575 = vpop.f32.mrf.mxu0
  %v3576 = vadd.f32 %v2882, %v3575
  %3577 = vmatprep.mubr.bf16.mxu0 %v2718
  %3578 = vmatmul.mubr.bf16.gmra.mxu0 %v2717
  %v3579 = vpop.f32.mrf.mxu0
  %v3580 = vadd.f32 %v2878, %v3579
  %v3581 = vpop.f32.mrf.mxu0
  %v3582 = vadd.f32 %v2882, %v3581
  %v3583 = vpop.f32.mrf.mxu0
  %v3584 = vadd.f32 %v2878, %v3583
  %v3585 = vpop.f32.mrf.mxu0
  %v3586 = vadd.f32 %v2882, %v3585
  %3587 = vmatprep.mubr.bf16.mxu0 %v2722
  %3588 = vmatmul.mubr.bf16.gmra.mxu0 %v2721
  %v3589 = vpop.f32.mrf.mxu0
  %v3590 = vadd.f32 %v2878, %v3589
  %v3591 = vpop.f32.mrf.mxu0
  %v3592 = vadd.f32 %v2882, %v3591
  %v3593 = vpop.f32.mrf.mxu0
  %v3594 = vadd.f32 %v2878, %v3593
  %v3595 = vpop.f32.mrf.mxu0
  %v3596 = vadd.f32 %v2882, %v3595
  %3597 = vmatprep.mubr.bf16.mxu0 %v2726
  %3598 = vmatmul.mubr.bf16.gmra.mxu0 %v2725
  %v3599 = vpop.f32.mrf.mxu0
  %v3600 = vadd.f32 %v2878, %v3599
  %v3601 = vpop.f32.mrf.mxu0
  %v3602 = vadd.f32 %v2882, %v3601
  %v3603 = vpop.f32.mrf.mxu0
  %v3604 = vadd.f32 %v2878, %v3603
  %v3605 = vpop.f32.mrf.mxu0
  %v3606 = vadd.f32 %v2882, %v3605
  %3607 = vmatprep.mubr.bf16.mxu0 %v2730
  %3608 = vmatmul.mubr.bf16.gmra.mxu0 %v2729
  %v3609 = vpop.f32.mrf.mxu0
  %v3610 = vadd.f32 %v2878, %v3609
  %v3611 = vpop.f32.mrf.mxu0
  %v3612 = vadd.f32 %v2882, %v3611
  %v3613 = vpop.f32.mrf.mxu0
  %v3614 = vadd.f32 %v2878, %v3613
  %v3615 = vpop.f32.mrf.mxu0
  %v3616 = vadd.f32 %v2882, %v3615
  %3617 = vmatprep.mubr.bf16.mxu0 %v2734
  %3618 = vmatmul.mubr.bf16.gmra.mxu0 %v2733
  %v3619 = vpop.f32.mrf.mxu0
  %v3620 = vadd.f32 %v2878, %v3619
  %v3621 = vpop.f32.mrf.mxu0
  %v3622 = vadd.f32 %v2882, %v3621
  %v3623 = vpop.f32.mrf.mxu0
  %v3624 = vadd.f32 %v2878, %v3623
  %v3625 = vpop.f32.mrf.mxu0
  %v3626 = vadd.f32 %v2882, %v3625
  %3627 = vmatprep.mubr.bf16.mxu0 %v2738
  %3628 = vmatmul.mubr.bf16.gmra.mxu0 %v2737
  %v3629 = vpop.f32.mrf.mxu0
  %v3630 = vadd.f32 %v2878, %v3629
  %v3631 = vpop.f32.mrf.mxu0
  %v3632 = vadd.f32 %v2882, %v3631
  %v3633 = vpop.f32.mrf.mxu0
  %v3634 = vadd.f32 %v2878, %v3633
  %v3635 = vpop.f32.mrf.mxu0
  %v3636 = vadd.f32 %v2882, %v3635
  %3637 = vmatprep.mubr.bf16.mxu0 %v2742
  %3638 = vmatmul.mubr.bf16.gmra.mxu0 %v2741
  %v3639 = vpop.f32.mrf.mxu0
  %v3640 = vadd.f32 %v2878, %v3639
  %v3641 = vpop.f32.mrf.mxu0
  %v3642 = vadd.f32 %v2882, %v3641
  %v3643 = vpop.f32.mrf.mxu0
  %v3644 = vadd.f32 %v2878, %v3643
  %v3645 = vpop.f32.mrf.mxu0
  %v3646 = vadd.f32 %v2882, %v3645
  %3647 = vdwg.mxu0
  %3648 = vmatprep.subr.bf16.mxu0 %v3372
  %3649 = vmatpush1.bf16.msra.mxu0 %v3371
  %3650 = vmatprep.subr.bf16.mxu0 %v3368
  %3651 = vmatpush1.bf16.msra.mxu0 %v3367
  %3652 = vmatprep.subr.bf16.mxu0 %v3364
  %3653 = vmatpush1.bf16.msra.mxu0 %v3363
  %3654 = vmatprep.subr.bf16.mxu0 %v3360
  %3655 = vmatpush1.bf16.msra.mxu0 %v3359
  %3656 = vmatprep.subr.bf16.mxu0 %v3356
  %3657 = vmatpush1.bf16.msra.mxu0 %v3355
  %3658 = vmatprep.subr.bf16.mxu0 %v3352
  %3659 = vmatpush1.bf16.msra.mxu0 %v3351
  %3660 = vmatprep.subr.bf16.mxu0 %v3348
  %3661 = vmatpush1.bf16.msra.mxu0 %v3347
  %3662 = vmatprep.subr.bf16.mxu0 %v3344
  %3663 = vmatpush1.bf16.msra.mxu0 %v3343
  %3664 = vmatprep.subr.bf16.mxu0 %v3404
  %3665 = vmatpush2.bf16.msra.mxu0 %v3403
  %3666 = vmatprep.subr.bf16.mxu0 %v3400
  %3667 = vmatpush2.bf16.msra.mxu0 %v3399
  %3668 = vmatprep.subr.bf16.mxu0 %v3396
  %3669 = vmatpush2.bf16.msra.mxu0 %v3395
  %3670 = vmatprep.subr.bf16.mxu0 %v3392
  %3671 = vmatpush2.bf16.msra.mxu0 %v3391
  %3672 = vmatprep.subr.bf16.mxu0 %v3388
  %3673 = vmatpush2.bf16.msra.mxu0 %v3387
  %3674 = vmatprep.subr.bf16.mxu0 %v3384
  %3675 = vmatpush2.bf16.msra.mxu0 %v3383
  %3676 = vmatprep.subr.bf16.mxu0 %v3380
  %3677 = vmatpush2.bf16.msra.mxu0 %v3379
  %3678 = vmatprep.subr.bf16.mxu0 %v3376
  %3679 = vmatpush2.bf16.msra.mxu0 %v3375
  %3680 = vmatprep.mubr.bf16.mxu0 %v2716
  %3681 = vmatmul.mubr.bf16.gmra.mxu0 %v2715
  %v3682 = vpop.f32.mrf.mxu0
  %v3683 = vadd.f32 %v3570, %v3682
  %v3684 = vpop.f32.mrf.mxu0
  %v3685 = vadd.f32 %v3572, %v3684
  %v3686 = vpop.f32.mrf.mxu0
  %v3687 = vadd.f32 %v3574, %v3686
  %v3688 = vpop.f32.mrf.mxu0
  %v3689 = vadd.f32 %v3576, %v3688
  %3690 = vmatprep.mubr.bf16.mxu0 %v2720
  %3691 = vmatmul.mubr.bf16.gmra.mxu0 %v2719
  %v3692 = vpop.f32.mrf.mxu0
  %v3693 = vadd.f32 %v3580, %v3692
  %v3694 = vpop.f32.mrf.mxu0
  %v3695 = vadd.f32 %v3582, %v3694
  %v3696 = vpop.f32.mrf.mxu0
  %v3697 = vadd.f32 %v3584, %v3696
  %v3698 = vpop.f32.mrf.mxu0
  %v3699 = vadd.f32 %v3586, %v3698
  %3700 = vmatprep.mubr.bf16.mxu0 %v2724
  %3701 = vmatmul.mubr.bf16.gmra.mxu0 %v2723
  %v3702 = vpop.f32.mrf.mxu0
  %v3703 = vadd.f32 %v3590, %v3702
  %v3704 = vpop.f32.mrf.mxu0
  %v3705 = vadd.f32 %v3592, %v3704
  %v3706 = vpop.f32.mrf.mxu0
  %v3707 = vadd.f32 %v3594, %v3706
  %v3708 = vpop.f32.mrf.mxu0
  %v3709 = vadd.f32 %v3596, %v3708
  %3710 = vmatprep.mubr.bf16.mxu0 %v2728
  %3711 = vmatmul.mubr.bf16.gmra.mxu0 %v2727
  %v3712 = vpop.f32.mrf.mxu0
  %v3713 = vadd.f32 %v3600, %v3712
  %v3714 = vpop.f32.mrf.mxu0
  %v3715 = vadd.f32 %v3602, %v3714
  %v3716 = vpop.f32.mrf.mxu0
  %v3717 = vadd.f32 %v3604, %v3716
  %v3718 = vpop.f32.mrf.mxu0
  %v3719 = vadd.f32 %v3606, %v3718
  %3720 = vmatprep.mubr.bf16.mxu0 %v2732
  %3721 = vmatmul.mubr.bf16.gmra.mxu0 %v2731
  %v3722 = vpop.f32.mrf.mxu0
  %v3723 = vadd.f32 %v3610, %v3722
  %v3724 = vpop.f32.mrf.mxu0
  %v3725 = vadd.f32 %v3612, %v3724
  %v3726 = vpop.f32.mrf.mxu0
  %v3727 = vadd.f32 %v3614, %v3726
  %v3728 = vpop.f32.mrf.mxu0
  %v3729 = vadd.f32 %v3616, %v3728
  %3730 = vmatprep.mubr.bf16.mxu0 %v2736
  %3731 = vmatmul.mubr.bf16.gmra.mxu0 %v2735
  %v3732 = vpop.f32.mrf.mxu0
  %v3733 = vadd.f32 %v3620, %v3732
  %v3734 = vpop.f32.mrf.mxu0
  %v3735 = vadd.f32 %v3622, %v3734
  %v3736 = vpop.f32.mrf.mxu0
  %v3737 = vadd.f32 %v3624, %v3736
  %v3738 = vpop.f32.mrf.mxu0
  %v3739 = vadd.f32 %v3626, %v3738
  %3740 = vmatprep.mubr.bf16.mxu0 %v2740
  %3741 = vmatmul.mubr.bf16.gmra.mxu0 %v2739
  %v3742 = vpop.f32.mrf.mxu0
  %v3743 = vadd.f32 %v3630, %v3742
  %v3744 = vpop.f32.mrf.mxu0
  %v3745 = vadd.f32 %v3632, %v3744
  %v3746 = vpop.f32.mrf.mxu0
  %v3747 = vadd.f32 %v3634, %v3746
  %v3748 = vpop.f32.mrf.mxu0
  %v3749 = vadd.f32 %v3636, %v3748
  %3750 = vmatprep.mubr.bf16.mxu0 %v2744
  %3751 = vmatmul.mubr.bf16.gmra.mxu0 %v2743
  %v3752 = vpop.f32.mrf.mxu0
  %v3753 = vadd.f32 %v3640, %v3752
  %v3754 = vpop.f32.mrf.mxu0
  %v3755 = vadd.f32 %v3642, %v3754
  %v3756 = vpop.f32.mrf.mxu0
  %v3757 = vadd.f32 %v3644, %v3756
  %v3758 = vpop.f32.mrf.mxu0
  %v3759 = vadd.f32 %v3646, %v3758
  %3760 = vdwg.mxu0
  %3761 = vmatprep.subr.bf16.mxu0 %v3310
  %3762 = vmatpush1.bf16.msra.mxu0 %v3309
  %3763 = vmatprep.subr.bf16.mxu0 %v3306
  %3764 = vmatpush1.bf16.msra.mxu0 %v3305
  %3765 = vmatprep.subr.bf16.mxu0 %v3302
  %3766 = vmatpush1.bf16.msra.mxu0 %v3301
  %3767 = vmatprep.subr.bf16.mxu0 %v3298
  %3768 = vmatpush1.bf16.msra.mxu0 %v3297
  %3769 = vmatprep.subr.bf16.mxu0 %v3294
  %3770 = vmatpush1.bf16.msra.mxu0 %v3293
  %3771 = vmatprep.subr.bf16.mxu0 %v3290
  %3772 = vmatpush1.bf16.msra.mxu0 %v3289
  %3773 = vmatprep.subr.bf16.mxu0 %v3286
  %3774 = vmatpush1.bf16.msra.mxu0 %v3285
  %3775 = vmatprep.subr.bf16.mxu0 %v3282
  %3776 = vmatpush1.bf16.msra.mxu0 %v3281
  %3777 = vmatprep.subr.bf16.mxu0 %v3342
  %3778 = vmatpush2.bf16.msra.mxu0 %v3341
  %3779 = vmatprep.subr.bf16.mxu0 %v3338
  %3780 = vmatpush2.bf16.msra.mxu0 %v3337
  %3781 = vmatprep.subr.bf16.mxu0 %v3334
  %3782 = vmatpush2.bf16.msra.mxu0 %v3333
  %3783 = vmatprep.subr.bf16.mxu0 %v3330
  %3784 = vmatpush2.bf16.msra.mxu0 %v3329
  %3785 = vmatprep.subr.bf16.mxu0 %v3326
  %3786 = vmatpush2.bf16.msra.mxu0 %v3325
  %3787 = vmatprep.subr.bf16.mxu0 %v3322
  %3788 = vmatpush2.bf16.msra.mxu0 %v3321
  %3789 = vmatprep.subr.bf16.mxu0 %v3318
  %3790 = vmatpush2.bf16.msra.mxu0 %v3317
  %3791 = vmatprep.subr.bf16.mxu0 %v3314
  %3792 = vmatpush2.bf16.msra.mxu0 %v3313
  %3793 = vmatprep.mubr.bf16.mxu0 %v2714
  %3794 = vmatmul.mubr.bf16.gmra.mxu0 %v2713
  %v3795 = vpop.f32.mrf.mxu0
  %v3796 = vadd.f32 %v2886, %v3795
  %v3797 = vpop.f32.mrf.mxu0
  %v3798 = vadd.f32 %v2890, %v3797
  %v3799 = vpop.f32.mrf.mxu0
  %v3800 = vadd.f32 %v2886, %v3799
  %v3801 = vpop.f32.mrf.mxu0
  %v3802 = vadd.f32 %v2890, %v3801
  %3803 = vmatprep.mubr.bf16.mxu0 %v2718
  %3804 = vmatmul.mubr.bf16.gmra.mxu0 %v2717
  %v3805 = vpop.f32.mrf.mxu0
  %v3806 = vadd.f32 %v2886, %v3805
  %v3807 = vpop.f32.mrf.mxu0
  %v3808 = vadd.f32 %v2890, %v3807
  %v3809 = vpop.f32.mrf.mxu0
  %v3810 = vadd.f32 %v2886, %v3809
  %v3811 = vpop.f32.mrf.mxu0
  %v3812 = vadd.f32 %v2890, %v3811
  %3813 = vmatprep.mubr.bf16.mxu0 %v2722
  %3814 = vmatmul.mubr.bf16.gmra.mxu0 %v2721
  %v3815 = vpop.f32.mrf.mxu0
  %v3816 = vadd.f32 %v2886, %v3815
  %v3817 = vpop.f32.mrf.mxu0
  %v3818 = vadd.f32 %v2890, %v3817
  %v3819 = vpop.f32.mrf.mxu0
  %v3820 = vadd.f32 %v2886, %v3819
  %v3821 = vpop.f32.mrf.mxu0
  %v3822 = vadd.f32 %v2890, %v3821
  %3823 = vmatprep.mubr.bf16.mxu0 %v2726
  %3824 = vmatmul.mubr.bf16.gmra.mxu0 %v2725
  %v3825 = vpop.f32.mrf.mxu0
  %v3826 = vadd.f32 %v2886, %v3825
  %v3827 = vpop.f32.mrf.mxu0
  %v3828 = vadd.f32 %v2890, %v3827
  %v3829 = vpop.f32.mrf.mxu0
  %v3830 = vadd.f32 %v2886, %v3829
  %v3831 = vpop.f32.mrf.mxu0
  %v3832 = vadd.f32 %v2890, %v3831
  %3833 = vmatprep.mubr.bf16.mxu0 %v2730
  %3834 = vmatmul.mubr.bf16.gmra.mxu0 %v2729
  %v3835 = vpop.f32.mrf.mxu0
  %v3836 = vadd.f32 %v2886, %v3835
  %v3837 = vpop.f32.mrf.mxu0
  %v3838 = vadd.f32 %v2890, %v3837
  %v3839 = vpop.f32.mrf.mxu0
  %v3840 = vadd.f32 %v2886, %v3839
  %v3841 = vpop.f32.mrf.mxu0
  %v3842 = vadd.f32 %v2890, %v3841
  %3843 = vmatprep.mubr.bf16.mxu0 %v2734
  %3844 = vmatmul.mubr.bf16.gmra.mxu0 %v2733
  %v3845 = vpop.f32.mrf.mxu0
  %v3846 = vadd.f32 %v2886, %v3845
  %v3847 = vpop.f32.mrf.mxu0
  %v3848 = vadd.f32 %v2890, %v3847
  %v3849 = vpop.f32.mrf.mxu0
  %v3850 = vadd.f32 %v2886, %v3849
  %v3851 = vpop.f32.mrf.mxu0
  %v3852 = vadd.f32 %v2890, %v3851
  %3853 = vmatprep.mubr.bf16.mxu0 %v2738
  %3854 = vmatmul.mubr.bf16.gmra.mxu0 %v2737
  %v3855 = vpop.f32.mrf.mxu0
  %v3856 = vadd.f32 %v2886, %v3855
  %v3857 = vpop.f32.mrf.mxu0
  %v3858 = vadd.f32 %v2890, %v3857
  %v3859 = vpop.f32.mrf.mxu0
  %v3860 = vadd.f32 %v2886, %v3859
  %v3861 = vpop.f32.mrf.mxu0
  %v3862 = vadd.f32 %v2890, %v3861
  %3863 = vmatprep.mubr.bf16.mxu0 %v2742
  %3864 = vmatmul.mubr.bf16.gmra.mxu0 %v2741
  %v3865 = vpop.f32.mrf.mxu0
  %v3866 = vadd.f32 %v2886, %v3865
  %v3867 = vpop.f32.mrf.mxu0
  %v3868 = vadd.f32 %v2890, %v3867
  %v3869 = vpop.f32.mrf.mxu0
  %v3870 = vadd.f32 %v2886, %v3869
  %v3871 = vpop.f32.mrf.mxu0
  %v3872 = vadd.f32 %v2890, %v3871
  %3873 = vdwg.mxu0
  %3874 = vmatprep.subr.bf16.mxu0 %v3374
  %3875 = vmatpush1.bf16.msra.mxu0 %v3373
  %3876 = vmatprep.subr.bf16.mxu0 %v3370
  %3877 = vmatpush1.bf16.msra.mxu0 %v3369
  %3878 = vmatprep.subr.bf16.mxu0 %v3366
  %3879 = vmatpush1.bf16.msra.mxu0 %v3365
  %3880 = vmatprep.subr.bf16.mxu0 %v3362
  %3881 = vmatpush1.bf16.msra.mxu0 %v3361
  %3882 = vmatprep.subr.bf16.mxu0 %v3358
  %3883 = vmatpush1.bf16.msra.mxu0 %v3357
  %3884 = vmatprep.subr.bf16.mxu0 %v3354
  %3885 = vmatpush1.bf16.msra.mxu0 %v3353
  %3886 = vmatprep.subr.bf16.mxu0 %v3350
  %3887 = vmatpush1.bf16.msra.mxu0 %v3349
  %3888 = vmatprep.subr.bf16.mxu0 %v3346
  %3889 = vmatpush1.bf16.msra.mxu0 %v3345
  %3890 = vmatprep.subr.bf16.mxu0 %v3406
  %3891 = vmatpush2.bf16.msra.mxu0 %v3405
  %3892 = vmatprep.subr.bf16.mxu0 %v3402
  %3893 = vmatpush2.bf16.msra.mxu0 %v3401
  %3894 = vmatprep.subr.bf16.mxu0 %v3398
  %3895 = vmatpush2.bf16.msra.mxu0 %v3397
  %3896 = vmatprep.subr.bf16.mxu0 %v3394
  %3897 = vmatpush2.bf16.msra.mxu0 %v3393
  %3898 = vmatprep.subr.bf16.mxu0 %v3390
  %3899 = vmatpush2.bf16.msra.mxu0 %v3389
  %3900 = vmatprep.subr.bf16.mxu0 %v3386
  %3901 = vmatpush2.bf16.msra.mxu0 %v3385
  %3902 = vmatprep.subr.bf16.mxu0 %v3382
  %3903 = vmatpush2.bf16.msra.mxu0 %v3381
  %3904 = vmatprep.subr.bf16.mxu0 %v3378
  %3905 = vmatpush2.bf16.msra.mxu0 %v3377
  %3906 = vmatprep.mubr.bf16.mxu0 %v2716
  %3907 = vmatmul.mubr.bf16.gmra.mxu0 %v2715
  %v3908 = vpop.f32.mrf.mxu0
  %v3909 = vadd.f32 %v3796, %v3908
  %v3910 = vpop.f32.mrf.mxu0
  %v3911 = vadd.f32 %v3798, %v3910
  %v3912 = vpop.f32.mrf.mxu0
  %v3913 = vadd.f32 %v3800, %v3912
  %v3914 = vpop.f32.mrf.mxu0
  %v3915 = vadd.f32 %v3802, %v3914
  %3916 = vmatprep.mubr.bf16.mxu0 %v2720
  %3917 = vmatmul.mubr.bf16.gmra.mxu0 %v2719
  %v3918 = vpop.f32.mrf.mxu0
  %v3919 = vadd.f32 %v3806, %v3918
  %v3920 = vpop.f32.mrf.mxu0
  %v3921 = vadd.f32 %v3808, %v3920
  %v3922 = vpop.f32.mrf.mxu0
  %v3923 = vadd.f32 %v3810, %v3922
  %v3924 = vpop.f32.mrf.mxu0
  %v3925 = vadd.f32 %v3812, %v3924
  %3926 = vmatprep.mubr.bf16.mxu0 %v2724
  %3927 = vmatmul.mubr.bf16.gmra.mxu0 %v2723
  %v3928 = vpop.f32.mrf.mxu0
  %v3929 = vadd.f32 %v3816, %v3928
  %v3930 = vpop.f32.mrf.mxu0
  %v3931 = vadd.f32 %v3818, %v3930
  %v3932 = vpop.f32.mrf.mxu0
  %v3933 = vadd.f32 %v3820, %v3932
  %v3934 = vpop.f32.mrf.mxu0
  %v3935 = vadd.f32 %v3822, %v3934
  %3936 = vmatprep.mubr.bf16.mxu0 %v2728
  %3937 = vmatmul.mubr.bf16.gmra.mxu0 %v2727
  %v3938 = vpop.f32.mrf.mxu0
  %v3939 = vadd.f32 %v3826, %v3938
  %v3940 = vpop.f32.mrf.mxu0
  %v3941 = vadd.f32 %v3828, %v3940
  %v3942 = vpop.f32.mrf.mxu0
  %v3943 = vadd.f32 %v3830, %v3942
  %v3944 = vpop.f32.mrf.mxu0
  %v3945 = vadd.f32 %v3832, %v3944
  %3946 = vmatprep.mubr.bf16.mxu0 %v2732
  %3947 = vmatmul.mubr.bf16.gmra.mxu0 %v2731
  %v3948 = vpop.f32.mrf.mxu0
  %v3949 = vadd.f32 %v3836, %v3948
  %v3950 = vpop.f32.mrf.mxu0
  %v3951 = vadd.f32 %v3838, %v3950
  %v3952 = vpop.f32.mrf.mxu0
  %v3953 = vadd.f32 %v3840, %v3952
  %v3954 = vpop.f32.mrf.mxu0
  %v3955 = vadd.f32 %v3842, %v3954
  %3956 = vmatprep.mubr.bf16.mxu0 %v2736
  %3957 = vmatmul.mubr.bf16.gmra.mxu0 %v2735
  %v3958 = vpop.f32.mrf.mxu0
  %v3959 = vadd.f32 %v3846, %v3958
  %v3960 = vpop.f32.mrf.mxu0
  %v3961 = vadd.f32 %v3848, %v3960
  %v3962 = vpop.f32.mrf.mxu0
  %v3963 = vadd.f32 %v3850, %v3962
  %v3964 = vpop.f32.mrf.mxu0
  %v3965 = vadd.f32 %v3852, %v3964
  %3966 = vmatprep.mubr.bf16.mxu0 %v2740
  %3967 = vmatmul.mubr.bf16.gmra.mxu0 %v2739
  %v3968 = vpop.f32.mrf.mxu0
  %v3969 = vadd.f32 %v3856, %v3968
  %v3970 = vpop.f32.mrf.mxu0
  %v3971 = vadd.f32 %v3858, %v3970
  %v3972 = vpop.f32.mrf.mxu0
  %v3973 = vadd.f32 %v3860, %v3972
  %v3974 = vpop.f32.mrf.mxu0
  %v3975 = vadd.f32 %v3862, %v3974
  %3976 = vmatprep.mubr.bf16.mxu0 %v2744
  %3977 = vmatmul.mubr.bf16.gmra.mxu0 %v2743
  %v3978 = vpop.f32.mrf.mxu0
  %v3979 = vadd.f32 %v3866, %v3978
  %v3980 = vpop.f32.mrf.mxu0
  %v3981 = vadd.f32 %v3868, %v3980
  %v3982 = vpop.f32.mrf.mxu0
  %v3983 = vadd.f32 %v3870, %v3982
  %v3984 = vpop.f32.mrf.mxu0
  %v3985 = vadd.f32 %v3872, %v3984
  %3986 = vdwg.mxu0
  %v3987 = vmax.f32 %v3683, 0.0
  %v3988 = vmax.f32 %v3685, 0.0
  %v3989 = vmax.f32 %v3909, 0.0
  %v3990 = vmax.f32 %v3911, 0.0
  %v3991 = vmax.f32 %v3687, 0.0
  %v3992 = vmax.f32 %v3689, 0.0
  %v3993 = vmax.f32 %v3913, 0.0
  %v3994 = vmax.f32 %v3915, 0.0
  %v3995 = vmax.f32 %v3693, 0.0
  %v3996 = vmax.f32 %v3695, 0.0
  %v3997 = vmax.f32 %v3919, 0.0
  %v3998 = vmax.f32 %v3921, 0.0
  %v3999 = vmax.f32 %v3697, 0.0
  %v4000 = vmax.f32 %v3699, 0.0
  %v4001 = vmax.f32 %v3923, 0.0
  %v4002 = vmax.f32 %v3925, 0.0
  %v4003 = vmax.f32 %v3703, 0.0
  %v4004 = vmax.f32 %v3705, 0.0
  %v4005 = vmax.f32 %v3929, 0.0
  %v4006 = vmax.f32 %v3931, 0.0
  %v4007 = vmax.f32 %v3707, 0.0
  %v4008 = vmax.f32 %v3709, 0.0
  %v4009 = vmax.f32 %v3933, 0.0
  %v4010 = vmax.f32 %v3935, 0.0
  %v4011 = vmax.f32 %v3713, 0.0
  %v4012 = vmax.f32 %v3715, 0.0
  %v4013 = vmax.f32 %v3939, 0.0
  %v4014 = vmax.f32 %v3941, 0.0
  %v4015 = vmax.f32 %v3717, 0.0
  %v4016 = vmax.f32 %v3719, 0.0
  %v4017 = vmax.f32 %v3943, 0.0
  %v4018 = vmax.f32 %v3945, 0.0
  %v4019 = vmax.f32 %v3723, 0.0
  %v4020 = vmax.f32 %v3725, 0.0
  %v4021 = vmax.f32 %v3949, 0.0
  %v4022 = vmax.f32 %v3951, 0.0
  %v4023 = vmax.f32 %v3727, 0.0
  %v4024 = vmax.f32 %v3729, 0.0
  %v4025 = vmax.f32 %v3953, 0.0
  %v4026 = vmax.f32 %v3955, 0.0
  %v4027 = vmax.f32 %v3733, 0.0
  %v4028 = vmax.f32 %v3735, 0.0
  %v4029 = vmax.f32 %v3959, 0.0
  %v4030 = vmax.f32 %v3961, 0.0
  %v4031 = vmax.f32 %v3737, 0.0
  %v4032 = vmax.f32 %v3739, 0.0
  %v4033 = vmax.f32 %v3963, 0.0
  %v4034 = vmax.f32 %v3965, 0.0
  %v4035 = vmax.f32 %v3743, 0.0
  %v4036 = vmax.f32 %v3745, 0.0
  %v4037 = vmax.f32 %v3969, 0.0
  %v4038 = vmax.f32 %v3971, 0.0
  %v4039 = vmax.f32 %v3747, 0.0
  %v4040 = vmax.f32 %v3749, 0.0
  %v4041 = vmax.f32 %v3973, 0.0
  %v4042 = vmax.f32 %v3975, 0.0
  %v4043 = vmax.f32 %v3753, 0.0
  %v4044 = vmax.f32 %v3755, 0.0
  %v4045 = vmax.f32 %v3979, 0.0
  %v4046 = vmax.f32 %v3981, 0.0
  %v4047 = vmax.f32 %v3757, 0.0
  %v4048 = vmax.f32 %v3759, 0.0
  %v4049 = vmax.f32 %v3983, 0.0
  %v4050 = vmax.f32 %v3985, 0.0
  %v4051 = vpack.c.bf16 %v3991, %v3987
  %v4052 = vpack.c.bf16 %v3992, %v3988
  %v4053 = vpack.c.bf16 %v3993, %v3989
  %v4054 = vpack.c.bf16 %v3994, %v3990
  %v4055 = vpack.c.bf16 %v3999, %v3995
  %v4056 = vpack.c.bf16 %v4000, %v3996
  %v4057 = vpack.c.bf16 %v4001, %v3997
  %v4058 = vpack.c.bf16 %v4002, %v3998
  %v4059 = vpack.c.bf16 %v4007, %v4003
  %v4060 = vpack.c.bf16 %v4008, %v4004
  %v4061 = vpack.c.bf16 %v4009, %v4005
  %v4062 = vpack.c.bf16 %v4010, %v4006
  %v4063 = vpack.c.bf16 %v4015, %v4011
  %v4064 = vpack.c.bf16 %v4016, %v4012
  %v4065 = vpack.c.bf16 %v4017, %v4013
  %v4066 = vpack.c.bf16 %v4018, %v4014
  %v4067 = vpack.c.bf16 %v4023, %v4019
  %v4068 = vpack.c.bf16 %v4024, %v4020
  %v4069 = vpack.c.bf16 %v4025, %v4021
  %v4070 = vpack.c.bf16 %v4026, %v4022
  %v4071 = vpack.c.bf16 %v4031, %v4027
  %v4072 = vpack.c.bf16 %v4032, %v4028
  %v4073 = vpack.c.bf16 %v4033, %v4029
  %v4074 = vpack.c.bf16 %v4034, %v4030
  %v4075 = vpack.c.bf16 %v4039, %v4035
  %v4076 = vpack.c.bf16 %v4040, %v4036
  %v4077 = vpack.c.bf16 %v4041, %v4037
  %v4078 = vpack.c.bf16 %v4042, %v4038
  %v4079 = vpack.c.bf16 %v4047, %v4043
  %v4080 = vpack.c.bf16 %v4048, %v4044
  %v4081 = vpack.c.bf16 %v4049, %v4045
  %v4082 = vpack.c.bf16 %v4050, %v4046
  %v4083 = vld [vmem:[%s5] sm:$0xf]
  %v4084 = vld [vmem:[%s5 + $0x4] sm:$0xf]
  %v4085 = vld [vmem:[%s5 + $0x8] sm:$0xf]
  %v4086 = vld [vmem:[%s5 + $0xc] sm:$0xf]
  %v4087 = vld [vmem:[%s5 + $0x10] sm:$0xf]
  %v4088 = vld [vmem:[%s5 + $0x14] sm:$0xf]
  %v4089 = vld [vmem:[%s5 + $0x18] sm:$0xf]
  %v4090 = vld [vmem:[%s5 + $0x1c] sm:$0xf]
  %v4091 = vld [vmem:[%s5 + $0x20] sm:$0xf]
  %v4092 = vld [vmem:[%s5 + $0x24] sm:$0xf]
  %v4093 = vld [vmem:[%s5 + $0x28] sm:$0xf]
  %v4094 = vld [vmem:[%s5 + $0x2c] sm:$0xf]
  %v4095 = vld [vmem:[%s5 + $0x30] sm:$0xf]
  %v4096 = vld [vmem:[%s5 + $0x34] sm:$0xf]
  %v4097 = vld [vmem:[%s5 + $0x38] sm:$0xf]
  %v4098 = vld [vmem:[%s5 + $0x3c] sm:$0xf]
  %v4099 = vld [vmem:[%s5 + $0x40] sm:$0xf]
  %v4100 = vld [vmem:[%s5 + $0x44] sm:$0xf]
  %v4101 = vld [vmem:[%s5 + $0x48] sm:$0xf]
  %v4102 = vld [vmem:[%s5 + $0x4c] sm:$0xf]
  %v4103 = vld [vmem:[%s5 + $0x50] sm:$0xf]
  %v4104 = vld [vmem:[%s5 + $0x54] sm:$0xf]
  %v4105 = vld [vmem:[%s5 + $0x58] sm:$0xf]
  %v4106 = vld [vmem:[%s5 + $0x5c] sm:$0xf]
  %v4107 = vld [vmem:[%s5 + $0x60] sm:$0xf]
  %v4108 = vld [vmem:[%s5 + $0x64] sm:$0xf]
  %v4109 = vld [vmem:[%s5 + $0x68] sm:$0xf]
  %v4110 = vld [vmem:[%s5 + $0x6c] sm:$0xf]
  %v4111 = vld [vmem:[%s5 + $0x70] sm:$0xf]
  %v4112 = vld [vmem:[%s5 + $0x74] sm:$0xf]
  %v4113 = vld [vmem:[%s5 + $0x78] sm:$0xf]
  %v4114 = vld [vmem:[%s5 + $0x7c] sm:$0xf]
  %v4115 = vld [vmem:[%s5 + $0x80] sm:$0xf]
  %v4116 = vld [vmem:[%s5 + $0x84] sm:$0xf]
  %v4117 = vld [vmem:[%s5 + $0x88] sm:$0xf]
  %v4118 = vld [vmem:[%s5 + $0x8c] sm:$0xf]
  %v4119 = vld [vmem:[%s5 + $0x90] sm:$0xf]
  %v4120 = vld [vmem:[%s5 + $0x94] sm:$0xf]
  %v4121 = vld [vmem:[%s5 + $0x98] sm:$0xf]
  %v4122 = vld [vmem:[%s5 + $0x9c] sm:$0xf]
  %v4123 = vld [vmem:[%s5 + $0xa0] sm:$0xf]
  %v4124 = vld [vmem:[%s5 + $0xa4] sm:$0xf]
  %v4125 = vld [vmem:[%s5 + $0xa8] sm:$0xf]
  %v4126 = vld [vmem:[%s5 + $0xac] sm:$0xf]
  %v4127 = vld [vmem:[%s5 + $0xb0] sm:$0xf]
  %v4128 = vld [vmem:[%s5 + $0xb4] sm:$0xf]
  %v4129 = vld [vmem:[%s5 + $0xb8] sm:$0xf]
  %v4130 = vld [vmem:[%s5 + $0xbc] sm:$0xf]
  %v4131 = vld [vmem:[%s5 + $0xc0] sm:$0xf]
  %v4132 = vld [vmem:[%s5 + $0xc4] sm:$0xf]
  %v4133 = vld [vmem:[%s5 + $0xc8] sm:$0xf]
  %v4134 = vld [vmem:[%s5 + $0xcc] sm:$0xf]
  %v4135 = vld [vmem:[%s5 + $0xd0] sm:$0xf]
  %v4136 = vld [vmem:[%s5 + $0xd4] sm:$0xf]
  %v4137 = vld [vmem:[%s5 + $0xd8] sm:$0xf]
  %v4138 = vld [vmem:[%s5 + $0xdc] sm:$0xf]
  %v4139 = vld [vmem:[%s5 + $0xe0] sm:$0xf]
  %v4140 = vld [vmem:[%s5 + $0xe4] sm:$0xf]
  %v4141 = vld [vmem:[%s5 + $0xe8] sm:$0xf]
  %v4142 = vld [vmem:[%s5 + $0xec] sm:$0xf]
  %v4143 = vld [vmem:[%s5 + $0xf0] sm:$0xf]
  %v4144 = vld [vmem:[%s5 + $0xf4] sm:$0xf]
  %v4145 = vld [vmem:[%s5 + $0xf8] sm:$0xf]
  %v4146 = vld [vmem:[%s5 + $0xfc] sm:$0xf]
  %v4147 = vld [vmem:[%s6] sm:$0x1]
  %v4149 = vlaneseq
  %v4150 = vshrl.u32 %v4149, 7
  %v4151 = vsub.s32 0, %v4150
  %v4152 = vrot.slane %v4147, %v4151
  %v4218 = vunpack.c.l.b16 %v4083
  %v4219 = vunpack.c.l.b16 %v4084
  %v4220 = vunpack.c.l.b16 %v4085
  %v4221 = vunpack.c.l.b16 %v4086
  %v4222 = vunpack.c.l.b16 %v4087
  %v4223 = vunpack.c.l.b16 %v4088
  %v4224 = vunpack.c.l.b16 %v4089
  %v4225 = vunpack.c.l.b16 %v4090
  %v4226 = vunpack.c.l.b16 %v4091
  %v4227 = vunpack.c.l.b16 %v4092
  %v4228 = vunpack.c.l.b16 %v4093
  %v4229 = vunpack.c.l.b16 %v4094
  %v4230 = vunpack.c.l.b16 %v4095
  %v4231 = vunpack.c.l.b16 %v4096
  %v4232 = vunpack.c.l.b16 %v4097
  %v4233 = vunpack.c.l.b16 %v4098
  %v4234 = vunpack.c.l.b16 %v4099
  %v4235 = vunpack.c.l.b16 %v4100
  %v4236 = vunpack.c.l.b16 %v4101
  %v4237 = vunpack.c.l.b16 %v4102
  %v4238 = vunpack.c.l.b16 %v4103
  %v4239 = vunpack.c.l.b16 %v4104
  %v4240 = vunpack.c.l.b16 %v4105
  %v4241 = vunpack.c.l.b16 %v4106
  %v4242 = vunpack.c.l.b16 %v4107
  %v4243 = vunpack.c.l.b16 %v4108
  %v4244 = vunpack.c.l.b16 %v4109
  %v4245 = vunpack.c.l.b16 %v4110
  %v4246 = vunpack.c.l.b16 %v4111
  %v4247 = vunpack.c.l.b16 %v4112
  %v4248 = vunpack.c.l.b16 %v4113
  %v4249 = vunpack.c.l.b16 %v4114
  %v4250 = vunpack.c.l.b16 %v4115
  %v4251 = vunpack.c.l.b16 %v4116
  %v4252 = vunpack.c.l.b16 %v4117
  %v4253 = vunpack.c.l.b16 %v4118
  %v4254 = vunpack.c.l.b16 %v4119
  %v4255 = vunpack.c.l.b16 %v4120
  %v4256 = vunpack.c.l.b16 %v4121
  %v4257 = vunpack.c.l.b16 %v4122
  %v4258 = vunpack.c.l.b16 %v4123
  %v4259 = vunpack.c.l.b16 %v4124
  %v4260 = vunpack.c.l.b16 %v4125
  %v4261 = vunpack.c.l.b16 %v4126
  %v4262 = vunpack.c.l.b16 %v4127
  %v4263 = vunpack.c.l.b16 %v4128
  %v4264 = vunpack.c.l.b16 %v4129
  %v4265 = vunpack.c.l.b16 %v4130
  %v4266 = vunpack.c.l.b16 %v4131
  %v4267 = vunpack.c.l.b16 %v4132
  %v4268 = vunpack.c.l.b16 %v4133
  %v4269 = vunpack.c.l.b16 %v4134
  %v4270 = vunpack.c.l.b16 %v4135
  %v4271 = vunpack.c.l.b16 %v4136
  %v4272 = vunpack.c.l.b16 %v4137
  %v4273 = vunpack.c.l.b16 %v4138
  %v4274 = vunpack.c.l.b16 %v4139
  %v4275 = vunpack.c.l.b16 %v4140
  %v4276 = vunpack.c.l.b16 %v4141
  %v4277 = vunpack.c.l.b16 %v4142
  %v4278 = vunpack.c.l.b16 %v4143
  %v4279 = vunpack.c.l.b16 %v4144
  %v4280 = vunpack.c.l.b16 %v4145
  %v4281 = vunpack.c.l.b16 %v4146
  %v4282 = vpack.c.b16 %v4219, %v4218
  %v4283 = vpack.c.b16 %v4221, %v4220
  %v4284 = vpack.c.b16 %v4223, %v4222
  %v4285 = vpack.c.b16 %v4225, %v4224
  %v4286 = vpack.c.b16 %v4227, %v4226
  %v4287 = vpack.c.b16 %v4229, %v4228
  %v4288 = vpack.c.b16 %v4231, %v4230
  %v4289 = vpack.c.b16 %v4233, %v4232
  %v4290 = vpack.c.b16 %v4235, %v4234
  %v4291 = vpack.c.b16 %v4237, %v4236
  %v4292 = vpack.c.b16 %v4239, %v4238
  %v4293 = vpack.c.b16 %v4241, %v4240
  %v4294 = vpack.c.b16 %v4243, %v4242
  %v4295 = vpack.c.b16 %v4245, %v4244
  %v4296 = vpack.c.b16 %v4247, %v4246
  %v4297 = vpack.c.b16 %v4249, %v4248
  %v4298 = vpack.c.b16 %v4251, %v4250
  %v4299 = vpack.c.b16 %v4253, %v4252
  %v4300 = vpack.c.b16 %v4255, %v4254
  %v4301 = vpack.c.b16 %v4257, %v4256
  %v4302 = vpack.c.b16 %v4259, %v4258
  %v4303 = vpack.c.b16 %v4261, %v4260
  %v4304 = vpack.c.b16 %v4263, %v4262
  %v4305 = vpack.c.b16 %v4265, %v4264
  %v4306 = vpack.c.b16 %v4267, %v4266
  %v4307 = vpack.c.b16 %v4269, %v4268
  %v4308 = vpack.c.b16 %v4271, %v4270
  %v4309 = vpack.c.b16 %v4273, %v4272
  %v4310 = vpack.c.b16 %v4275, %v4274
  %v4311 = vpack.c.b16 %v4277, %v4276
  %v4312 = vpack.c.b16 %v4279, %v4278
  %v4313 = vpack.c.b16 %v4281, %v4280
  %4346 = vmatprep.subr.bf16.mxu0 0
  %4347 = vmatpush1.bf16.msra.mxu0 %v4289
  %4348 = vmatprep.subr.bf16.mxu0 0
  %4349 = vmatpush1.bf16.msra.mxu0 %v4288
  %4350 = vmatprep.subr.bf16.mxu0 0
  %4351 = vmatpush1.bf16.msra.mxu0 %v4287
  %4352 = vmatprep.subr.bf16.mxu0 0
  %4353 = vmatpush1.bf16.msra.mxu0 %v4286
  %4354 = vmatprep.subr.bf16.mxu0 0
  %4355 = vmatpush1.bf16.msra.mxu0 %v4285
  %4356 = vmatprep.subr.bf16.mxu0 0
  %4357 = vmatpush1.bf16.msra.mxu0 %v4284
  %4358 = vmatprep.subr.bf16.mxu0 0
  %4359 = vmatpush1.bf16.msra.mxu0 %v4283
  %4360 = vmatprep.subr.bf16.mxu0 0
  %4361 = vmatpush1.bf16.msra.mxu0 %v4282
  %4362 = vmatprep.subr.bf16.mxu0 0
  %4363 = vmatpush2.bf16.msra.mxu0 %v4297
  %4364 = vmatprep.subr.bf16.mxu0 0
  %4365 = vmatpush2.bf16.msra.mxu0 %v4296
  %4366 = vmatprep.subr.bf16.mxu0 0
  %4367 = vmatpush2.bf16.msra.mxu0 %v4295
  %4368 = vmatprep.subr.bf16.mxu0 0
  %4369 = vmatpush2.bf16.msra.mxu0 %v4294
  %4370 = vmatprep.subr.bf16.mxu0 0
  %4371 = vmatpush2.bf16.msra.mxu0 %v4293
  %4372 = vmatprep.subr.bf16.mxu0 0
  %4373 = vmatpush2.bf16.msra.mxu0 %v4292
  %4374 = vmatprep.subr.bf16.mxu0 0
  %4375 = vmatpush2.bf16.msra.mxu0 %v4291
  %4376 = vmatprep.subr.bf16.mxu0 0
  %4377 = vmatpush2.bf16.msra.mxu0 %v4290
  %4378 = vmatprep.mubr.bf16.mxu0 %v4052
  %4379 = vmatmul.mubr.bf16.gmra.mxu0 %v4051
  %v4380 = vpop.f32.mrf.mxu0
  %v4381 = vadd.f32 %v4152, %v4380
  %v4382 = vpop.f32.mrf.mxu0
  %v4383 = vpop.f32.mrf.mxu0
  %v4384 = vadd.f32 %v4152, %v4383
  %v4385 = vpop.f32.mrf.mxu0
  %4386 = vmatprep.mubr.bf16.mxu0 %v4056
  %4387 = vmatmul.mubr.bf16.gmra.mxu0 %v4055
  %v4388 = vpop.f32.mrf.mxu0
  %v4389 = vadd.f32 %v4152, %v4388
  %v4390 = vpop.f32.mrf.mxu0
  %v4391 = vpop.f32.mrf.mxu0
  %v4392 = vadd.f32 %v4152, %v4391
  %v4393 = vpop.f32.mrf.mxu0
  %4394 = vmatprep.mubr.bf16.mxu0 %v4060
  %4395 = vmatmul.mubr.bf16.gmra.mxu0 %v4059
  %v4396 = vpop.f32.mrf.mxu0
  %v4397 = vadd.f32 %v4152, %v4396
  %v4398 = vpop.f32.mrf.mxu0
  %v4399 = vpop.f32.mrf.mxu0
  %v4400 = vadd.f32 %v4152, %v4399
  %v4401 = vpop.f32.mrf.mxu0
  %4402 = vmatprep.mubr.bf16.mxu0 %v4064
  %4403 = vmatmul.mubr.bf16.gmra.mxu0 %v4063
  %v4404 = vpop.f32.mrf.mxu0
  %v4405 = vadd.f32 %v4152, %v4404
  %v4406 = vpop.f32.mrf.mxu0
  %v4407 = vpop.f32.mrf.mxu0
  %v4408 = vadd.f32 %v4152, %v4407
  %v4409 = vpop.f32.mrf.mxu0
  %4410 = vmatprep.mubr.bf16.mxu0 %v4068
  %4411 = vmatmul.mubr.bf16.gmra.mxu0 %v4067
  %v4412 = vpop.f32.mrf.mxu0
  %v4413 = vadd.f32 %v4152, %v4412
  %v4414 = vpop.f32.mrf.mxu0
  %v4415 = vpop.f32.mrf.mxu0
  %v4416 = vadd.f32 %v4152, %v4415
  %v4417 = vpop.f32.mrf.mxu0
  %4418 = vmatprep.mubr.bf16.mxu0 %v4072
  %4419 = vmatmul.mubr.bf16.gmra.mxu0 %v4071
  %v4420 = vpop.f32.mrf.mxu0
  %v4421 = vadd.f32 %v4152, %v4420
  %v4422 = vpop.f32.mrf.mxu0
  %v4423 = vpop.f32.mrf.mxu0
  %v4424 = vadd.f32 %v4152, %v4423
  %v4425 = vpop.f32.mrf.mxu0
  %4426 = vmatprep.mubr.bf16.mxu0 %v4076
  %4427 = vmatmul.mubr.bf16.gmra.mxu0 %v4075
  %v4428 = vpop.f32.mrf.mxu0
  %v4429 = vadd.f32 %v4152, %v4428
  %v4430 = vpop.f32.mrf.mxu0
  %v4431 = vpop.f32.mrf.mxu0
  %v4432 = vadd.f32 %v4152, %v4431
  %v4433 = vpop.f32.mrf.mxu0
  %4434 = vmatprep.mubr.bf16.mxu0 %v4080
  %4435 = vmatmul.mubr.bf16.gmra.mxu0 %v4079
  %v4436 = vpop.f32.mrf.mxu0
  %v4437 = vadd.f32 %v4152, %v4436
  %v4438 = vpop.f32.mrf.mxu0
  %v4439 = vpop.f32.mrf.mxu0
  %v4440 = vadd.f32 %v4152, %v4439
  %v4441 = vpop.f32.mrf.mxu0
  %4442 = vdwg.mxu0
  %4443 = vmatprep.subr.bf16.mxu0 0
  %4444 = vmatpush1.bf16.msra.mxu0 %v4305
  %4445 = vmatprep.subr.bf16.mxu0 0
  %4446 = vmatpush1.bf16.msra.mxu0 %v4304
  %4447 = vmatprep.subr.bf16.mxu0 0
  %4448 = vmatpush1.bf16.msra.mxu0 %v4303
  %4449 = vmatprep.subr.bf16.mxu0 0
  %4450 = vmatpush1.bf16.msra.mxu0 %v4302
  %4451 = vmatprep.subr.bf16.mxu0 0
  %4452 = vmatpush1.bf16.msra.mxu0 %v4301
  %4453 = vmatprep.subr.bf16.mxu0 0
  %4454 = vmatpush1.bf16.msra.mxu0 %v4300
  %4455 = vmatprep.subr.bf16.mxu0 0
  %4456 = vmatpush1.bf16.msra.mxu0 %v4299
  %4457 = vmatprep.subr.bf16.mxu0 0
  %4458 = vmatpush1.bf16.msra.mxu0 %v4298
  %4459 = vmatprep.subr.bf16.mxu0 0
  %4460 = vmatpush2.bf16.msra.mxu0 %v4313
  %4461 = vmatprep.subr.bf16.mxu0 0
  %4462 = vmatpush2.bf16.msra.mxu0 %v4312
  %4463 = vmatprep.subr.bf16.mxu0 0
  %4464 = vmatpush2.bf16.msra.mxu0 %v4311
  %4465 = vmatprep.subr.bf16.mxu0 0
  %4466 = vmatpush2.bf16.msra.mxu0 %v4310
  %4467 = vmatprep.subr.bf16.mxu0 0
  %4468 = vmatpush2.bf16.msra.mxu0 %v4309
  %4469 = vmatprep.subr.bf16.mxu0 0
  %4470 = vmatpush2.bf16.msra.mxu0 %v4308
  %4471 = vmatprep.subr.bf16.mxu0 0
  %4472 = vmatpush2.bf16.msra.mxu0 %v4307
  %4473 = vmatprep.subr.bf16.mxu0 0
  %4474 = vmatpush2.bf16.msra.mxu0 %v4306
  %4475 = vmatprep.mubr.bf16.mxu0 %v4054
  %4476 = vmatmul.mubr.bf16.gmra.mxu0 %v4053
  %v4477 = vpop.f32.mrf.mxu0
  %v4478 = vadd.f32 %v4381, %v4477
  %v4479 = vpop.f32.mrf.mxu0
  %v4480 = vpop.f32.mrf.mxu0
  %v4481 = vadd.f32 %v4384, %v4480
  %v4482 = vpop.f32.mrf.mxu0
  %4483 = vmatprep.mubr.bf16.mxu0 %v4058
  %4484 = vmatmul.mubr.bf16.gmra.mxu0 %v4057
  %v4485 = vpop.f32.mrf.mxu0
  %v4486 = vadd.f32 %v4389, %v4485
  %v4487 = vpop.f32.mrf.mxu0
  %v4488 = vpop.f32.mrf.mxu0
  %v4489 = vadd.f32 %v4392, %v4488
  %v4490 = vpop.f32.mrf.mxu0
  %4491 = vmatprep.mubr.bf16.mxu0 %v4062
  %4492 = vmatmul.mubr.bf16.gmra.mxu0 %v4061
  %v4493 = vpop.f32.mrf.mxu0
  %v4494 = vadd.f32 %v4397, %v4493
  %v4495 = vpop.f32.mrf.mxu0
  %v4496 = vpop.f32.mrf.mxu0
  %v4497 = vadd.f32 %v4400, %v4496
  %v4498 = vpop.f32.mrf.mxu0
  %4499 = vmatprep.mubr.bf16.mxu0 %v4066
  %4500 = vmatmul.mubr.bf16.gmra.mxu0 %v4065
  %v4501 = vpop.f32.mrf.mxu0
  %v4502 = vadd.f32 %v4405, %v4501
  %v4503 = vpop.f32.mrf.mxu0
  %v4504 = vpop.f32.mrf.mxu0
  %v4505 = vadd.f32 %v4408, %v4504
  %v4506 = vpop.f32.mrf.mxu0
  %4507 = vmatprep.mubr.bf16.mxu0 %v4070
  %4508 = vmatmul.mubr.bf16.gmra.mxu0 %v4069
  %v4509 = vpop.f32.mrf.mxu0
  %v4510 = vadd.f32 %v4413, %v4509
  %v4511 = vpop.f32.mrf.mxu0
  %v4512 = vpop.f32.mrf.mxu0
  %v4513 = vadd.f32 %v4416, %v4512
  %v4514 = vpop.f32.mrf.mxu0
  %4515 = vmatprep.mubr.bf16.mxu0 %v4074
  %4516 = vmatmul.mubr.bf16.gmra.mxu0 %v4073
  %v4517 = vpop.f32.mrf.mxu0
  %v4518 = vadd.f32 %v4421, %v4517
  %v4519 = vpop.f32.mrf.mxu0
  %v4520 = vpop.f32.mrf.mxu0
  %v4521 = vadd.f32 %v4424, %v4520
  %v4522 = vpop.f32.mrf.mxu0
  %4523 = vmatprep.mubr.bf16.mxu0 %v4078
  %4524 = vmatmul.mubr.bf16.gmra.mxu0 %v4077
  %v4525 = vpop.f32.mrf.mxu0
  %v4526 = vadd.f32 %v4429, %v4525
  %v4527 = vpop.f32.mrf.mxu0
  %v4528 = vpop.f32.mrf.mxu0
  %v4529 = vadd.f32 %v4432, %v4528
  %v4530 = vpop.f32.mrf.mxu0
  %4531 = vmatprep.mubr.bf16.mxu0 %v4082
  %4532 = vmatmul.mubr.bf16.gmra.mxu0 %v4081
  %v4533 = vpop.f32.mrf.mxu0
  %v4534 = vadd.f32 %v4437, %v4533
  %v4535 = vpop.f32.mrf.mxu0
  %v4536 = vpop.f32.mrf.mxu0
  %v4537 = vadd.f32 %v4440, %v4536
  %v4538 = vpop.f32.mrf.mxu0
  %4539 = vdwg.mxu0
  %v4540 = vmax.f32 %v4478, 0.0
  %v4541 = vmax.f32 %v4481, 0.0
  %v4542 = vmax.f32 %v4486, 0.0
  %v4543 = vmax.f32 %v4489, 0.0
  %v4544 = vmax.f32 %v4494, 0.0
  %v4545 = vmax.f32 %v4497, 0.0
  %v4546 = vmax.f32 %v4502, 0.0
  %v4547 = vmax.f32 %v4505, 0.0
  %v4548 = vmax.f32 %v4510, 0.0
  %v4549 = vmax.f32 %v4513, 0.0
  %v4550 = vmax.f32 %v4518, 0.0
  %v4551 = vmax.f32 %v4521, 0.0
  %v4552 = vmax.f32 %v4526, 0.0
  %v4553 = vmax.f32 %v4529, 0.0
  %v4554 = vmax.f32 %v4534, 0.0
  %v4555 = vmax.f32 %v4537, 0.0
  %4556 = vst [vmem:[%s7] sm:$0xff] %v4540
  %4557 = vst [vmem:[%s7 + $0x8] sm:$0xff] %v4541
  %4558 = vst [vmem:[%s7 + $0x10] sm:$0xff] %v4542
  %4559 = vst [vmem:[%s7 + $0x18] sm:$0xff] %v4543
  %4560 = vst [vmem:[%s7 + $0x20] sm:$0xff] %v4544
  %4561 = vst [vmem:[%s7 + $0x28] sm:$0xff] %v4545
  %4562 = vst [vmem:[%s7 + $0x30] sm:$0xff] %v4546
  %4563 = vst [vmem:[%s7 + $0x38] sm:$0xff] %v4547
  %4564 = vst [vmem:[%s7 + $0x40] sm:$0xff] %v4548
  %4565 = vst [vmem:[%s7 + $0x48] sm:$0xff] %v4549
  %4566 = vst [vmem:[%s7 + $0x50] sm:$0xff] %v4550
  %4567 = vst [vmem:[%s7 + $0x58] sm:$0xff] %v4551
  %4568 = vst [vmem:[%s7 + $0x60] sm:$0xff] %v4552
  %4569 = vst [vmem:[%s7 + $0x68] sm:$0xff] %v4553
  %4570 = vst [vmem:[%s7 + $0x70] sm:$0xff] %v4554
  %4571 = vst [vmem:[%s7 + $0x78] sm:$0xff] %v4555
  // Predicated region
  $region30: #{neural_network_forward.1} parent=0 // pred_check
    _
  $region31: #{neural_network_forward.1} parent=0 // pred_check_branch
    %4573 = sbr.rel (0) target = $region33
  $region32: #{neural_network_forward.1} parent=0 // pred_region
    _
  $region33: #{neural_network_forward.1} parent=0 // pred_fallthru
    _
  // Predicated region
  $region34: #{neural_network_forward.1} parent=0 // pred_check
    _
  $region35: #{neural_network_forward.1} parent=0 // pred_check_branch
    %4575 = sbr.rel (0) target = $region37
  $region36: #{neural_network_forward.1} parent=0 // pred_region
    _
  $region37: #{neural_network_forward.1} parent=0 // pred_fallthru
    _

</llo_original>
